<compile_context>
chip_gen: v7x
topology: tpu7x:2x2x1
jax: 0.10.0
libtpu: 0.0.40
codegen_flags: <defaults>
</compile_context>

<pallas_src>
import functools
import math

import jax
import jax.numpy as jnp
from jax.experimental import pallas as pl
from jax.experimental.pallas import tpu as pltpu

TEMPERATURE = 1.25            # module references a global TEMPERATURE; fixed here
MATMUL_DTYPE = jnp.bfloat16   # MXU operand dtype (accumulation stays f32)


# ------------------------------------------------------------------ fused kernel
def _fused_mdnrnn_kernel(*refs, num_layers, T, B, H, G, Z, GZ_PAD):
    # refs = [x, fc1_wT, fc1_b, (wihT, whhT, b) * L, heads_wT, heads_b,
    #         out, gates_buf * n_buf]
    x_ref, fc1_w_ref, fc1_b_ref = refs[:3]
    lstm_refs = refs[3:3 + 3 * num_layers]
    hw_ref = refs[3 + 3 * num_layers]
    hb_ref = refs[4 + 3 * num_layers]
    out_ref = refs[5 + 3 * num_layers]
    gates_bufs = list(refs[6 + 3 * num_layers:])
    n_buf = len(gates_bufs)

    GZ = G * Z
    pad = GZ_PAD - GZ
    sqrt_temp = TEMPERATURE ** 0.5

    def mm(a, w_ref):
        # bf16 x bf16 MXU pass, f32 accumulation; weights are pre-transposed.
        return jnp.dot(a.astype(MATMUL_DTYPE), w_ref[...],
                       preferred_element_type=jnp.float32)

    # ---- 1) fc1 + ReLU over all T*B rows in one MXU pass (x pre-padded bf16) ----
    xh = jnp.maximum(mm(x_ref[...], fc1_w_ref) + fc1_b_ref[...], 0.0)

    # ---- 2) layer-0 input projection for ALL timesteps at once -----------------
    gates_bufs[0][...] = mm(xh, lstm_refs[0]) + lstm_refs[2][...]

    # Per-step MDN-heads epilogue (last layer): matmul result stays in registers,
    # transforms applied, then three 128-lane-aligned stores (mu first).
    def heads_epilogue(t, h):
        heads = mm(h, hw_ref) + hb_ref[...]                  # (B, 3*GZ_PAD) f32
        r0, r1 = t * B, (t + 1) * B
        out_ref[r0:r1, 2 * GZ_PAD:] = heads[:, 2 * GZ_PAD:]  # mu: identity
        out_ref[r0:r1, GZ_PAD:2 * GZ_PAD] = (                # sigma: exp * sqrt(T)
            jnp.exp(heads[:, GZ_PAD:2 * GZ_PAD]) * sqrt_temp)
        # pi: softmax over the G gaussian groups (stride Z), then the module's
        # quirk of dividing by TEMPERATURE *after* the softmax (folded into the
        # reciprocal).  Max-subtraction and scaling are applied per 32-lane group;
        # pad lanes are written as explicit zeros.
        groups = [heads[:, k * Z:(k + 1) * Z] for k in range(G)]
        m = functools.reduce(jnp.maximum, groups)            # (B, Z)
        e = [jnp.exp(g - m) for g in groups]
        denom = functools.reduce(jnp.add, e)
        scale = pl.reciprocal(denom * TEMPERATURE, approx=True)
        parts = [ek * scale for ek in e]
        if pad:
            parts.append(jnp.zeros((B, pad), jnp.float32))
        out_ref[r0:r1, :GZ_PAD] = jnp.concatenate(parts, axis=1)

    # ---- 3) stacked LSTM recurrence, zero initial (h, c) (== init_hidden) ------
    for layer in range(num_layers):
        whh_ref = lstm_refs[3 * layer + 1]
        cur_buf = gates_bufs[layer % n_buf]
        is_last = layer == num_layers - 1
        if not is_last:
            wih_n, _, b_n = lstm_refs[3 * (layer + 1):3 * (layer + 1) + 3]
            nxt_buf = gates_bufs[(layer + 1) % n_buf]

        h = jnp.zeros((B, H), jnp.float32)
        c = jnp.zeros((B, H), jnp.float32)
        for t in range(T):                     # static unroll: recurrence is serial
            g_t = cur_buf[t * B:(t + 1) * B, :] + mm(h, whh_ref)     # (B, 4H)
            # Wrapper permutes the gates to (f, i, o, g):
            #   [f|i] is one lane-aligned 2H sigmoid block; f*c and o*tanh(c) are
            #   aligned with c/h at lanes [0:H); i*g is self-aligned at [H:2H).
            fi = jax.nn.sigmoid(g_t[:, :2 * H])
            o_g = jax.nn.sigmoid(g_t[:, 2 * H:3 * H])
            g_g = jnp.tanh(g_t[:, 3 * H:])
            c = fi[:, :H] * c + fi[:, H:] * g_g
            h = o_g * jnp.tanh(c)
            if is_last:
                # Fused heads matmul + epilogue overlaps with the serial h->h chain.
                heads_epilogue(t, h)
            else:
                # Next layer's (non-recurrent) input projection for this step,
                # overlapped with the recurrence; one lane-dense (B, 4H) store.
                nxt_buf[t * B:(t + 1) * B, :] = mm(h, wih_n) + b_n[...]


# ------------------------------------------------------------------ forward wrapper
def lstm_mdn_forward(x, params, *, hidden_units, z_dim, n_gaussians, hidden_dim):
    T, B, in_dim = x.shape
    H = hidden_units
    num_layers = len(params["lstm"])
    N = T * B
    GZ = n_gaussians * z_dim
    GZ_PAD = ((GZ + 127) // 128) * 128          # lane-dense head width
    IN_PAD = ((in_dim + 127) // 128) * 128      # lane-dense input width
    n_buf = 2 if num_layers > 1 else 1

    # x: flatten to (T*B, in_dim), zero-pad features to 128 lanes, pre-cast bf16.
    x2 = x.reshape(N, in_dim).astype(MATMUL_DTYPE)
    x2 = jnp.pad(x2, ((0, 0), (0, IN_PAD - in_dim)))

    fc1_wT = jnp.pad(params["fc1_w"].T,
                     ((0, IN_PAD - in_dim), (0, 0))).astype(MATMUL_DTYPE)
    fc1_b = params["fc1_b"].reshape(1, -1).astype(jnp.float32)

    def permute_gates(a, axis=0):
        # PyTorch gate order (i, f, g, o) -> kernel order (f, i, o, g) so the
        # c/h updates are lane-aligned (free: done once on the weights).
        i, f, g, o = jnp.split(a, 4, axis=axis)
        return jnp.concatenate([f, i, o, g], axis=axis)

    lstm_args = []
    for (wih, whh, b) in params["lstm"]:
        lstm_args += [permute_gates(wih).T.astype(MATMUL_DTYPE),     # (D, 4H)
                      permute_gates(whh).T.astype(MATMUL_DTYPE),     # (H, 4H)
                      permute_gates(b).reshape(1, 4 * H).astype(jnp.float32)]

    def prep_head(w, b):
        wT = jnp.pad(w.T, ((0, 0), (0, GZ_PAD - GZ)))                # (H, GZ_PAD)
        bp = jnp.pad(b, (0, GZ_PAD - GZ))
        return wT, bp

    pw, pb = prep_head(params["pi_w"], params["pi_b"])
    sw, sb = prep_head(params["sigma_w"], params["sigma_b"])
    mw, mb = prep_head(params["mu_w"], params["mu_b"])
    heads_wT = jnp.concatenate([pw, sw, mw], axis=1).astype(MATMUL_DTYPE)  # (H, 3*GZ_PAD)
    heads_b = jnp.concatenate([pb, sb, mb]).reshape(1, 3 * GZ_PAD).astype(jnp.float32)

    kern = functools.partial(
        _fused_mdnrnn_kernel, num_layers=num_layers, T=T, B=B, H=H,
        G=n_gaussians, Z=z_dim, GZ_PAD=GZ_PAD)

    out = pl.pallas_call(
        kern,
        out_shape=jax.ShapeDtypeStruct((N, 3 * GZ_PAD), jnp.float32),
        # ping-pong gate buffers: layer l's hoisted input projection lives in
        # buffer l%2; layer l writes layer l+1's rows per step into the other one.
        scratch_shapes=[pltpu.VMEM((N, 4 * H), jnp.float32)] * n_buf,
    )(x2, fc1_wT, fc1_b, *lstm_args, heads_wT, heads_b)

    shape4 = (T, B, n_gaussians, z_dim)   # == view(-1, sequence, n_gaussians, z_dim)
    pi = out[:, :GZ].reshape(shape4)
    sigma = out[:, GZ_PAD:GZ_PAD + GZ].reshape(shape4)
    mu = out[:, 2 * GZ_PAD:2 * GZ_PAD + GZ].reshape(shape4)
    return pi, sigma, mu


# ------------------------------------------------------------------ parameter init
def init_params(key, sequence_len, hidden_units, z_dim, num_layers, n_gaussians, hidden_dim):
    """Deterministic init mirroring the shapes of the PyTorch module."""
    def uniform(key, shape, fan_in):
        bound = 1.0 / math.sqrt(fan_in)
        return jax.random.uniform(key, shape, jnp.float32, -bound, bound)

    keys = iter(jax.random.split(key, 64))
    p = {}
    in_dim = z_dim + 1
    p["fc1_w"] = uniform(next(keys), (hidden_dim, in_dim), in_dim)
    p["fc1_b"] = uniform(next(keys), (hidden_dim,), in_dim)

    p["lstm"] = []
    for layer in range(num_layers):
        d = hidden_dim if layer == 0 else hidden_units
        wih = uniform(next(keys), (4 * hidden_units, d), hidden_units)
        whh = uniform(next(keys), (4 * hidden_units, hidden_units), hidden_units)
        bih = uniform(next(keys), (4 * hidden_units,), hidden_units)
        bhh = uniform(next(keys), (4 * hidden_units,), hidden_units)
        p["lstm"].append((wih, whh, bih + bhh))

    gz = n_gaussians * z_dim
    for name in ("pi", "sigma", "mu"):
        p[f"{name}_w"] = uniform(next(keys), (gz, hidden_units), hidden_units)
        p[f"{name}_b"] = uniform(next(keys), (gz,), hidden_units)
    return p


if __name__ == "__main__":
    # small, deterministic config (B == sequence_len per the module's quirk)
    sequence_len = 8
    hidden_units = 64
    z_dim = 32
    num_layers = 2
    n_gaussians = 5
    hidden_dim = 64
    T = 6

    key = jax.random.PRNGKey(0)
    k_x, k_p = jax.random.split(key)
    x = jax.random.normal(k_x, (T, sequence_len, z_dim + 1), dtype=jnp.float32)
    params = init_params(k_p, sequence_len, hidden_units, z_dim,
                         num_layers, n_gaussians, hidden_dim)

    fwd = jax.jit(functools.partial(
        lstm_mdn_forward, hidden_units=hidden_units, z_dim=z_dim,
        n_gaussians=n_gaussians, hidden_dim=hidden_dim))

    pi, sigma, mu = fwd(x, params)
    jax.block_until_ready((pi, sigma, mu))

    assert pi.shape == (T, sequence_len, n_gaussians, z_dim)
    assert sigma.shape == (T, sequence_len, n_gaussians, z_dim)
    assert mu.shape == (T, sequence_len, n_gaussians, z_dim)
    assert bool(jnp.all(jnp.isfinite(pi)) & jnp.all(jnp.isfinite(sigma))
                & jnp.all(jnp.isfinite(mu)))
    # pi = softmax / TEMPERATURE, so it sums to 1/TEMPERATURE over the gaussian axis.
    pi_sum = jnp.sum(pi, axis=2)
    assert float(jnp.max(jnp.abs(pi_sum - 1.0 / TEMPERATURE))) < 1e-2
    print("KERNEL_OK")
</pallas_src>

<mosaic_0001>
module attributes {stable_mosaic.version = 11 : i64} {
  func.func @_fused_mdnrnn_kernel(%arg0: memref<48x128xbf16, #tpu.memory_space<vmem>>, %arg1: memref<128x64xbf16, #tpu.memory_space<vmem>>, %arg2: memref<1x64xf32, #tpu.memory_space<vmem>>, %arg3: memref<64x256xbf16, #tpu.memory_space<vmem>>, %arg4: memref<64x256xbf16, #tpu.memory_space<vmem>>, %arg5: memref<1x256xf32, #tpu.memory_space<vmem>>, %arg6: memref<64x256xbf16, #tpu.memory_space<vmem>>, %arg7: memref<64x256xbf16, #tpu.memory_space<vmem>>, %arg8: memref<1x256xf32, #tpu.memory_space<vmem>>, %arg9: memref<64x768xbf16, #tpu.memory_space<vmem>>, %arg10: memref<1x768xf32, #tpu.memory_space<vmem>>, %arg11: memref<48x768xf32, #tpu.memory_space<vmem>>, %arg12: memref<48x256xf32, #tpu.memory_space<vmem>>, %arg13: memref<48x256xf32, #tpu.memory_space<vmem>>) attributes {dimension_semantics = [], scalar_prefetch = 0 : i64, scratch_operands = 2 : i64, tpu.core_type = #tpu.core_type<tc>} {
    %c0 = arith.constant 0 : index
    %c0_0 = arith.constant 0 : index
    %0 = vector.load %arg0[%c0, %c0_0] : memref<48x128xbf16, #tpu.memory_space<vmem>>, vector<48x128xbf16>
    %c0_1 = arith.constant 0 : index
    %c0_2 = arith.constant 0 : index
    %1 = vector.load %arg1[%c0_1, %c0_2] : memref<128x64xbf16, #tpu.memory_space<vmem>>, vector<128x64xbf16>
    %cst = arith.constant dense<0.000000e+00> : vector<48x64xf32>
    %2 = tpu.matmul %0, %1, %cst {dimension_numbers = #tpu.dot_dimension_numbers<[1], [0], [0], [1], [0, 0, 1, 1], [], []>} : vector<48x128xbf16>, vector<128x64xbf16>, vector<48x64xf32> -> vector<48x64xf32>
    %c0_3 = arith.constant 0 : index
    %c0_4 = arith.constant 0 : index
    %3 = vector.load %arg2[%c0_3, %c0_4] : memref<1x64xf32, #tpu.memory_space<vmem>>, vector<1x64xf32>
    %4 = vector.broadcast %3 : vector<1x64xf32> to vector<48x64xf32>
    %5 = arith.addf %2, %4 : vector<48x64xf32>
    %cst_5 = arith.constant 0.000000e+00 : f32
    %6 = vector.broadcast %cst_5 : f32 to vector<48x64xf32>
    %7 = arith.maximumf %5, %6 : vector<48x64xf32>
    %8 = arith.truncf %7 : vector<48x64xf32> to vector<48x64xbf16>
    %c0_6 = arith.constant 0 : index
    %c0_7 = arith.constant 0 : index
    %9 = vector.load %arg3[%c0_6, %c0_7] : memref<64x256xbf16, #tpu.memory_space<vmem>>, vector<64x256xbf16>
    %cst_8 = arith.constant dense<0.000000e+00> : vector<48x256xf32>
    %10 = tpu.matmul %8, %9, %cst_8 {dimension_numbers = #tpu.dot_dimension_numbers<[1], [0], [0], [1], [0, 0, 1, 1], [], []>} : vector<48x64xbf16>, vector<64x256xbf16>, vector<48x256xf32> -> vector<48x256xf32>
    %c0_9 = arith.constant 0 : index
    %c0_10 = arith.constant 0 : index
    %11 = vector.load %arg5[%c0_9, %c0_10] : memref<1x256xf32, #tpu.memory_space<vmem>>, vector<1x256xf32>
    %12 = vector.broadcast %11 : vector<1x256xf32> to vector<48x256xf32>
    %13 = arith.addf %10, %12 : vector<48x256xf32>
    %c0_11 = arith.constant 0 : index
    %c0_12 = arith.constant 0 : index
    %14 = vector.load %arg12[%c0_11, %c0_12] : memref<48x256xf32, #tpu.memory_space<vmem>>, vector<48x256xf32>
    tpu.vector_store %arg12[%c0_11, %c0_12], %13 {strides = array<i32>} : memref<48x256xf32, #tpu.memory_space<vmem>>, vector<48x256xf32>,
    %cst_13 = arith.constant 0.000000e+00 : f32
    %15 = vector.broadcast %cst_13 : f32 to vector<8x64xf32>
    %cst_14 = arith.constant 0.000000e+00 : f32
    %16 = vector.broadcast %cst_14 : f32 to vector<8x64xf32>
    %c0_15 = arith.constant 0 : index
    %c0_16 = arith.constant 0 : index
    %17 = vector.load %arg12[%c0_15, %c0_16] : memref<48x256xf32, #tpu.memory_space<vmem>>, vector<8x256xf32>
    %18 = arith.truncf %15 : vector<8x64xf32> to vector<8x64xbf16>
    %c0_17 = arith.constant 0 : index
    %c0_18 = arith.constant 0 : index
    %19 = vector.load %arg4[%c0_17, %c0_18] : memref<64x256xbf16, #tpu.memory_space<vmem>>, vector<64x256xbf16>
    %cst_19 = arith.constant dense<0.000000e+00> : vector<8x256xf32>
    %20 = tpu.matmul %18, %19, %cst_19 {dimension_numbers = #tpu.dot_dimension_numbers<[1], [0], [0], [1], [0, 0, 1, 1], [], []>} : vector<8x64xbf16>, vector<64x256xbf16>, vector<8x256xf32> -> vector<8x256xf32>
    %21 = arith.addf %17, %20 : vector<8x256xf32>
    %22 = vector.extract_strided_slice %21 {offsets = [0, 0], sizes = [8, 128], strides = [1, 1]} : vector<8x256xf32> to vector<8x128xf32>
    %23 = arith.negf %22 : vector<8x128xf32>
    %24 = math.exp %23 : vector<8x128xf32>
    %cst_20 = arith.constant 1.000000e+00 : f32
    %25 = vector.broadcast %cst_20 : f32 to vector<8x128xf32>
    %26 = arith.addf %25, %24 : vector<8x128xf32>
    %27 = arith.divf %25, %26 : vector<8x128xf32>
    %28 = vector.extract_strided_slice %21 {offsets = [0, 128], sizes = [8, 64], strides = [1, 1]} : vector<8x256xf32> to vector<8x64xf32>
    %29 = arith.negf %28 : vector<8x64xf32>
    %30 = math.exp %29 : vector<8x64xf32>
    %cst_21 = arith.constant 1.000000e+00 : f32
    %31 = vector.broadcast %cst_21 : f32 to vector<8x64xf32>
    %32 = arith.addf %31, %30 : vector<8x64xf32>
    %33 = arith.divf %31, %32 : vector<8x64xf32>
    %34 = vector.extract_strided_slice %21 {offsets = [0, 192], sizes = [8, 64], strides = [1, 1]} : vector<8x256xf32> to vector<8x64xf32>
    %35 = math.tanh %34 : vector<8x64xf32>
    %36 = vector.extract_strided_slice %27 {offsets = [0, 0], sizes = [8, 64], strides = [1, 1]} : vector<8x128xf32> to vector<8x64xf32>
    %37 = arith.mulf %36, %16 : vector<8x64xf32>
    %38 = vector.extract_strided_slice %27 {offsets = [0, 64], sizes = [8, 64], strides = [1, 1]} : vector<8x128xf32> to vector<8x64xf32>
    %39 = arith.mulf %38, %35 : vector<8x64xf32>
    %40 = arith.addf %37, %39 : vector<8x64xf32>
    %41 = math.tanh %40 : vector<8x64xf32>
    %42 = arith.mulf %33, %41 : vector<8x64xf32>
    %43 = arith.truncf %42 : vector<8x64xf32> to vector<8x64xbf16>
    %c0_22 = arith.constant 0 : index
    %c0_23 = arith.constant 0 : index
    %44 = vector.load %arg6[%c0_22, %c0_23] : memref<64x256xbf16, #tpu.memory_space<vmem>>, vector<64x256xbf16>
    %cst_24 = arith.constant dense<0.000000e+00> : vector<8x256xf32>
    %45 = tpu.matmul %43, %44, %cst_24 {dimension_numbers = #tpu.dot_dimension_numbers<[1], [0], [0], [1], [0, 0, 1, 1], [], []>} : vector<8x64xbf16>, vector<64x256xbf16>, vector<8x256xf32> -> vector<8x256xf32>
    %c0_25 = arith.constant 0 : index
    %c0_26 = arith.constant 0 : index
    %46 = vector.load %arg8[%c0_25, %c0_26] : memref<1x256xf32, #tpu.memory_space<vmem>>, vector<1x256xf32>
    %47 = vector.broadcast %46 : vector<1x256xf32> to vector<8x256xf32>
    %48 = arith.addf %45, %47 : vector<8x256xf32>
    %c0_27 = arith.constant 0 : index
    %c0_28 = arith.constant 0 : index
    %49 = vector.load %arg13[%c0_27, %c0_28] : memref<48x256xf32, #tpu.memory_space<vmem>>, vector<8x256xf32>
    tpu.vector_store %arg13[%c0_27, %c0_28], %48 {strides = array<i32>} : memref<48x256xf32, #tpu.memory_space<vmem>>, vector<8x256xf32>,
    %c8 = arith.constant 8 : index
    %c0_29 = arith.constant 0 : index
    %50 = vector.load %arg12[%c8, %c0_29] : memref<48x256xf32, #tpu.memory_space<vmem>>, vector<8x256xf32>
    %51 = arith.truncf %42 : vector<8x64xf32> to vector<8x64xbf16>
    %c0_30 = arith.constant 0 : index
    %c0_31 = arith.constant 0 : index
    %52 = vector.load %arg4[%c0_30, %c0_31] : memref<64x256xbf16, #tpu.memory_space<vmem>>, vector<64x256xbf16>
    %cst_32 = arith.constant dense<0.000000e+00> : vector<8x256xf32>
    %53 = tpu.matmul %51, %52, %cst_32 {dimension_numbers = #tpu.dot_dimension_numbers<[1], [0], [0], [1], [0, 0, 1, 1], [], []>} : vector<8x64xbf16>, vector<64x256xbf16>, vector<8x256xf32> -> vector<8x256xf32>
    %54 = arith.addf %50, %53 : vector<8x256xf32>
    %55 = vector.extract_strided_slice %54 {offsets = [0, 0], sizes = [8, 128], strides = [1, 1]} : vector<8x256xf32> to vector<8x128xf32>
    %56 = arith.negf %55 : vector<8x128xf32>
    %57 = math.exp %56 : vector<8x128xf32>
    %cst_33 = arith.constant 1.000000e+00 : f32
    %58 = vector.broadcast %cst_33 : f32 to vector<8x128xf32>
    %59 = arith.addf %58, %57 : vector<8x128xf32>
    %60 = arith.divf %58, %59 : vector<8x128xf32>
    %61 = vector.extract_strided_slice %54 {offsets = [0, 128], sizes = [8, 64], strides = [1, 1]} : vector<8x256xf32> to vector<8x64xf32>
    %62 = arith.negf %61 : vector<8x64xf32>
    %63 = math.exp %62 : vector<8x64xf32>
    %cst_34 = arith.constant 1.000000e+00 : f32
    %64 = vector.broadcast %cst_34 : f32 to vector<8x64xf32>
    %65 = arith.addf %64, %63 : vector<8x64xf32>
    %66 = arith.divf %64, %65 : vector<8x64xf32>
    %67 = vector.extract_strided_slice %54 {offsets = [0, 192], sizes = [8, 64], strides = [1, 1]} : vector<8x256xf32> to vector<8x64xf32>
    %68 = math.tanh %67 : vector<8x64xf32>
    %69 = vector.extract_strided_slice %60 {offsets = [0, 0], sizes = [8, 64], strides = [1, 1]} : vector<8x128xf32> to vector<8x64xf32>
    %70 = arith.mulf %69, %40 : vector<8x64xf32>
    %71 = vector.extract_strided_slice %60 {offsets = [0, 64], sizes = [8, 64], strides = [1, 1]} : vector<8x128xf32> to vector<8x64xf32>
    %72 = arith.mulf %71, %68 : vector<8x64xf32>
    %73 = arith.addf %70, %72 : vector<8x64xf32>
    %74 = math.tanh %73 : vector<8x64xf32>
    %75 = arith.mulf %66, %74 : vector<8x64xf32>
    %76 = arith.truncf %75 : vector<8x64xf32> to vector<8x64xbf16>
    %c0_35 = arith.constant 0 : index
    %c0_36 = arith.constant 0 : index
    %77 = vector.load %arg6[%c0_35, %c0_36] : memref<64x256xbf16, #tpu.memory_space<vmem>>, vector<64x256xbf16>
    %cst_37 = arith.constant dense<0.000000e+00> : vector<8x256xf32>
    %78 = tpu.matmul %76, %77, %cst_37 {dimension_numbers = #tpu.dot_dimension_numbers<[1], [0], [0], [1], [0, 0, 1, 1], [], []>} : vector<8x64xbf16>, vector<64x256xbf16>, vector<8x256xf32> -> vector<8x256xf32>
    %c0_38 = arith.constant 0 : index
    %c0_39 = arith.constant 0 : index
    %79 = vector.load %arg8[%c0_38, %c0_39] : memref<1x256xf32, #tpu.memory_space<vmem>>, vector<1x256xf32>
    %80 = vector.broadcast %79 : vector<1x256xf32> to vector<8x256xf32>
    %81 = arith.addf %78, %80 : vector<8x256xf32>
    %c8_40 = arith.constant 8 : index
    %c0_41 = arith.constant 0 : index
    %82 = vector.load %arg13[%c8_40, %c0_41] : memref<48x256xf32, #tpu.memory_space<vmem>>, vector<8x256xf32>
    tpu.vector_store %arg13[%c8_40, %c0_41], %81 {strides = array<i32>} : memref<48x256xf32, #tpu.memory_space<vmem>>, vector<8x256xf32>,
    %c16 = arith.constant 16 : index
    %c0_42 = arith.constant 0 : index
    %83 = vector.load %arg12[%c16, %c0_42] : memref<48x256xf32, #tpu.memory_space<vmem>>, vector<8x256xf32>
    %84 = arith.truncf %75 : vector<8x64xf32> to vector<8x64xbf16>
    %c0_43 = arith.constant 0 : index
    %c0_44 = arith.constant 0 : index
    %85 = vector.load %arg4[%c0_43, %c0_44] : memref<64x256xbf16, #tpu.memory_space<vmem>>, vector<64x256xbf16>
    %cst_45 = arith.constant dense<0.000000e+00> : vector<8x256xf32>
    %86 = tpu.matmul %84, %85, %cst_45 {dimension_numbers = #tpu.dot_dimension_numbers<[1], [0], [0], [1], [0, 0, 1, 1], [], []>} : vector<8x64xbf16>, vector<64x256xbf16>, vector<8x256xf32> -> vector<8x256xf32>
    %87 = arith.addf %83, %86 : vector<8x256xf32>
    %88 = vector.extract_strided_slice %87 {offsets = [0, 0], sizes = [8, 128], strides = [1, 1]} : vector<8x256xf32> to vector<8x128xf32>
    %89 = arith.negf %88 : vector<8x128xf32>
    %90 = math.exp %89 : vector<8x128xf32>
    %cst_46 = arith.constant 1.000000e+00 : f32
    %91 = vector.broadcast %cst_46 : f32 to vector<8x128xf32>
    %92 = arith.addf %91, %90 : vector<8x128xf32>
    %93 = arith.divf %91, %92 : vector<8x128xf32>
    %94 = vector.extract_strided_slice %87 {offsets = [0, 128], sizes = [8, 64], strides = [1, 1]} : vector<8x256xf32> to vector<8x64xf32>
    %95 = arith.negf %94 : vector<8x64xf32>
    %96 = math.exp %95 : vector<8x64xf32>
    %cst_47 = arith.constant 1.000000e+00 : f32
    %97 = vector.broadcast %cst_47 : f32 to vector<8x64xf32>
    %98 = arith.addf %97, %96 : vector<8x64xf32>
    %99 = arith.divf %97, %98 : vector<8x64xf32>
    %100 = vector.extract_strided_slice %87 {offsets = [0, 192], sizes = [8, 64], strides = [1, 1]} : vector<8x256xf32> to vector<8x64xf32>
    %101 = math.tanh %100 : vector<8x64xf32>
    %102 = vector.extract_strided_slice %93 {offsets = [0, 0], sizes = [8, 64], strides = [1, 1]} : vector<8x128xf32> to vector<8x64xf32>
    %103 = arith.mulf %102, %73 : vector<8x64xf32>
    %104 = vector.extract_strided_slice %93 {offsets = [0, 64], sizes = [8, 64], strides = [1, 1]} : vector<8x128xf32> to vector<8x64xf32>
    %105 = arith.mulf %104, %101 : vector<8x64xf32>
    %106 = arith.addf %103, %105 : vector<8x64xf32>
    %107 = math.tanh %106 : vector<8x64xf32>
    %108 = arith.mulf %99, %107 : vector<8x64xf32>
    %109 = arith.truncf %108 : vector<8x64xf32> to vector<8x64xbf16>
    %c0_48 = arith.constant 0 : index
    %c0_49 = arith.constant 0 : index
    %110 = vector.load %arg6[%c0_48, %c0_49] : memref<64x256xbf16, #tpu.memory_space<vmem>>, vector<64x256xbf16>
    %cst_50 = arith.constant dense<0.000000e+00> : vector<8x256xf32>
    %111 = tpu.matmul %109, %110, %cst_50 {dimension_numbers = #tpu.dot_dimension_numbers<[1], [0], [0], [1], [0, 0, 1, 1], [], []>} : vector<8x64xbf16>, vector<64x256xbf16>, vector<8x256xf32> -> vector<8x256xf32>
    %c0_51 = arith.constant 0 : index
    %c0_52 = arith.constant 0 : index
    %112 = vector.load %arg8[%c0_51, %c0_52] : memref<1x256xf32, #tpu.memory_space<vmem>>, vector<1x256xf32>
    %113 = vector.broadcast %112 : vector<1x256xf32> to vector<8x256xf32>
    %114 = arith.addf %111, %113 : vector<8x256xf32>
    %c16_53 = arith.constant 16 : index
    %c0_54 = arith.constant 0 : index
    %115 = vector.load %arg13[%c16_53, %c0_54] : memref<48x256xf32, #tpu.memory_space<vmem>>, vector<8x256xf32>
    tpu.vector_store %arg13[%c16_53, %c0_54], %114 {strides = array<i32>} : memref<48x256xf32, #tpu.memory_space<vmem>>, vector<8x256xf32>,
    %c24 = arith.constant 24 : index
    %c0_55 = arith.constant 0 : index
    %116 = vector.load %arg12[%c24, %c0_55] : memref<48x256xf32, #tpu.memory_space<vmem>>, vector<8x256xf32>
    %117 = arith.truncf %108 : vector<8x64xf32> to vector<8x64xbf16>
    %c0_56 = arith.constant 0 : index
    %c0_57 = arith.constant 0 : index
    %118 = vector.load %arg4[%c0_56, %c0_57] : memref<64x256xbf16, #tpu.memory_space<vmem>>, vector<64x256xbf16>
    %cst_58 = arith.constant dense<0.000000e+00> : vector<8x256xf32>
    %119 = tpu.matmul %117, %118, %cst_58 {dimension_numbers = #tpu.dot_dimension_numbers<[1], [0], [0], [1], [0, 0, 1, 1], [], []>} : vector<8x64xbf16>, vector<64x256xbf16>, vector<8x256xf32> -> vector<8x256xf32>
    %120 = arith.addf %116, %119 : vector<8x256xf32>
    %121 = vector.extract_strided_slice %120 {offsets = [0, 0], sizes = [8, 128], strides = [1, 1]} : vector<8x256xf32> to vector<8x128xf32>
    %122 = arith.negf %121 : vector<8x128xf32>
    %123 = math.exp %122 : vector<8x128xf32>
    %cst_59 = arith.constant 1.000000e+00 : f32
    %124 = vector.broadcast %cst_59 : f32 to vector<8x128xf32>
    %125 = arith.addf %124, %123 : vector<8x128xf32>
    %126 = arith.divf %124, %125 : vector<8x128xf32>
    %127 = vector.extract_strided_slice %120 {offsets = [0, 128], sizes = [8, 64], strides = [1, 1]} : vector<8x256xf32> to vector<8x64xf32>
    %128 = arith.negf %127 : vector<8x64xf32>
    %129 = math.exp %128 : vector<8x64xf32>
    %cst_60 = arith.constant 1.000000e+00 : f32
    %130 = vector.broadcast %cst_60 : f32 to vector<8x64xf32>
    %131 = arith.addf %130, %129 : vector<8x64xf32>
    %132 = arith.divf %130, %131 : vector<8x64xf32>
    %133 = vector.extract_strided_slice %120 {offsets = [0, 192], sizes = [8, 64], strides = [1, 1]} : vector<8x256xf32> to vector<8x64xf32>
    %134 = math.tanh %133 : vector<8x64xf32>
    %135 = vector.extract_strided_slice %126 {offsets = [0, 0], sizes = [8, 64], strides = [1, 1]} : vector<8x128xf32> to vector<8x64xf32>
    %136 = arith.mulf %135, %106 : vector<8x64xf32>
    %137 = vector.extract_strided_slice %126 {offsets = [0, 64], sizes = [8, 64], strides = [1, 1]} : vector<8x128xf32> to vector<8x64xf32>
    %138 = arith.mulf %137, %134 : vector<8x64xf32>
    %139 = arith.addf %136, %138 : vector<8x64xf32>
    %140 = math.tanh %139 : vector<8x64xf32>
    %141 = arith.mulf %132, %140 : vector<8x64xf32>
    %142 = arith.truncf %141 : vector<8x64xf32> to vector<8x64xbf16>
    %c0_61 = arith.constant 0 : index
    %c0_62 = arith.constant 0 : index
    %143 = vector.load %arg6[%c0_61, %c0_62] : memref<64x256xbf16, #tpu.memory_space<vmem>>, vector<64x256xbf16>
    %cst_63 = arith.constant dense<0.000000e+00> : vector<8x256xf32>
    %144 = tpu.matmul %142, %143, %cst_63 {dimension_numbers = #tpu.dot_dimension_numbers<[1], [0], [0], [1], [0, 0, 1, 1], [], []>} : vector<8x64xbf16>, vector<64x256xbf16>, vector<8x256xf32> -> vector<8x256xf32>
    %c0_64 = arith.constant 0 : index
    %c0_65 = arith.constant 0 : index
    %145 = vector.load %arg8[%c0_64, %c0_65] : memref<1x256xf32, #tpu.memory_space<vmem>>, vector<1x256xf32>
    %146 = vector.broadcast %145 : vector<1x256xf32> to vector<8x256xf32>
    %147 = arith.addf %144, %146 : vector<8x256xf32>
    %c24_66 = arith.constant 24 : index
    %c0_67 = arith.constant 0 : index
    %148 = vector.load %arg13[%c24_66, %c0_67] : memref<48x256xf32, #tpu.memory_space<vmem>>, vector<8x256xf32>
    tpu.vector_store %arg13[%c24_66, %c0_67], %147 {strides = array<i32>} : memref<48x256xf32, #tpu.memory_space<vmem>>, vector<8x256xf32>,
    %c32 = arith.constant 32 : index
    %c0_68 = arith.constant 0 : index
    %149 = vector.load %arg12[%c32, %c0_68] : memref<48x256xf32, #tpu.memory_space<vmem>>, vector<8x256xf32>
    %150 = arith.truncf %141 : vector<8x64xf32> to vector<8x64xbf16>
    %c0_69 = arith.constant 0 : index
    %c0_70 = arith.constant 0 : index
    %151 = vector.load %arg4[%c0_69, %c0_70] : memref<64x256xbf16, #tpu.memory_space<vmem>>, vector<64x256xbf16>
    %cst_71 = arith.constant dense<0.000000e+00> : vector<8x256xf32>
    %152 = tpu.matmul %150, %151, %cst_71 {dimension_numbers = #tpu.dot_dimension_numbers<[1], [0], [0], [1], [0, 0, 1, 1], [], []>} : vector<8x64xbf16>, vector<64x256xbf16>, vector<8x256xf32> -> vector<8x256xf32>
    %153 = arith.addf %149, %152 : vector<8x256xf32>
    %154 = vector.extract_strided_slice %153 {offsets = [0, 0], sizes = [8, 128], strides = [1, 1]} : vector<8x256xf32> to vector<8x128xf32>
    %155 = arith.negf %154 : vector<8x128xf32>
    %156 = math.exp %155 : vector<8x128xf32>
    %cst_72 = arith.constant 1.000000e+00 : f32
    %157 = vector.broadcast %cst_72 : f32 to vector<8x128xf32>
    %158 = arith.addf %157, %156 : vector<8x128xf32>
    %159 = arith.divf %157, %158 : vector<8x128xf32>
    %160 = vector.extract_strided_slice %153 {offsets = [0, 128], sizes = [8, 64], strides = [1, 1]} : vector<8x256xf32> to vector<8x64xf32>
    %161 = arith.negf %160 : vector<8x64xf32>
    %162 = math.exp %161 : vector<8x64xf32>
    %cst_73 = arith.constant 1.000000e+00 : f32
    %163 = vector.broadcast %cst_73 : f32 to vector<8x64xf32>
    %164 = arith.addf %163, %162 : vector<8x64xf32>
    %165 = arith.divf %163, %164 : vector<8x64xf32>
    %166 = vector.extract_strided_slice %153 {offsets = [0, 192], sizes = [8, 64], strides = [1, 1]} : vector<8x256xf32> to vector<8x64xf32>
    %167 = math.tanh %166 : vector<8x64xf32>
    %168 = vector.extract_strided_slice %159 {offsets = [0, 0], sizes = [8, 64], strides = [1, 1]} : vector<8x128xf32> to vector<8x64xf32>
    %169 = arith.mulf %168, %139 : vector<8x64xf32>
    %170 = vector.extract_strided_slice %159 {offsets = [0, 64], sizes = [8, 64], strides = [1, 1]} : vector<8x128xf32> to vector<8x64xf32>
    %171 = arith.mulf %170, %167 : vector<8x64xf32>
    %172 = arith.addf %169, %171 : vector<8x64xf32>
    %173 = math.tanh %172 : vector<8x64xf32>
    %174 = arith.mulf %165, %173 : vector<8x64xf32>
    %175 = arith.truncf %174 : vector<8x64xf32> to vector<8x64xbf16>
    %c0_74 = arith.constant 0 : index
    %c0_75 = arith.constant 0 : index
    %176 = vector.load %arg6[%c0_74, %c0_75] : memref<64x256xbf16, #tpu.memory_space<vmem>>, vector<64x256xbf16>
    %cst_76 = arith.constant dense<0.000000e+00> : vector<8x256xf32>
    %177 = tpu.matmul %175, %176, %cst_76 {dimension_numbers = #tpu.dot_dimension_numbers<[1], [0], [0], [1], [0, 0, 1, 1], [], []>} : vector<8x64xbf16>, vector<64x256xbf16>, vector<8x256xf32> -> vector<8x256xf32>
    %c0_77 = arith.constant 0 : index
    %c0_78 = arith.constant 0 : index
    %178 = vector.load %arg8[%c0_77, %c0_78] : memref<1x256xf32, #tpu.memory_space<vmem>>, vector<1x256xf32>
    %179 = vector.broadcast %178 : vector<1x256xf32> to vector<8x256xf32>
    %180 = arith.addf %177, %179 : vector<8x256xf32>
    %c32_79 = arith.constant 32 : index
    %c0_80 = arith.constant 0 : index
    %181 = vector.load %arg13[%c32_79, %c0_80] : memref<48x256xf32, #tpu.memory_space<vmem>>, vector<8x256xf32>
    tpu.vector_store %arg13[%c32_79, %c0_80], %180 {strides = array<i32>} : memref<48x256xf32, #tpu.memory_space<vmem>>, vector<8x256xf32>,
    %c40 = arith.constant 40 : index
    %c0_81 = arith.constant 0 : index
    %182 = vector.load %arg12[%c40, %c0_81] : memref<48x256xf32, #tpu.memory_space<vmem>>, vector<8x256xf32>
    %183 = arith.truncf %174 : vector<8x64xf32> to vector<8x64xbf16>
    %c0_82 = arith.constant 0 : index
    %c0_83 = arith.constant 0 : index
    %184 = vector.load %arg4[%c0_82, %c0_83] : memref<64x256xbf16, #tpu.memory_space<vmem>>, vector<64x256xbf16>
    %cst_84 = arith.constant dense<0.000000e+00> : vector<8x256xf32>
    %185 = tpu.matmul %183, %184, %cst_84 {dimension_numbers = #tpu.dot_dimension_numbers<[1], [0], [0], [1], [0, 0, 1, 1], [], []>} : vector<8x64xbf16>, vector<64x256xbf16>, vector<8x256xf32> -> vector<8x256xf32>
    %186 = arith.addf %182, %185 : vector<8x256xf32>
    %187 = vector.extract_strided_slice %186 {offsets = [0, 0], sizes = [8, 128], strides = [1, 1]} : vector<8x256xf32> to vector<8x128xf32>
    %188 = arith.negf %187 : vector<8x128xf32>
    %189 = math.exp %188 : vector<8x128xf32>
    %cst_85 = arith.constant 1.000000e+00 : f32
    %190 = vector.broadcast %cst_85 : f32 to vector<8x128xf32>
    %191 = arith.addf %190, %189 : vector<8x128xf32>
    %192 = arith.divf %190, %191 : vector<8x128xf32>
    %193 = vector.extract_strided_slice %186 {offsets = [0, 128], sizes = [8, 64], strides = [1, 1]} : vector<8x256xf32> to vector<8x64xf32>
    %194 = arith.negf %193 : vector<8x64xf32>
    %195 = math.exp %194 : vector<8x64xf32>
    %cst_86 = arith.constant 1.000000e+00 : f32
    %196 = vector.broadcast %cst_86 : f32 to vector<8x64xf32>
    %197 = arith.addf %196, %195 : vector<8x64xf32>
    %198 = arith.divf %196, %197 : vector<8x64xf32>
    %199 = vector.extract_strided_slice %186 {offsets = [0, 192], sizes = [8, 64], strides = [1, 1]} : vector<8x256xf32> to vector<8x64xf32>
    %200 = math.tanh %199 : vector<8x64xf32>
    %201 = vector.extract_strided_slice %192 {offsets = [0, 0], sizes = [8, 64], strides = [1, 1]} : vector<8x128xf32> to vector<8x64xf32>
    %202 = arith.mulf %201, %172 : vector<8x64xf32>
    %203 = vector.extract_strided_slice %192 {offsets = [0, 64], sizes = [8, 64], strides = [1, 1]} : vector<8x128xf32> to vector<8x64xf32>
    %204 = arith.mulf %203, %200 : vector<8x64xf32>
    %205 = arith.addf %202, %204 : vector<8x64xf32>
    %206 = math.tanh %205 : vector<8x64xf32>
    %207 = arith.mulf %198, %206 : vector<8x64xf32>
    %208 = arith.truncf %207 : vector<8x64xf32> to vector<8x64xbf16>
    %c0_87 = arith.constant 0 : index
    %c0_88 = arith.constant 0 : index
    %209 = vector.load %arg6[%c0_87, %c0_88] : memref<64x256xbf16, #tpu.memory_space<vmem>>, vector<64x256xbf16>
    %cst_89 = arith.constant dense<0.000000e+00> : vector<8x256xf32>
    %210 = tpu.matmul %208, %209, %cst_89 {dimension_numbers = #tpu.dot_dimension_numbers<[1], [0], [0], [1], [0, 0, 1, 1], [], []>} : vector<8x64xbf16>, vector<64x256xbf16>, vector<8x256xf32> -> vector<8x256xf32>
    %c0_90 = arith.constant 0 : index
    %c0_91 = arith.constant 0 : index
    %211 = vector.load %arg8[%c0_90, %c0_91] : memref<1x256xf32, #tpu.memory_space<vmem>>, vector<1x256xf32>
    %212 = vector.broadcast %211 : vector<1x256xf32> to vector<8x256xf32>
    %213 = arith.addf %210, %212 : vector<8x256xf32>
    %c40_92 = arith.constant 40 : index
    %c0_93 = arith.constant 0 : index
    %214 = vector.load %arg13[%c40_92, %c0_93] : memref<48x256xf32, #tpu.memory_space<vmem>>, vector<8x256xf32>
    tpu.vector_store %arg13[%c40_92, %c0_93], %213 {strides = array<i32>} : memref<48x256xf32, #tpu.memory_space<vmem>>, vector<8x256xf32>,
    %cst_94 = arith.constant 0.000000e+00 : f32
    %215 = vector.broadcast %cst_94 : f32 to vector<8x64xf32>
    %cst_95 = arith.constant 0.000000e+00 : f32
    %216 = vector.broadcast %cst_95 : f32 to vector<8x64xf32>
    %c0_96 = arith.constant 0 : index
    %c0_97 = arith.constant 0 : index
    %217 = vector.load %arg13[%c0_96, %c0_97] : memref<48x256xf32, #tpu.memory_space<vmem>>, vector<8x256xf32>
    %218 = arith.truncf %215 : vector<8x64xf32> to vector<8x64xbf16>
    %c0_98 = arith.constant 0 : index
    %c0_99 = arith.constant 0 : index
    %219 = vector.load %arg7[%c0_98, %c0_99] : memref<64x256xbf16, #tpu.memory_space<vmem>>, vector<64x256xbf16>
    %cst_100 = arith.constant dense<0.000000e+00> : vector<8x256xf32>
    %220 = tpu.matmul %218, %219, %cst_100 {dimension_numbers = #tpu.dot_dimension_numbers<[1], [0], [0], [1], [0, 0, 1, 1], [], []>} : vector<8x64xbf16>, vector<64x256xbf16>, vector<8x256xf32> -> vector<8x256xf32>
    %221 = arith.addf %217, %220 : vector<8x256xf32>
    %222 = vector.extract_strided_slice %221 {offsets = [0, 0], sizes = [8, 128], strides = [1, 1]} : vector<8x256xf32> to vector<8x128xf32>
    %223 = arith.negf %222 : vector<8x128xf32>
    %224 = math.exp %223 : vector<8x128xf32>
    %cst_101 = arith.constant 1.000000e+00 : f32
    %225 = vector.broadcast %cst_101 : f32 to vector<8x128xf32>
    %226 = arith.addf %225, %224 : vector<8x128xf32>
    %227 = arith.divf %225, %226 : vector<8x128xf32>
    %228 = vector.extract_strided_slice %221 {offsets = [0, 128], sizes = [8, 64], strides = [1, 1]} : vector<8x256xf32> to vector<8x64xf32>
    %229 = arith.negf %228 : vector<8x64xf32>
    %230 = math.exp %229 : vector<8x64xf32>
    %cst_102 = arith.constant 1.000000e+00 : f32
    %231 = vector.broadcast %cst_102 : f32 to vector<8x64xf32>
    %232 = arith.addf %231, %230 : vector<8x64xf32>
    %233 = arith.divf %231, %232 : vector<8x64xf32>
    %234 = vector.extract_strided_slice %221 {offsets = [0, 192], sizes = [8, 64], strides = [1, 1]} : vector<8x256xf32> to vector<8x64xf32>
    %235 = math.tanh %234 : vector<8x64xf32>
    %236 = vector.extract_strided_slice %227 {offsets = [0, 0], sizes = [8, 64], strides = [1, 1]} : vector<8x128xf32> to vector<8x64xf32>
    %237 = arith.mulf %236, %216 : vector<8x64xf32>
    %238 = vector.extract_strided_slice %227 {offsets = [0, 64], sizes = [8, 64], strides = [1, 1]} : vector<8x128xf32> to vector<8x64xf32>
    %239 = arith.mulf %238, %235 : vector<8x64xf32>
    %240 = arith.addf %237, %239 : vector<8x64xf32>
    %241 = math.tanh %240 : vector<8x64xf32>
    %242 = arith.mulf %233, %241 : vector<8x64xf32>
    %243 = arith.truncf %242 : vector<8x64xf32> to vector<8x64xbf16>
    %c0_103 = arith.constant 0 : index
    %c0_104 = arith.constant 0 : index
    %244 = vector.load %arg9[%c0_103, %c0_104] : memref<64x768xbf16, #tpu.memory_space<vmem>>, vector<64x768xbf16>
    %cst_105 = arith.constant dense<0.000000e+00> : vector<8x768xf32>
    %245 = tpu.matmul %243, %244, %cst_105 {dimension_numbers = #tpu.dot_dimension_numbers<[1], [0], [0], [1], [0, 0, 1, 1], [], []>} : vector<8x64xbf16>, vector<64x768xbf16>, vector<8x768xf32> -> vector<8x768xf32>
    %c0_106 = arith.constant 0 : index
    %c0_107 = arith.constant 0 : index
    %246 = vector.load %arg10[%c0_106, %c0_107] : memref<1x768xf32, #tpu.memory_space<vmem>>, vector<1x768xf32>
    %247 = vector.broadcast %246 : vector<1x768xf32> to vector<8x768xf32>
    %248 = arith.addf %245, %247 : vector<8x768xf32>
    %249 = vector.extract_strided_slice %248 {offsets = [0, 512], sizes = [8, 256], strides = [1, 1]} : vector<8x768xf32> to vector<8x256xf32>
    %c0_108 = arith.constant 0 : index
    %c512 = arith.constant 512 : index
    %250 = vector.load %arg11[%c0_108, %c512] : memref<48x768xf32, #tpu.memory_space<vmem>>, vector<8x256xf32>
    tpu.vector_store %arg11[%c0_108, %c512], %249 {strides = array<i32>} : memref<48x768xf32, #tpu.memory_space<vmem>>, vector<8x256xf32>,
    %251 = vector.extract_strided_slice %248 {offsets = [0, 256], sizes = [8, 256], strides = [1, 1]} : vector<8x768xf32> to vector<8x256xf32>
    %252 = math.exp %251 : vector<8x256xf32>
    %cst_109 = arith.constant 1.11803401 : f32
    %253 = vector.broadcast %cst_109 : f32 to vector<8x256xf32>
    %254 = arith.mulf %252, %253 : vector<8x256xf32>
    %c0_110 = arith.constant 0 : index
    %c256 = arith.constant 256 : index
    %255 = vector.load %arg11[%c0_110, %c256] : memref<48x768xf32, #tpu.memory_space<vmem>>, vector<8x256xf32>
    tpu.vector_store %arg11[%c0_110, %c256], %254 {strides = array<i32>} : memref<48x768xf32, #tpu.memory_space<vmem>>, vector<8x256xf32>,
    %256 = vector.extract_strided_slice %248 {offsets = [0, 0], sizes = [8, 32], strides = [1, 1]} : vector<8x768xf32> to vector<8x32xf32>
    %257 = vector.extract_strided_slice %248 {offsets = [0, 32], sizes = [8, 32], strides = [1, 1]} : vector<8x768xf32> to vector<8x32xf32>
    %258 = vector.extract_strided_slice %248 {offsets = [0, 64], sizes = [8, 32], strides = [1, 1]} : vector<8x768xf32> to vector<8x32xf32>
    %259 = vector.extract_strided_slice %248 {offsets = [0, 96], sizes = [8, 32], strides = [1, 1]} : vector<8x768xf32> to vector<8x32xf32>
    %260 = vector.extract_strided_slice %248 {offsets = [0, 128], sizes = [8, 32], strides = [1, 1]} : vector<8x768xf32> to vector<8x32xf32>
    %261 = arith.maximumf %256, %257 : vector<8x32xf32>
    %262 = arith.maximumf %261, %258 : vector<8x32xf32>
    %263 = arith.maximumf %262, %259 : vector<8x32xf32>
    %264 = arith.maximumf %263, %260 : vector<8x32xf32>
    %265 = arith.subf %256, %264 : vector<8x32xf32>
    %266 = math.exp %265 : vector<8x32xf32>
    %267 = arith.subf %257, %264 : vector<8x32xf32>
    %268 = math.exp %267 : vector<8x32xf32>
    %269 = arith.subf %258, %264 : vector<8x32xf32>
    %270 = math.exp %269 : vector<8x32xf32>
    %271 = arith.subf %259, %264 : vector<8x32xf32>
    %272 = math.exp %271 : vector<8x32xf32>
    %273 = arith.subf %260, %264 : vector<8x32xf32>
    %274 = math.exp %273 : vector<8x32xf32>
    %275 = arith.addf %266, %268 : vector<8x32xf32>
    %276 = arith.addf %275, %270 : vector<8x32xf32>
    %277 = arith.addf %276, %272 : vector<8x32xf32>
    %278 = arith.addf %277, %274 : vector<8x32xf32>
    %cst_111 = arith.constant 1.250000e+00 : f32
    %279 = vector.broadcast %cst_111 : f32 to vector<8x32xf32>
    %280 = arith.mulf %278, %279 : vector<8x32xf32>
    %281 = tpu.reciprocal %280 {approx = true} : vector<8x32xf32> -> vector<8x32xf32>
    %282 = arith.mulf %266, %281 : vector<8x32xf32>
    %283 = arith.mulf %268, %281 : vector<8x32xf32>
    %284 = arith.mulf %270, %281 : vector<8x32xf32>
    %285 = arith.mulf %272, %281 : vector<8x32xf32>
    %286 = arith.mulf %274, %281 : vector<8x32xf32>
    %cst_112 = arith.constant 0.000000e+00 : f32
    %287 = vector.broadcast %cst_112 : f32 to vector<8x96xf32>
    %288 = tpu.concatenate %282, %283, %284, %285, %286, %287 in 1 : vector<8x32xf32>, vector<8x32xf32>, vector<8x32xf32>, vector<8x32xf32>, vector<8x32xf32>, vector<8x96xf32> -> vector<8x256xf32>
    %c0_113 = arith.constant 0 : index
    %c0_114 = arith.constant 0 : index
    %289 = vector.load %arg11[%c0_113, %c0_114] : memref<48x768xf32, #tpu.memory_space<vmem>>, vector<8x256xf32>
    tpu.vector_store %arg11[%c0_113, %c0_114], %288 {strides = array<i32>} : memref<48x768xf32, #tpu.memory_space<vmem>>, vector<8x256xf32>,
    %c8_115 = arith.constant 8 : index
    %c0_116 = arith.constant 0 : index
    %290 = vector.load %arg13[%c8_115, %c0_116] : memref<48x256xf32, #tpu.memory_space<vmem>>, vector<8x256xf32>
    %291 = arith.truncf %242 : vector<8x64xf32> to vector<8x64xbf16>
    %c0_117 = arith.constant 0 : index
    %c0_118 = arith.constant 0 : index
    %292 = vector.load %arg7[%c0_117, %c0_118] : memref<64x256xbf16, #tpu.memory_space<vmem>>, vector<64x256xbf16>
    %cst_119 = arith.constant dense<0.000000e+00> : vector<8x256xf32>
    %293 = tpu.matmul %291, %292, %cst_119 {dimension_numbers = #tpu.dot_dimension_numbers<[1], [0], [0], [1], [0, 0, 1, 1], [], []>} : vector<8x64xbf16>, vector<64x256xbf16>, vector<8x256xf32> -> vector<8x256xf32>
    %294 = arith.addf %290, %293 : vector<8x256xf32>
    %295 = vector.extract_strided_slice %294 {offsets = [0, 0], sizes = [8, 128], strides = [1, 1]} : vector<8x256xf32> to vector<8x128xf32>
    %296 = arith.negf %295 : vector<8x128xf32>
    %297 = math.exp %296 : vector<8x128xf32>
    %cst_120 = arith.constant 1.000000e+00 : f32
    %298 = vector.broadcast %cst_120 : f32 to vector<8x128xf32>
    %299 = arith.addf %298, %297 : vector<8x128xf32>
    %300 = arith.divf %298, %299 : vector<8x128xf32>
    %301 = vector.extract_strided_slice %294 {offsets = [0, 128], sizes = [8, 64], strides = [1, 1]} : vector<8x256xf32> to vector<8x64xf32>
    %302 = arith.negf %301 : vector<8x64xf32>
    %303 = math.exp %302 : vector<8x64xf32>
    %cst_121 = arith.constant 1.000000e+00 : f32
    %304 = vector.broadcast %cst_121 : f32 to vector<8x64xf32>
    %305 = arith.addf %304, %303 : vector<8x64xf32>
    %306 = arith.divf %304, %305 : vector<8x64xf32>
    %307 = vector.extract_strided_slice %294 {offsets = [0, 192], sizes = [8, 64], strides = [1, 1]} : vector<8x256xf32> to vector<8x64xf32>
    %308 = math.tanh %307 : vector<8x64xf32>
    %309 = vector.extract_strided_slice %300 {offsets = [0, 0], sizes = [8, 64], strides = [1, 1]} : vector<8x128xf32> to vector<8x64xf32>
    %310 = arith.mulf %309, %240 : vector<8x64xf32>
    %311 = vector.extract_strided_slice %300 {offsets = [0, 64], sizes = [8, 64], strides = [1, 1]} : vector<8x128xf32> to vector<8x64xf32>
    %312 = arith.mulf %311, %308 : vector<8x64xf32>
    %313 = arith.addf %310, %312 : vector<8x64xf32>
    %314 = math.tanh %313 : vector<8x64xf32>
    %315 = arith.mulf %306, %314 : vector<8x64xf32>
    %316 = arith.truncf %315 : vector<8x64xf32> to vector<8x64xbf16>
    %c0_122 = arith.constant 0 : index
    %c0_123 = arith.constant 0 : index
    %317 = vector.load %arg9[%c0_122, %c0_123] : memref<64x768xbf16, #tpu.memory_space<vmem>>, vector<64x768xbf16>
    %cst_124 = arith.constant dense<0.000000e+00> : vector<8x768xf32>
    %318 = tpu.matmul %316, %317, %cst_124 {dimension_numbers = #tpu.dot_dimension_numbers<[1], [0], [0], [1], [0, 0, 1, 1], [], []>} : vector<8x64xbf16>, vector<64x768xbf16>, vector<8x768xf32> -> vector<8x768xf32>
    %c0_125 = arith.constant 0 : index
    %c0_126 = arith.constant 0 : index
    %319 = vector.load %arg10[%c0_125, %c0_126] : memref<1x768xf32, #tpu.memory_space<vmem>>, vector<1x768xf32>
    %320 = vector.broadcast %319 : vector<1x768xf32> to vector<8x768xf32>
    %321 = arith.addf %318, %320 : vector<8x768xf32>
    %322 = vector.extract_strided_slice %321 {offsets = [0, 512], sizes = [8, 256], strides = [1, 1]} : vector<8x768xf32> to vector<8x256xf32>
    %c8_127 = arith.constant 8 : index
    %c512_128 = arith.constant 512 : index
    %323 = vector.load %arg11[%c8_127, %c512_128] : memref<48x768xf32, #tpu.memory_space<vmem>>, vector<8x256xf32>
    tpu.vector_store %arg11[%c8_127, %c512_128], %322 {strides = array<i32>} : memref<48x768xf32, #tpu.memory_space<vmem>>, vector<8x256xf32>,
    %324 = vector.extract_strided_slice %321 {offsets = [0, 256], sizes = [8, 256], strides = [1, 1]} : vector<8x768xf32> to vector<8x256xf32>
    %325 = math.exp %324 : vector<8x256xf32>
    %cst_129 = arith.constant 1.11803401 : f32
    %326 = vector.broadcast %cst_129 : f32 to vector<8x256xf32>
    %327 = arith.mulf %325, %326 : vector<8x256xf32>
    %c8_130 = arith.constant 8 : index
    %c256_131 = arith.constant 256 : index
    %328 = vector.load %arg11[%c8_130, %c256_131] : memref<48x768xf32, #tpu.memory_space<vmem>>, vector<8x256xf32>
    tpu.vector_store %arg11[%c8_130, %c256_131], %327 {strides = array<i32>} : memref<48x768xf32, #tpu.memory_space<vmem>>, vector<8x256xf32>,
    %329 = vector.extract_strided_slice %321 {offsets = [0, 0], sizes = [8, 32], strides = [1, 1]} : vector<8x768xf32> to vector<8x32xf32>
    %330 = vector.extract_strided_slice %321 {offsets = [0, 32], sizes = [8, 32], strides = [1, 1]} : vector<8x768xf32> to vector<8x32xf32>
    %331 = vector.extract_strided_slice %321 {offsets = [0, 64], sizes = [8, 32], strides = [1, 1]} : vector<8x768xf32> to vector<8x32xf32>
    %332 = vector.extract_strided_slice %321 {offsets = [0, 96], sizes = [8, 32], strides = [1, 1]} : vector<8x768xf32> to vector<8x32xf32>
    %333 = vector.extract_strided_slice %321 {offsets = [0, 128], sizes = [8, 32], strides = [1, 1]} : vector<8x768xf32> to vector<8x32xf32>
    %334 = arith.maximumf %329, %330 : vector<8x32xf32>
    %335 = arith.maximumf %334, %331 : vector<8x32xf32>
    %336 = arith.maximumf %335, %332 : vector<8x32xf32>
    %337 = arith.maximumf %336, %333 : vector<8x32xf32>
    %338 = arith.subf %329, %337 : vector<8x32xf32>
    %339 = math.exp %338 : vector<8x32xf32>
    %340 = arith.subf %330, %337 : vector<8x32xf32>
    %341 = math.exp %340 : vector<8x32xf32>
    %342 = arith.subf %331, %337 : vector<8x32xf32>
    %343 = math.exp %342 : vector<8x32xf32>
    %344 = arith.subf %332, %337 : vector<8x32xf32>
    %345 = math.exp %344 : vector<8x32xf32>
    %346 = arith.subf %333, %337 : vector<8x32xf32>
    %347 = math.exp %346 : vector<8x32xf32>
    %348 = arith.addf %339, %341 : vector<8x32xf32>
    %349 = arith.addf %348, %343 : vector<8x32xf32>
    %350 = arith.addf %349, %345 : vector<8x32xf32>
    %351 = arith.addf %350, %347 : vector<8x32xf32>
    %cst_132 = arith.constant 1.250000e+00 : f32
    %352 = vector.broadcast %cst_132 : f32 to vector<8x32xf32>
    %353 = arith.mulf %351, %352 : vector<8x32xf32>
    %354 = tpu.reciprocal %353 {approx = true} : vector<8x32xf32> -> vector<8x32xf32>
    %355 = arith.mulf %339, %354 : vector<8x32xf32>
    %356 = arith.mulf %341, %354 : vector<8x32xf32>
    %357 = arith.mulf %343, %354 : vector<8x32xf32>
    %358 = arith.mulf %345, %354 : vector<8x32xf32>
    %359 = arith.mulf %347, %354 : vector<8x32xf32>
    %cst_133 = arith.constant 0.000000e+00 : f32
    %360 = vector.broadcast %cst_133 : f32 to vector<8x96xf32>
    %361 = tpu.concatenate %355, %356, %357, %358, %359, %360 in 1 : vector<8x32xf32>, vector<8x32xf32>, vector<8x32xf32>, vector<8x32xf32>, vector<8x32xf32>, vector<8x96xf32> -> vector<8x256xf32>
    %c8_134 = arith.constant 8 : index
    %c0_135 = arith.constant 0 : index
    %362 = vector.load %arg11[%c8_134, %c0_135] : memref<48x768xf32, #tpu.memory_space<vmem>>, vector<8x256xf32>
    tpu.vector_store %arg11[%c8_134, %c0_135], %361 {strides = array<i32>} : memref<48x768xf32, #tpu.memory_space<vmem>>, vector<8x256xf32>,
    %c16_136 = arith.constant 16 : index
    %c0_137 = arith.constant 0 : index
    %363 = vector.load %arg13[%c16_136, %c0_137] : memref<48x256xf32, #tpu.memory_space<vmem>>, vector<8x256xf32>
    %364 = arith.truncf %315 : vector<8x64xf32> to vector<8x64xbf16>
    %c0_138 = arith.constant 0 : index
    %c0_139 = arith.constant 0 : index
    %365 = vector.load %arg7[%c0_138, %c0_139] : memref<64x256xbf16, #tpu.memory_space<vmem>>, vector<64x256xbf16>
    %cst_140 = arith.constant dense<0.000000e+00> : vector<8x256xf32>
    %366 = tpu.matmul %364, %365, %cst_140 {dimension_numbers = #tpu.dot_dimension_numbers<[1], [0], [0], [1], [0, 0, 1, 1], [], []>} : vector<8x64xbf16>, vector<64x256xbf16>, vector<8x256xf32> -> vector<8x256xf32>
    %367 = arith.addf %363, %366 : vector<8x256xf32>
    %368 = vector.extract_strided_slice %367 {offsets = [0, 0], sizes = [8, 128], strides = [1, 1]} : vector<8x256xf32> to vector<8x128xf32>
    %369 = arith.negf %368 : vector<8x128xf32>
    %370 = math.exp %369 : vector<8x128xf32>
    %cst_141 = arith.constant 1.000000e+00 : f32
    %371 = vector.broadcast %cst_141 : f32 to vector<8x128xf32>
    %372 = arith.addf %371, %370 : vector<8x128xf32>
    %373 = arith.divf %371, %372 : vector<8x128xf32>
    %374 = vector.extract_strided_slice %367 {offsets = [0, 128], sizes = [8, 64], strides = [1, 1]} : vector<8x256xf32> to vector<8x64xf32>
    %375 = arith.negf %374 : vector<8x64xf32>
    %376 = math.exp %375 : vector<8x64xf32>
    %cst_142 = arith.constant 1.000000e+00 : f32
    %377 = vector.broadcast %cst_142 : f32 to vector<8x64xf32>
    %378 = arith.addf %377, %376 : vector<8x64xf32>
    %379 = arith.divf %377, %378 : vector<8x64xf32>
    %380 = vector.extract_strided_slice %367 {offsets = [0, 192], sizes = [8, 64], strides = [1, 1]} : vector<8x256xf32> to vector<8x64xf32>
    %381 = math.tanh %380 : vector<8x64xf32>
    %382 = vector.extract_strided_slice %373 {offsets = [0, 0], sizes = [8, 64], strides = [1, 1]} : vector<8x128xf32> to vector<8x64xf32>
    %383 = arith.mulf %382, %313 : vector<8x64xf32>
    %384 = vector.extract_strided_slice %373 {offsets = [0, 64], sizes = [8, 64], strides = [1, 1]} : vector<8x128xf32> to vector<8x64xf32>
    %385 = arith.mulf %384, %381 : vector<8x64xf32>
    %386 = arith.addf %383, %385 : vector<8x64xf32>
    %387 = math.tanh %386 : vector<8x64xf32>
    %388 = arith.mulf %379, %387 : vector<8x64xf32>
    %389 = arith.truncf %388 : vector<8x64xf32> to vector<8x64xbf16>
    %c0_143 = arith.constant 0 : index
    %c0_144 = arith.constant 0 : index
    %390 = vector.load %arg9[%c0_143, %c0_144] : memref<64x768xbf16, #tpu.memory_space<vmem>>, vector<64x768xbf16>
    %cst_145 = arith.constant dense<0.000000e+00> : vector<8x768xf32>
    %391 = tpu.matmul %389, %390, %cst_145 {dimension_numbers = #tpu.dot_dimension_numbers<[1], [0], [0], [1], [0, 0, 1, 1], [], []>} : vector<8x64xbf16>, vector<64x768xbf16>, vector<8x768xf32> -> vector<8x768xf32>
    %c0_146 = arith.constant 0 : index
    %c0_147 = arith.constant 0 : index
    %392 = vector.load %arg10[%c0_146, %c0_147] : memref<1x768xf32, #tpu.memory_space<vmem>>, vector<1x768xf32>
    %393 = vector.broadcast %392 : vector<1x768xf32> to vector<8x768xf32>
    %394 = arith.addf %391, %393 : vector<8x768xf32>
    %395 = vector.extract_strided_slice %394 {offsets = [0, 512], sizes = [8, 256], strides = [1, 1]} : vector<8x768xf32> to vector<8x256xf32>
    %c16_148 = arith.constant 16 : index
    %c512_149 = arith.constant 512 : index
    %396 = vector.load %arg11[%c16_148, %c512_149] : memref<48x768xf32, #tpu.memory_space<vmem>>, vector<8x256xf32>
    tpu.vector_store %arg11[%c16_148, %c512_149], %395 {strides = array<i32>} : memref<48x768xf32, #tpu.memory_space<vmem>>, vector<8x256xf32>,
    %397 = vector.extract_strided_slice %394 {offsets = [0, 256], sizes = [8, 256], strides = [1, 1]} : vector<8x768xf32> to vector<8x256xf32>
    %398 = math.exp %397 : vector<8x256xf32>
    %cst_150 = arith.constant 1.11803401 : f32
    %399 = vector.broadcast %cst_150 : f32 to vector<8x256xf32>
    %400 = arith.mulf %398, %399 : vector<8x256xf32>
    %c16_151 = arith.constant 16 : index
    %c256_152 = arith.constant 256 : index
    %401 = vector.load %arg11[%c16_151, %c256_152] : memref<48x768xf32, #tpu.memory_space<vmem>>, vector<8x256xf32>
    tpu.vector_store %arg11[%c16_151, %c256_152], %400 {strides = array<i32>} : memref<48x768xf32, #tpu.memory_space<vmem>>, vector<8x256xf32>,
    %402 = vector.extract_strided_slice %394 {offsets = [0, 0], sizes = [8, 32], strides = [1, 1]} : vector<8x768xf32> to vector<8x32xf32>
    %403 = vector.extract_strided_slice %394 {offsets = [0, 32], sizes = [8, 32], strides = [1, 1]} : vector<8x768xf32> to vector<8x32xf32>
    %404 = vector.extract_strided_slice %394 {offsets = [0, 64], sizes = [8, 32], strides = [1, 1]} : vector<8x768xf32> to vector<8x32xf32>
    %405 = vector.extract_strided_slice %394 {offsets = [0, 96], sizes = [8, 32], strides = [1, 1]} : vector<8x768xf32> to vector<8x32xf32>
    %406 = vector.extract_strided_slice %394 {offsets = [0, 128], sizes = [8, 32], strides = [1, 1]} : vector<8x768xf32> to vector<8x32xf32>
    %407 = arith.maximumf %402, %403 : vector<8x32xf32>
    %408 = arith.maximumf %407, %404 : vector<8x32xf32>
    %409 = arith.maximumf %408, %405 : vector<8x32xf32>
    %410 = arith.maximumf %409, %406 : vector<8x32xf32>
    %411 = arith.subf %402, %410 : vector<8x32xf32>
    %412 = math.exp %411 : vector<8x32xf32>
    %413 = arith.subf %403, %410 : vector<8x32xf32>
    %414 = math.exp %413 : vector<8x32xf32>
    %415 = arith.subf %404, %410 : vector<8x32xf32>
    %416 = math.exp %415 : vector<8x32xf32>
    %417 = arith.subf %405, %410 : vector<8x32xf32>
    %418 = math.exp %417 : vector<8x32xf32>
    %419 = arith.subf %406, %410 : vector<8x32xf32>
    %420 = math.exp %419 : vector<8x32xf32>
    %421 = arith.addf %412, %414 : vector<8x32xf32>
    %422 = arith.addf %421, %416 : vector<8x32xf32>
    %423 = arith.addf %422, %418 : vector<8x32xf32>
    %424 = arith.addf %423, %420 : vector<8x32xf32>
    %cst_153 = arith.constant 1.250000e+00 : f32
    %425 = vector.broadcast %cst_153 : f32 to vector<8x32xf32>
    %426 = arith.mulf %424, %425 : vector<8x32xf32>
    %427 = tpu.reciprocal %426 {approx = true} : vector<8x32xf32> -> vector<8x32xf32>
    %428 = arith.mulf %412, %427 : vector<8x32xf32>
    %429 = arith.mulf %414, %427 : vector<8x32xf32>
    %430 = arith.mulf %416, %427 : vector<8x32xf32>
    %431 = arith.mulf %418, %427 : vector<8x32xf32>
    %432 = arith.mulf %420, %427 : vector<8x32xf32>
    %cst_154 = arith.constant 0.000000e+00 : f32
    %433 = vector.broadcast %cst_154 : f32 to vector<8x96xf32>
    %434 = tpu.concatenate %428, %429, %430, %431, %432, %433 in 1 : vector<8x32xf32>, vector<8x32xf32>, vector<8x32xf32>, vector<8x32xf32>, vector<8x32xf32>, vector<8x96xf32> -> vector<8x256xf32>
    %c16_155 = arith.constant 16 : index
    %c0_156 = arith.constant 0 : index
    %435 = vector.load %arg11[%c16_155, %c0_156] : memref<48x768xf32, #tpu.memory_space<vmem>>, vector<8x256xf32>
    tpu.vector_store %arg11[%c16_155, %c0_156], %434 {strides = array<i32>} : memref<48x768xf32, #tpu.memory_space<vmem>>, vector<8x256xf32>,
    %c24_157 = arith.constant 24 : index
    %c0_158 = arith.constant 0 : index
    %436 = vector.load %arg13[%c24_157, %c0_158] : memref<48x256xf32, #tpu.memory_space<vmem>>, vector<8x256xf32>
    %437 = arith.truncf %388 : vector<8x64xf32> to vector<8x64xbf16>
    %c0_159 = arith.constant 0 : index
    %c0_160 = arith.constant 0 : index
    %438 = vector.load %arg7[%c0_159, %c0_160] : memref<64x256xbf16, #tpu.memory_space<vmem>>, vector<64x256xbf16>
    %cst_161 = arith.constant dense<0.000000e+00> : vector<8x256xf32>
    %439 = tpu.matmul %437, %438, %cst_161 {dimension_numbers = #tpu.dot_dimension_numbers<[1], [0], [0], [1], [0, 0, 1, 1], [], []>} : vector<8x64xbf16>, vector<64x256xbf16>, vector<8x256xf32> -> vector<8x256xf32>
    %440 = arith.addf %436, %439 : vector<8x256xf32>
    %441 = vector.extract_strided_slice %440 {offsets = [0, 0], sizes = [8, 128], strides = [1, 1]} : vector<8x256xf32> to vector<8x128xf32>
    %442 = arith.negf %441 : vector<8x128xf32>
    %443 = math.exp %442 : vector<8x128xf32>
    %cst_162 = arith.constant 1.000000e+00 : f32
    %444 = vector.broadcast %cst_162 : f32 to vector<8x128xf32>
    %445 = arith.addf %444, %443 : vector<8x128xf32>
    %446 = arith.divf %444, %445 : vector<8x128xf32>
    %447 = vector.extract_strided_slice %440 {offsets = [0, 128], sizes = [8, 64], strides = [1, 1]} : vector<8x256xf32> to vector<8x64xf32>
    %448 = arith.negf %447 : vector<8x64xf32>
    %449 = math.exp %448 : vector<8x64xf32>
    %cst_163 = arith.constant 1.000000e+00 : f32
    %450 = vector.broadcast %cst_163 : f32 to vector<8x64xf32>
    %451 = arith.addf %450, %449 : vector<8x64xf32>
    %452 = arith.divf %450, %451 : vector<8x64xf32>
    %453 = vector.extract_strided_slice %440 {offsets = [0, 192], sizes = [8, 64], strides = [1, 1]} : vector<8x256xf32> to vector<8x64xf32>
    %454 = math.tanh %453 : vector<8x64xf32>
    %455 = vector.extract_strided_slice %446 {offsets = [0, 0], sizes = [8, 64], strides = [1, 1]} : vector<8x128xf32> to vector<8x64xf32>
    %456 = arith.mulf %455, %386 : vector<8x64xf32>
    %457 = vector.extract_strided_slice %446 {offsets = [0, 64], sizes = [8, 64], strides = [1, 1]} : vector<8x128xf32> to vector<8x64xf32>
    %458 = arith.mulf %457, %454 : vector<8x64xf32>
    %459 = arith.addf %456, %458 : vector<8x64xf32>
    %460 = math.tanh %459 : vector<8x64xf32>
    %461 = arith.mulf %452, %460 : vector<8x64xf32>
    %462 = arith.truncf %461 : vector<8x64xf32> to vector<8x64xbf16>
    %c0_164 = arith.constant 0 : index
    %c0_165 = arith.constant 0 : index
    %463 = vector.load %arg9[%c0_164, %c0_165] : memref<64x768xbf16, #tpu.memory_space<vmem>>, vector<64x768xbf16>
    %cst_166 = arith.constant dense<0.000000e+00> : vector<8x768xf32>
    %464 = tpu.matmul %462, %463, %cst_166 {dimension_numbers = #tpu.dot_dimension_numbers<[1], [0], [0], [1], [0, 0, 1, 1], [], []>} : vector<8x64xbf16>, vector<64x768xbf16>, vector<8x768xf32> -> vector<8x768xf32>
    %c0_167 = arith.constant 0 : index
    %c0_168 = arith.constant 0 : index
    %465 = vector.load %arg10[%c0_167, %c0_168] : memref<1x768xf32, #tpu.memory_space<vmem>>, vector<1x768xf32>
    %466 = vector.broadcast %465 : vector<1x768xf32> to vector<8x768xf32>
    %467 = arith.addf %464, %466 : vector<8x768xf32>
    %468 = vector.extract_strided_slice %467 {offsets = [0, 512], sizes = [8, 256], strides = [1, 1]} : vector<8x768xf32> to vector<8x256xf32>
    %c24_169 = arith.constant 24 : index
    %c512_170 = arith.constant 512 : index
    %469 = vector.load %arg11[%c24_169, %c512_170] : memref<48x768xf32, #tpu.memory_space<vmem>>, vector<8x256xf32>
    tpu.vector_store %arg11[%c24_169, %c512_170], %468 {strides = array<i32>} : memref<48x768xf32, #tpu.memory_space<vmem>>, vector<8x256xf32>,
    %470 = vector.extract_strided_slice %467 {offsets = [0, 256], sizes = [8, 256], strides = [1, 1]} : vector<8x768xf32> to vector<8x256xf32>
    %471 = math.exp %470 : vector<8x256xf32>
    %cst_171 = arith.constant 1.11803401 : f32
    %472 = vector.broadcast %cst_171 : f32 to vector<8x256xf32>
    %473 = arith.mulf %471, %472 : vector<8x256xf32>
    %c24_172 = arith.constant 24 : index
    %c256_173 = arith.constant 256 : index
    %474 = vector.load %arg11[%c24_172, %c256_173] : memref<48x768xf32, #tpu.memory_space<vmem>>, vector<8x256xf32>
    tpu.vector_store %arg11[%c24_172, %c256_173], %473 {strides = array<i32>} : memref<48x768xf32, #tpu.memory_space<vmem>>, vector<8x256xf32>,
    %475 = vector.extract_strided_slice %467 {offsets = [0, 0], sizes = [8, 32], strides = [1, 1]} : vector<8x768xf32> to vector<8x32xf32>
    %476 = vector.extract_strided_slice %467 {offsets = [0, 32], sizes = [8, 32], strides = [1, 1]} : vector<8x768xf32> to vector<8x32xf32>
    %477 = vector.extract_strided_slice %467 {offsets = [0, 64], sizes = [8, 32], strides = [1, 1]} : vector<8x768xf32> to vector<8x32xf32>
    %478 = vector.extract_strided_slice %467 {offsets = [0, 96], sizes = [8, 32], strides = [1, 1]} : vector<8x768xf32> to vector<8x32xf32>
    %479 = vector.extract_strided_slice %467 {offsets = [0, 128], sizes = [8, 32], strides = [1, 1]} : vector<8x768xf32> to vector<8x32xf32>
    %480 = arith.maximumf %475, %476 : vector<8x32xf32>
    %481 = arith.maximumf %480, %477 : vector<8x32xf32>
    %482 = arith.maximumf %481, %478 : vector<8x32xf32>
    %483 = arith.maximumf %482, %479 : vector<8x32xf32>
    %484 = arith.subf %475, %483 : vector<8x32xf32>
    %485 = math.exp %484 : vector<8x32xf32>
    %486 = arith.subf %476, %483 : vector<8x32xf32>
    %487 = math.exp %486 : vector<8x32xf32>
    %488 = arith.subf %477, %483 : vector<8x32xf32>
    %489 = math.exp %488 : vector<8x32xf32>
    %490 = arith.subf %478, %483 : vector<8x32xf32>
    %491 = math.exp %490 : vector<8x32xf32>
    %492 = arith.subf %479, %483 : vector<8x32xf32>
    %493 = math.exp %492 : vector<8x32xf32>
    %494 = arith.addf %485, %487 : vector<8x32xf32>
    %495 = arith.addf %494, %489 : vector<8x32xf32>
    %496 = arith.addf %495, %491 : vector<8x32xf32>
    %497 = arith.addf %496, %493 : vector<8x32xf32>
    %cst_174 = arith.constant 1.250000e+00 : f32
    %498 = vector.broadcast %cst_174 : f32 to vector<8x32xf32>
    %499 = arith.mulf %497, %498 : vector<8x32xf32>
    %500 = tpu.reciprocal %499 {approx = true} : vector<8x32xf32> -> vector<8x32xf32>
    %501 = arith.mulf %485, %500 : vector<8x32xf32>
    %502 = arith.mulf %487, %500 : vector<8x32xf32>
    %503 = arith.mulf %489, %500 : vector<8x32xf32>
    %504 = arith.mulf %491, %500 : vector<8x32xf32>
    %505 = arith.mulf %493, %500 : vector<8x32xf32>
    %cst_175 = arith.constant 0.000000e+00 : f32
    %506 = vector.broadcast %cst_175 : f32 to vector<8x96xf32>
    %507 = tpu.concatenate %501, %502, %503, %504, %505, %506 in 1 : vector<8x32xf32>, vector<8x32xf32>, vector<8x32xf32>, vector<8x32xf32>, vector<8x32xf32>, vector<8x96xf32> -> vector<8x256xf32>
    %c24_176 = arith.constant 24 : index
    %c0_177 = arith.constant 0 : index
    %508 = vector.load %arg11[%c24_176, %c0_177] : memref<48x768xf32, #tpu.memory_space<vmem>>, vector<8x256xf32>
    tpu.vector_store %arg11[%c24_176, %c0_177], %507 {strides = array<i32>} : memref<48x768xf32, #tpu.memory_space<vmem>>, vector<8x256xf32>,
    %c32_178 = arith.constant 32 : index
    %c0_179 = arith.constant 0 : index
    %509 = vector.load %arg13[%c32_178, %c0_179] : memref<48x256xf32, #tpu.memory_space<vmem>>, vector<8x256xf32>
    %510 = arith.truncf %461 : vector<8x64xf32> to vector<8x64xbf16>
    %c0_180 = arith.constant 0 : index
    %c0_181 = arith.constant 0 : index
    %511 = vector.load %arg7[%c0_180, %c0_181] : memref<64x256xbf16, #tpu.memory_space<vmem>>, vector<64x256xbf16>
    %cst_182 = arith.constant dense<0.000000e+00> : vector<8x256xf32>
    %512 = tpu.matmul %510, %511, %cst_182 {dimension_numbers = #tpu.dot_dimension_numbers<[1], [0], [0], [1], [0, 0, 1, 1], [], []>} : vector<8x64xbf16>, vector<64x256xbf16>, vector<8x256xf32> -> vector<8x256xf32>
    %513 = arith.addf %509, %512 : vector<8x256xf32>
    %514 = vector.extract_strided_slice %513 {offsets = [0, 0], sizes = [8, 128], strides = [1, 1]} : vector<8x256xf32> to vector<8x128xf32>
    %515 = arith.negf %514 : vector<8x128xf32>
    %516 = math.exp %515 : vector<8x128xf32>
    %cst_183 = arith.constant 1.000000e+00 : f32
    %517 = vector.broadcast %cst_183 : f32 to vector<8x128xf32>
    %518 = arith.addf %517, %516 : vector<8x128xf32>
    %519 = arith.divf %517, %518 : vector<8x128xf32>
    %520 = vector.extract_strided_slice %513 {offsets = [0, 128], sizes = [8, 64], strides = [1, 1]} : vector<8x256xf32> to vector<8x64xf32>
    %521 = arith.negf %520 : vector<8x64xf32>
    %522 = math.exp %521 : vector<8x64xf32>
    %cst_184 = arith.constant 1.000000e+00 : f32
    %523 = vector.broadcast %cst_184 : f32 to vector<8x64xf32>
    %524 = arith.addf %523, %522 : vector<8x64xf32>
    %525 = arith.divf %523, %524 : vector<8x64xf32>
    %526 = vector.extract_strided_slice %513 {offsets = [0, 192], sizes = [8, 64], strides = [1, 1]} : vector<8x256xf32> to vector<8x64xf32>
    %527 = math.tanh %526 : vector<8x64xf32>
    %528 = vector.extract_strided_slice %519 {offsets = [0, 0], sizes = [8, 64], strides = [1, 1]} : vector<8x128xf32> to vector<8x64xf32>
    %529 = arith.mulf %528, %459 : vector<8x64xf32>
    %530 = vector.extract_strided_slice %519 {offsets = [0, 64], sizes = [8, 64], strides = [1, 1]} : vector<8x128xf32> to vector<8x64xf32>
    %531 = arith.mulf %530, %527 : vector<8x64xf32>
    %532 = arith.addf %529, %531 : vector<8x64xf32>
    %533 = math.tanh %532 : vector<8x64xf32>
    %534 = arith.mulf %525, %533 : vector<8x64xf32>
    %535 = arith.truncf %534 : vector<8x64xf32> to vector<8x64xbf16>
    %c0_185 = arith.constant 0 : index
    %c0_186 = arith.constant 0 : index
    %536 = vector.load %arg9[%c0_185, %c0_186] : memref<64x768xbf16, #tpu.memory_space<vmem>>, vector<64x768xbf16>
    %cst_187 = arith.constant dense<0.000000e+00> : vector<8x768xf32>
    %537 = tpu.matmul %535, %536, %cst_187 {dimension_numbers = #tpu.dot_dimension_numbers<[1], [0], [0], [1], [0, 0, 1, 1], [], []>} : vector<8x64xbf16>, vector<64x768xbf16>, vector<8x768xf32> -> vector<8x768xf32>
    %c0_188 = arith.constant 0 : index
    %c0_189 = arith.constant 0 : index
    %538 = vector.load %arg10[%c0_188, %c0_189] : memref<1x768xf32, #tpu.memory_space<vmem>>, vector<1x768xf32>
    %539 = vector.broadcast %538 : vector<1x768xf32> to vector<8x768xf32>
    %540 = arith.addf %537, %539 : vector<8x768xf32>
    %541 = vector.extract_strided_slice %540 {offsets = [0, 512], sizes = [8, 256], strides = [1, 1]} : vector<8x768xf32> to vector<8x256xf32>
    %c32_190 = arith.constant 32 : index
    %c512_191 = arith.constant 512 : index
    %542 = vector.load %arg11[%c32_190, %c512_191] : memref<48x768xf32, #tpu.memory_space<vmem>>, vector<8x256xf32>
    tpu.vector_store %arg11[%c32_190, %c512_191], %541 {strides = array<i32>} : memref<48x768xf32, #tpu.memory_space<vmem>>, vector<8x256xf32>,
    %543 = vector.extract_strided_slice %540 {offsets = [0, 256], sizes = [8, 256], strides = [1, 1]} : vector<8x768xf32> to vector<8x256xf32>
    %544 = math.exp %543 : vector<8x256xf32>
    %cst_192 = arith.constant 1.11803401 : f32
    %545 = vector.broadcast %cst_192 : f32 to vector<8x256xf32>
    %546 = arith.mulf %544, %545 : vector<8x256xf32>
    %c32_193 = arith.constant 32 : index
    %c256_194 = arith.constant 256 : index
    %547 = vector.load %arg11[%c32_193, %c256_194] : memref<48x768xf32, #tpu.memory_space<vmem>>, vector<8x256xf32>
    tpu.vector_store %arg11[%c32_193, %c256_194], %546 {strides = array<i32>} : memref<48x768xf32, #tpu.memory_space<vmem>>, vector<8x256xf32>,
    %548 = vector.extract_strided_slice %540 {offsets = [0, 0], sizes = [8, 32], strides = [1, 1]} : vector<8x768xf32> to vector<8x32xf32>
    %549 = vector.extract_strided_slice %540 {offsets = [0, 32], sizes = [8, 32], strides = [1, 1]} : vector<8x768xf32> to vector<8x32xf32>
    %550 = vector.extract_strided_slice %540 {offsets = [0, 64], sizes = [8, 32], strides = [1, 1]} : vector<8x768xf32> to vector<8x32xf32>
    %551 = vector.extract_strided_slice %540 {offsets = [0, 96], sizes = [8, 32], strides = [1, 1]} : vector<8x768xf32> to vector<8x32xf32>
    %552 = vector.extract_strided_slice %540 {offsets = [0, 128], sizes = [8, 32], strides = [1, 1]} : vector<8x768xf32> to vector<8x32xf32>
    %553 = arith.maximumf %548, %549 : vector<8x32xf32>
    %554 = arith.maximumf %553, %550 : vector<8x32xf32>
    %555 = arith.maximumf %554, %551 : vector<8x32xf32>
    %556 = arith.maximumf %555, %552 : vector<8x32xf32>
    %557 = arith.subf %548, %556 : vector<8x32xf32>
    %558 = math.exp %557 : vector<8x32xf32>
    %559 = arith.subf %549, %556 : vector<8x32xf32>
    %560 = math.exp %559 : vector<8x32xf32>
    %561 = arith.subf %550, %556 : vector<8x32xf32>
    %562 = math.exp %561 : vector<8x32xf32>
    %563 = arith.subf %551, %556 : vector<8x32xf32>
    %564 = math.exp %563 : vector<8x32xf32>
    %565 = arith.subf %552, %556 : vector<8x32xf32>
    %566 = math.exp %565 : vector<8x32xf32>
    %567 = arith.addf %558, %560 : vector<8x32xf32>
    %568 = arith.addf %567, %562 : vector<8x32xf32>
    %569 = arith.addf %568, %564 : vector<8x32xf32>
    %570 = arith.addf %569, %566 : vector<8x32xf32>
    %cst_195 = arith.constant 1.250000e+00 : f32
    %571 = vector.broadcast %cst_195 : f32 to vector<8x32xf32>
    %572 = arith.mulf %570, %571 : vector<8x32xf32>
    %573 = tpu.reciprocal %572 {approx = true} : vector<8x32xf32> -> vector<8x32xf32>
    %574 = arith.mulf %558, %573 : vector<8x32xf32>
    %575 = arith.mulf %560, %573 : vector<8x32xf32>
    %576 = arith.mulf %562, %573 : vector<8x32xf32>
    %577 = arith.mulf %564, %573 : vector<8x32xf32>
    %578 = arith.mulf %566, %573 : vector<8x32xf32>
    %cst_196 = arith.constant 0.000000e+00 : f32
    %579 = vector.broadcast %cst_196 : f32 to vector<8x96xf32>
    %580 = tpu.concatenate %574, %575, %576, %577, %578, %579 in 1 : vector<8x32xf32>, vector<8x32xf32>, vector<8x32xf32>, vector<8x32xf32>, vector<8x32xf32>, vector<8x96xf32> -> vector<8x256xf32>
    %c32_197 = arith.constant 32 : index
    %c0_198 = arith.constant 0 : index
    %581 = vector.load %arg11[%c32_197, %c0_198] : memref<48x768xf32, #tpu.memory_space<vmem>>, vector<8x256xf32>
    tpu.vector_store %arg11[%c32_197, %c0_198], %580 {strides = array<i32>} : memref<48x768xf32, #tpu.memory_space<vmem>>, vector<8x256xf32>,
    %c40_199 = arith.constant 40 : index
    %c0_200 = arith.constant 0 : index
    %582 = vector.load %arg13[%c40_199, %c0_200] : memref<48x256xf32, #tpu.memory_space<vmem>>, vector<8x256xf32>
    %583 = arith.truncf %534 : vector<8x64xf32> to vector<8x64xbf16>
    %c0_201 = arith.constant 0 : index
    %c0_202 = arith.constant 0 : index
    %584 = vector.load %arg7[%c0_201, %c0_202] : memref<64x256xbf16, #tpu.memory_space<vmem>>, vector<64x256xbf16>
    %cst_203 = arith.constant dense<0.000000e+00> : vector<8x256xf32>
    %585 = tpu.matmul %583, %584, %cst_203 {dimension_numbers = #tpu.dot_dimension_numbers<[1], [0], [0], [1], [0, 0, 1, 1], [], []>} : vector<8x64xbf16>, vector<64x256xbf16>, vector<8x256xf32> -> vector<8x256xf32>
    %586 = arith.addf %582, %585 : vector<8x256xf32>
    %587 = vector.extract_strided_slice %586 {offsets = [0, 0], sizes = [8, 128], strides = [1, 1]} : vector<8x256xf32> to vector<8x128xf32>
    %588 = arith.negf %587 : vector<8x128xf32>
    %589 = math.exp %588 : vector<8x128xf32>
    %cst_204 = arith.constant 1.000000e+00 : f32
    %590 = vector.broadcast %cst_204 : f32 to vector<8x128xf32>
    %591 = arith.addf %590, %589 : vector<8x128xf32>
    %592 = arith.divf %590, %591 : vector<8x128xf32>
    %593 = vector.extract_strided_slice %586 {offsets = [0, 128], sizes = [8, 64], strides = [1, 1]} : vector<8x256xf32> to vector<8x64xf32>
    %594 = arith.negf %593 : vector<8x64xf32>
    %595 = math.exp %594 : vector<8x64xf32>
    %cst_205 = arith.constant 1.000000e+00 : f32
    %596 = vector.broadcast %cst_205 : f32 to vector<8x64xf32>
    %597 = arith.addf %596, %595 : vector<8x64xf32>
    %598 = arith.divf %596, %597 : vector<8x64xf32>
    %599 = vector.extract_strided_slice %586 {offsets = [0, 192], sizes = [8, 64], strides = [1, 1]} : vector<8x256xf32> to vector<8x64xf32>
    %600 = math.tanh %599 : vector<8x64xf32>
    %601 = vector.extract_strided_slice %592 {offsets = [0, 0], sizes = [8, 64], strides = [1, 1]} : vector<8x128xf32> to vector<8x64xf32>
    %602 = arith.mulf %601, %532 : vector<8x64xf32>
    %603 = vector.extract_strided_slice %592 {offsets = [0, 64], sizes = [8, 64], strides = [1, 1]} : vector<8x128xf32> to vector<8x64xf32>
    %604 = arith.mulf %603, %600 : vector<8x64xf32>
    %605 = arith.addf %602, %604 : vector<8x64xf32>
    %606 = math.tanh %605 : vector<8x64xf32>
    %607 = arith.mulf %598, %606 : vector<8x64xf32>
    %608 = arith.truncf %607 : vector<8x64xf32> to vector<8x64xbf16>
    %c0_206 = arith.constant 0 : index
    %c0_207 = arith.constant 0 : index
    %609 = vector.load %arg9[%c0_206, %c0_207] : memref<64x768xbf16, #tpu.memory_space<vmem>>, vector<64x768xbf16>
    %cst_208 = arith.constant dense<0.000000e+00> : vector<8x768xf32>
    %610 = tpu.matmul %608, %609, %cst_208 {dimension_numbers = #tpu.dot_dimension_numbers<[1], [0], [0], [1], [0, 0, 1, 1], [], []>} : vector<8x64xbf16>, vector<64x768xbf16>, vector<8x768xf32> -> vector<8x768xf32>
    %c0_209 = arith.constant 0 : index
    %c0_210 = arith.constant 0 : index
    %611 = vector.load %arg10[%c0_209, %c0_210] : memref<1x768xf32, #tpu.memory_space<vmem>>, vector<1x768xf32>
    %612 = vector.broadcast %611 : vector<1x768xf32> to vector<8x768xf32>
    %613 = arith.addf %610, %612 : vector<8x768xf32>
    %614 = vector.extract_strided_slice %613 {offsets = [0, 512], sizes = [8, 256], strides = [1, 1]} : vector<8x768xf32> to vector<8x256xf32>
    %c40_211 = arith.constant 40 : index
    %c512_212 = arith.constant 512 : index
    %615 = vector.load %arg11[%c40_211, %c512_212] : memref<48x768xf32, #tpu.memory_space<vmem>>, vector<8x256xf32>
    tpu.vector_store %arg11[%c40_211, %c512_212], %614 {strides = array<i32>} : memref<48x768xf32, #tpu.memory_space<vmem>>, vector<8x256xf32>,
    %616 = vector.extract_strided_slice %613 {offsets = [0, 256], sizes = [8, 256], strides = [1, 1]} : vector<8x768xf32> to vector<8x256xf32>
    %617 = math.exp %616 : vector<8x256xf32>
    %cst_213 = arith.constant 1.11803401 : f32
    %618 = vector.broadcast %cst_213 : f32 to vector<8x256xf32>
    %619 = arith.mulf %617, %618 : vector<8x256xf32>
    %c40_214 = arith.constant 40 : index
    %c256_215 = arith.constant 256 : index
    %620 = vector.load %arg11[%c40_214, %c256_215] : memref<48x768xf32, #tpu.memory_space<vmem>>, vector<8x256xf32>
    tpu.vector_store %arg11[%c40_214, %c256_215], %619 {strides = array<i32>} : memref<48x768xf32, #tpu.memory_space<vmem>>, vector<8x256xf32>,
    %621 = vector.extract_strided_slice %613 {offsets = [0, 0], sizes = [8, 32], strides = [1, 1]} : vector<8x768xf32> to vector<8x32xf32>
    %622 = vector.extract_strided_slice %613 {offsets = [0, 32], sizes = [8, 32], strides = [1, 1]} : vector<8x768xf32> to vector<8x32xf32>
    %623 = vector.extract_strided_slice %613 {offsets = [0, 64], sizes = [8, 32], strides = [1, 1]} : vector<8x768xf32> to vector<8x32xf32>
    %624 = vector.extract_strided_slice %613 {offsets = [0, 96], sizes = [8, 32], strides = [1, 1]} : vector<8x768xf32> to vector<8x32xf32>
    %625 = vector.extract_strided_slice %613 {offsets = [0, 128], sizes = [8, 32], strides = [1, 1]} : vector<8x768xf32> to vector<8x32xf32>
    %626 = arith.maximumf %621, %622 : vector<8x32xf32>
    %627 = arith.maximumf %626, %623 : vector<8x32xf32>
    %628 = arith.maximumf %627, %624 : vector<8x32xf32>
    %629 = arith.maximumf %628, %625 : vector<8x32xf32>
    %630 = arith.subf %621, %629 : vector<8x32xf32>
    %631 = math.exp %630 : vector<8x32xf32>
    %632 = arith.subf %622, %629 : vector<8x32xf32>
    %633 = math.exp %632 : vector<8x32xf32>
    %634 = arith.subf %623, %629 : vector<8x32xf32>
    %635 = math.exp %634 : vector<8x32xf32>
    %636 = arith.subf %624, %629 : vector<8x32xf32>
    %637 = math.exp %636 : vector<8x32xf32>
    %638 = arith.subf %625, %629 : vector<8x32xf32>
    %639 = math.exp %638 : vector<8x32xf32>
    %640 = arith.addf %631, %633 : vector<8x32xf32>
    %641 = arith.addf %640, %635 : vector<8x32xf32>
    %642 = arith.addf %641, %637 : vector<8x32xf32>
    %643 = arith.addf %642, %639 : vector<8x32xf32>
    %cst_216 = arith.constant 1.250000e+00 : f32
    %644 = vector.broadcast %cst_216 : f32 to vector<8x32xf32>
    %645 = arith.mulf %643, %644 : vector<8x32xf32>
    %646 = tpu.reciprocal %645 {approx = true} : vector<8x32xf32> -> vector<8x32xf32>
    %647 = arith.mulf %631, %646 : vector<8x32xf32>
    %648 = arith.mulf %633, %646 : vector<8x32xf32>
    %649 = arith.mulf %635, %646 : vector<8x32xf32>
    %650 = arith.mulf %637, %646 : vector<8x32xf32>
    %651 = arith.mulf %639, %646 : vector<8x32xf32>
    %cst_217 = arith.constant 0.000000e+00 : f32
    %652 = vector.broadcast %cst_217 : f32 to vector<8x96xf32>
    %653 = tpu.concatenate %647, %648, %649, %650, %651, %652 in 1 : vector<8x32xf32>, vector<8x32xf32>, vector<8x32xf32>, vector<8x32xf32>, vector<8x32xf32>, vector<8x96xf32> -> vector<8x256xf32>
    %c40_218 = arith.constant 40 : index
    %c0_219 = arith.constant 0 : index
    %654 = vector.load %arg11[%c40_218, %c0_219] : memref<48x768xf32, #tpu.memory_space<vmem>>, vector<8x256xf32>
    tpu.vector_store %arg11[%c40_218, %c0_219], %653 {strides = array<i32>} : memref<48x768xf32, #tpu.memory_space<vmem>>, vector<8x256xf32>,
    return
  }
}

</mosaic_0001>

<llo_original>
// kernel: lstm_mdn_forward.1
$region0: #{lstm_mdn_forward.1}
  #allocation0 [shape = 'u32[]', space=smem, size = 0x4, offset = 0x4, fixed_abs, tag = 'smem constant byte address 0x4 - core index']
  #allocation1 [shape = 'u32[144,128]{1,0:T(1,128)}', space=vmem, size = 0x12000, scoped, tag = 'internal scratch']
  #allocation2 [shape = 'f32[48,256]{1,0:T(8,128)}', space=vmem, size = 0xc000, scoped, tag = 'scratch operand']
  #allocation3 [shape = 'f32[48,256]{1,0:T(8,128)}', space=vmem, size = 0xc000, scoped, tag = 'scratch operand']
  %s0 = inlined_call_operand.vmem [shape: bf16[48,128], index: 0, kind: input, shape index: {}]
  %s1 = inlined_call_operand.vmem [shape: bf16[128,64], index: 1, kind: input, shape index: {}]
  %s2 = inlined_call_operand.vmem [shape: f32[1,64], index: 2, kind: input, shape index: {}]
  %s3 = inlined_call_operand.vmem [shape: bf16[64,256], index: 3, kind: input, shape index: {}]
  %s4 = inlined_call_operand.vmem [shape: bf16[64,256], index: 4, kind: input, shape index: {}]
  %s5 = inlined_call_operand.vmem [shape: f32[1,256], index: 5, kind: input, shape index: {}]
  %s6 = inlined_call_operand.vmem [shape: bf16[64,256], index: 6, kind: input, shape index: {}]
  %s7 = inlined_call_operand.vmem [shape: bf16[64,256], index: 7, kind: input, shape index: {}]
  %s8 = inlined_call_operand.vmem [shape: f32[1,256], index: 8, kind: input, shape index: {}]
  %s9 = inlined_call_operand.vmem [shape: bf16[64,768], index: 9, kind: input, shape index: {}]
  %s10 = inlined_call_operand.vmem [shape: f32[1,768], index: 10, kind: input, shape index: {}]
  %s11 = inlined_call_operand.vmem [shape: f32[48,768], index: 11, kind: output, shape index: {}]
  %s12 = sld [smem:[#allocation0]]
  $region54: #{lstm_mdn_forward.1} parent=0
    _
  %s14 = ssub.s32 1, %s12
  %s15 = scalar_select 0, %s14, %s12
  // Predicated region
  $region2: #{lstm_mdn_forward.1} parent=0 // pred_check
    _
  $region3: #{lstm_mdn_forward.1} parent=0 // pred_check_branch
    %17 = sbr.rel (0) target = $region5
  $region4: #{lstm_mdn_forward.1} parent=0 // pred_region
    _
  $region5: #{lstm_mdn_forward.1} parent=0 // pred_fallthru
    _
  // Predicated region
  $region6: #{lstm_mdn_forward.1} parent=0 // pred_check
    _
  $region7: #{lstm_mdn_forward.1} parent=0 // pred_check_branch
    %19 = sbr.rel (0) target = $region9
  $region8: #{lstm_mdn_forward.1} parent=0 // pred_region
    _
  $region9: #{lstm_mdn_forward.1} parent=0 // pred_fallthru
    _
  // Predicated region
  $region10: #{lstm_mdn_forward.1} parent=0 // pred_check
    _
  $region11: #{lstm_mdn_forward.1} parent=0 // pred_check_branch
    %21 = sbr.rel (0) target = $region13
  $region12: #{lstm_mdn_forward.1} parent=0 // pred_region
    _
  $region13: #{lstm_mdn_forward.1} parent=0 // pred_fallthru
    _
  // Predicated region
  $region14: #{lstm_mdn_forward.1} parent=0 // pred_check
    _
  $region15: #{lstm_mdn_forward.1} parent=0 // pred_check_branch
    %23 = sbr.rel (0) target = $region17
  $region16: #{lstm_mdn_forward.1} parent=0 // pred_region
    _
  $region17: #{lstm_mdn_forward.1} parent=0 // pred_fallthru
    _
  // Predicated region
  $region18: #{lstm_mdn_forward.1} parent=0 // pred_check
    _
  $region19: #{lstm_mdn_forward.1} parent=0 // pred_check_branch
    %25 = sbr.rel (0) target = $region21
  $region20: #{lstm_mdn_forward.1} parent=0 // pred_region
    _
  $region21: #{lstm_mdn_forward.1} parent=0 // pred_fallthru
    _
  // Predicated region
  $region22: #{lstm_mdn_forward.1} parent=0 // pred_check
    _
  $region23: #{lstm_mdn_forward.1} parent=0 // pred_check_branch
    %27 = sbr.rel (0) target = $region25
  $region24: #{lstm_mdn_forward.1} parent=0 // pred_region
    _
  $region25: #{lstm_mdn_forward.1} parent=0 // pred_fallthru
    _
  // Predicated region
  $region26: #{lstm_mdn_forward.1} parent=0 // pred_check
    _
  $region27: #{lstm_mdn_forward.1} parent=0 // pred_check_branch
    %29 = sbr.rel (0) target = $region29
  $region28: #{lstm_mdn_forward.1} parent=0 // pred_region
    _
  $region29: #{lstm_mdn_forward.1} parent=0 // pred_fallthru
    _
  // Predicated region
  $region30: #{lstm_mdn_forward.1} parent=0 // pred_check
    _
  $region31: #{lstm_mdn_forward.1} parent=0 // pred_check_branch
    %31 = sbr.rel (0) target = $region33
  $region32: #{lstm_mdn_forward.1} parent=0 // pred_region
    _
  $region33: #{lstm_mdn_forward.1} parent=0 // pred_fallthru
    _
  // Predicated region
  $region34: #{lstm_mdn_forward.1} parent=0 // pred_check
    _
  $region35: #{lstm_mdn_forward.1} parent=0 // pred_check_branch
    %33 = sbr.rel (0) target = $region37
  $region36: #{lstm_mdn_forward.1} parent=0 // pred_region
    _
  $region37: #{lstm_mdn_forward.1} parent=0 // pred_fallthru
    _
  // Predicated region
  $region38: #{lstm_mdn_forward.1} parent=0 // pred_check
    _
  $region39: #{lstm_mdn_forward.1} parent=0 // pred_check_branch
    %35 = sbr.rel (0) target = $region41
  $region40: #{lstm_mdn_forward.1} parent=0 // pred_region
    _
  $region41: #{lstm_mdn_forward.1} parent=0 // pred_fallthru
    _
  // Predicated region
  $region42: #{lstm_mdn_forward.1} parent=0 // pred_check
    _
  $region43: #{lstm_mdn_forward.1} parent=0 // pred_check_branch
    %37 = sbr.rel (0) target = $region45
  $region44: #{lstm_mdn_forward.1} parent=0 // pred_region
    _
  $region45: #{lstm_mdn_forward.1} parent=0 // pred_fallthru
    _
  %v39 = vld [vmem:[%s0] sm:$0xf]
  %v40 = vld [vmem:[%s0 + $0x4] sm:$0xf]
  %v41 = vld [vmem:[%s0 + $0x8] sm:$0xf]
  %v42 = vld [vmem:[%s0 + $0xc] sm:$0xf]
  %v43 = vld [vmem:[%s0 + $0x10] sm:$0xf]
  %v44 = vld [vmem:[%s0 + $0x14] sm:$0xf]
  %v45 = vld [vmem:[%s1] sm:$0xf]
  %v46 = vld [vmem:[%s1 + $0x4] sm:$0xf]
  %v47 = vld [vmem:[%s1 + $0x8] sm:$0xf]
  %v48 = vld [vmem:[%s1 + $0xc] sm:$0xf]
  %v49 = vld [vmem:[%s1 + $0x10] sm:$0xf]
  %v50 = vld [vmem:[%s1 + $0x14] sm:$0xf]
  %v51 = vld [vmem:[%s1 + $0x18] sm:$0xf]
  %v52 = vld [vmem:[%s1 + $0x1c] sm:$0xf]
  %v53 = vld [vmem:[%s1 + $0x20] sm:$0xf]
  %v54 = vld [vmem:[%s1 + $0x24] sm:$0xf]
  %v55 = vld [vmem:[%s1 + $0x28] sm:$0xf]
  %v56 = vld [vmem:[%s1 + $0x2c] sm:$0xf]
  %v57 = vld [vmem:[%s1 + $0x30] sm:$0xf]
  %v58 = vld [vmem:[%s1 + $0x34] sm:$0xf]
  %v59 = vld [vmem:[%s1 + $0x38] sm:$0xf]
  %v60 = vld [vmem:[%s1 + $0x3c] sm:$0xf]
  %v61 = vld [vmem:[%s2] sm:$0x1]
  %v63 = vlaneseq
  %v64 = vshrl.u32 %v63, 7
  %v65 = vsub.s32 0, %v64
  %v66 = vrot.slane %v61, %v65
  %v74 = vunpack.c.l.b16 %v39
  %v75 = vunpack.c.l.b16 %v40
  %v76 = vunpack.c.l.b16 %v41
  %v77 = vunpack.c.l.b16 %v42
  %v78 = vunpack.c.l.b16 %v43
  %v79 = vunpack.c.l.b16 %v44
  %v80 = vpack.c.b16 %v75, %v74
  %v81 = vpack.c.b16 %v77, %v76
  %v82 = vpack.c.b16 %v79, %v78
  %v102 = vunpack.c.l.b16 %v45
  %v103 = vunpack.c.l.b16 %v46
  %v104 = vunpack.c.l.b16 %v47
  %v105 = vunpack.c.l.b16 %v48
  %v106 = vunpack.c.l.b16 %v49
  %v107 = vunpack.c.l.b16 %v50
  %v108 = vunpack.c.l.b16 %v51
  %v109 = vunpack.c.l.b16 %v52
  %v110 = vunpack.c.l.b16 %v53
  %v111 = vunpack.c.l.b16 %v54
  %v112 = vunpack.c.l.b16 %v55
  %v113 = vunpack.c.l.b16 %v56
  %v114 = vunpack.c.l.b16 %v57
  %v115 = vunpack.c.l.b16 %v58
  %v116 = vunpack.c.l.b16 %v59
  %v117 = vunpack.c.l.b16 %v60
  %v118 = vpack.c.b16 %v103, %v102
  %v119 = vpack.c.b16 %v105, %v104
  %v120 = vpack.c.b16 %v107, %v106
  %v121 = vpack.c.b16 %v109, %v108
  %v122 = vpack.c.b16 %v111, %v110
  %v123 = vpack.c.b16 %v113, %v112
  %v124 = vpack.c.b16 %v115, %v114
  %v125 = vpack.c.b16 %v117, %v116
  %134 = vmatprep.subr.bf16.mxu0 0
  %135 = vmatpush1.bf16.msra.mxu0 %v118
  %136 = vmatprep.subr.bf16.mxu0 0
  %137 = vmatpush1.bf16.msra.mxu0 %v119
  %138 = vmatprep.subr.bf16.mxu0 0
  %139 = vmatpush1.bf16.msra.mxu0 %v120
  %140 = vmatprep.subr.bf16.mxu0 0
  %141 = vmatpush1.bf16.msra.mxu0 %v121
  %142 = vmatprep.subr.bf16.mxu0 0
  %143 = vmatpush1.bf16.msra.mxu0 %v122
  %144 = vmatprep.subr.bf16.mxu0 0
  %145 = vmatpush1.bf16.msra.mxu0 %v123
  %146 = vmatprep.subr.bf16.mxu0 0
  %147 = vmatpush1.bf16.msra.mxu0 %v124
  %148 = vmatprep.subr.bf16.mxu0 0
  %149 = vmatpush1.bf16.msra.mxu0 %v125
  %150 = vmatprep.subr.bf16.mxu0 0
  %151 = vmatpush1.bf16.msra.mxu0 0
  %152 = vmatprep.subr.bf16.mxu0 0
  %153 = vmatpush1.bf16.msra.mxu0 0
  %154 = vmatprep.subr.bf16.mxu0 0
  %155 = vmatpush1.bf16.msra.mxu0 0
  %156 = vmatprep.subr.bf16.mxu0 0
  %157 = vmatpush1.bf16.msra.mxu0 0
  %158 = vmatprep.subr.bf16.mxu0 0
  %159 = vmatpush1.bf16.msra.mxu0 0
  %160 = vmatprep.subr.bf16.mxu0 0
  %161 = vmatpush1.bf16.msra.mxu0 0
  %162 = vmatprep.subr.bf16.mxu0 0
  %163 = vmatpush1.bf16.msra.mxu0 0
  %164 = vmatprep.subr.bf16.mxu0 0
  %165 = vmatpush1.bf16.msra.mxu0 0
  %166 = vmatprep.mubr.bf16.mxu0 0
  %167 = vmatmul.mubr.bf16.gmra.mrb[0].mxu0 %v80
  %v168 = vpop.f32.mrb[0].mxu0
  %v169 = vadd.f32 %v66, %v168
  %v170 = vpop.f32.mrb[0].mxu0
  %v171 = vpop.f32.mrb[0].mxu0
  %v172 = vadd.f32 %v66, %v171
  %v173 = vpop.f32.mrb[0].mxu0
  %174 = vmatprep.mubr.bf16.mxu0 0
  %175 = vmatmul.mubr.bf16.gmra.mrb[0].mxu0 %v81
  %v176 = vpop.f32.mrb[0].mxu0
  %v177 = vadd.f32 %v66, %v176
  %v178 = vpop.f32.mrb[0].mxu0
  %v179 = vpop.f32.mrb[0].mxu0
  %v180 = vadd.f32 %v66, %v179
  %v181 = vpop.f32.mrb[0].mxu0
  %182 = vmatprep.mubr.bf16.mxu0 0
  %183 = vmatmul.mubr.bf16.gmra.mrb[0].mxu0 %v82
  %v184 = vpop.f32.mrb[0].mxu0
  %v185 = vadd.f32 %v66, %v184
  %v186 = vpop.f32.mrb[0].mxu0
  %v187 = vpop.f32.mrb[0].mxu0
  %v188 = vadd.f32 %v66, %v187
  %v189 = vpop.f32.mrb[0].mxu0
  %190 = vdwg.mxu0
  %v191 = vmax.f32 %v169, 0.0
  %v192 = vmax.f32 %v172, 0.0
  %v193 = vmax.f32 %v177, 0.0
  %v194 = vmax.f32 %v180, 0.0
  %v195 = vmax.f32 %v185, 0.0
  %v196 = vmax.f32 %v188, 0.0
  %v197 = vpack.c.bf16 %v192, %v191
  %v198 = vpack.c.bf16 %v194, %v193
  %v199 = vpack.c.bf16 %v196, %v195
  %v200 = vld [vmem:[%s3] sm:$0xff]
  %v201 = vld [vmem:[%s3 + $0x8] sm:$0xff]
  %v202 = vld [vmem:[%s3 + $0x10] sm:$0xff]
  %v203 = vld [vmem:[%s3 + $0x18] sm:$0xff]
  %v204 = vld [vmem:[%s3 + $0x20] sm:$0xff]
  %v205 = vld [vmem:[%s3 + $0x28] sm:$0xff]
  %v206 = vld [vmem:[%s3 + $0x30] sm:$0xff]
  %v207 = vld [vmem:[%s3 + $0x38] sm:$0xff]
  %v208 = vld [vmem:[%s5] sm:$0x3]
  %v210 = vlaneseq
  %v211 = vshrl.u32 %v210, 7
  %v212 = vsub.s32 0, %v211
  %v213 = vrot.slane %v208, %v212
  %v214 = vlaneseq
  %v215 = vshrl.u32 %v214, 7
  %v216 = vsub.s32 1, %v215
  %v217 = vrot.slane %v208, %v216
  %v228 = vunpack.c.l.b16 %v200
  %v229 = vunpack.c.h.b16 %v200
  %v230 = vunpack.c.l.b16 %v201
  %v231 = vunpack.c.h.b16 %v201
  %v232 = vunpack.c.l.b16 %v202
  %v233 = vunpack.c.h.b16 %v202
  %v234 = vunpack.c.l.b16 %v203
  %v235 = vunpack.c.h.b16 %v203
  %v236 = vunpack.c.l.b16 %v204
  %v237 = vunpack.c.h.b16 %v204
  %v238 = vunpack.c.l.b16 %v205
  %v239 = vunpack.c.h.b16 %v205
  %v240 = vunpack.c.l.b16 %v206
  %v241 = vunpack.c.h.b16 %v206
  %v242 = vunpack.c.l.b16 %v207
  %v243 = vunpack.c.h.b16 %v207
  %v244 = vpack.c.b16 %v230, %v228
  %v245 = vpack.c.b16 %v231, %v229
  %v246 = vpack.c.b16 %v234, %v232
  %v247 = vpack.c.b16 %v235, %v233
  %v248 = vpack.c.b16 %v238, %v236
  %v249 = vpack.c.b16 %v239, %v237
  %v250 = vpack.c.b16 %v242, %v240
  %v251 = vpack.c.b16 %v243, %v241
  %vm260 = vcmask 523264
  %v262 = vsel %vm260, %v197, 0
  %v265 = vsel %vm260, %v198, 0
  %v268 = vsel %vm260, %v199, 0
  %270 = vmatprep.subr.bf16.mxu0 %v245
  %271 = vmatpush1.bf16.msra.mxu0 %v244
  %272 = vmatprep.subr.bf16.mxu0 %v247
  %273 = vmatpush1.bf16.msra.mxu0 %v246
  %274 = vmatprep.subr.bf16.mxu0 %v249
  %275 = vmatpush1.bf16.msra.mxu0 %v248
  %276 = vmatprep.subr.bf16.mxu0 %v251
  %277 = vmatpush1.bf16.msra.mxu0 %v250
  %278 = vmatprep.subr.bf16.mxu0 0
  %279 = vmatpush1.bf16.msra.mxu0 0
  %280 = vmatprep.subr.bf16.mxu0 0
  %281 = vmatpush1.bf16.msra.mxu0 0
  %282 = vmatprep.subr.bf16.mxu0 0
  %283 = vmatpush1.bf16.msra.mxu0 0
  %284 = vmatprep.subr.bf16.mxu0 0
  %285 = vmatpush1.bf16.msra.mxu0 0
  %286 = vmatprep.subr.bf16.mxu0 0
  %287 = vmatpush1.bf16.msra.mxu0 0
  %288 = vmatprep.subr.bf16.mxu0 0
  %289 = vmatpush1.bf16.msra.mxu0 0
  %290 = vmatprep.subr.bf16.mxu0 0
  %291 = vmatpush1.bf16.msra.mxu0 0
  %292 = vmatprep.subr.bf16.mxu0 0
  %293 = vmatpush1.bf16.msra.mxu0 0
  %294 = vmatprep.subr.bf16.mxu0 0
  %295 = vmatpush1.bf16.msra.mxu0 0
  %296 = vmatprep.subr.bf16.mxu0 0
  %297 = vmatpush1.bf16.msra.mxu0 0
  %298 = vmatprep.subr.bf16.mxu0 0
  %299 = vmatpush1.bf16.msra.mxu0 0
  %300 = vmatprep.subr.bf16.mxu0 0
  %301 = vmatpush1.bf16.msra.mxu0 0
  %302 = vmatprep.mubr.bf16.mxu0 0
  %303 = vmatmul.mubr.bf16.gmra.mrb[0].mxu0 %v262
  %v304 = vpop.f32.mrb[0].mxu0
  %v305 = vadd.f32 %v213, %v304
  %v306 = vpop.f32.mrb[0].mxu0
  %v307 = vadd.f32 %v217, %v306
  %v308 = vpop.f32.mrb[0].mxu0
  %v309 = vadd.f32 %v213, %v308
  %v310 = vpop.f32.mrb[0].mxu0
  %v311 = vadd.f32 %v217, %v310
  %312 = vmatprep.mubr.bf16.mxu0 0
  %313 = vmatmul.mubr.bf16.gmra.mrb[0].mxu0 %v265
  %v314 = vpop.f32.mrb[0].mxu0
  %v315 = vadd.f32 %v213, %v314
  %v316 = vpop.f32.mrb[0].mxu0
  %v317 = vadd.f32 %v217, %v316
  %v318 = vpop.f32.mrb[0].mxu0
  %v319 = vadd.f32 %v213, %v318
  %v320 = vpop.f32.mrb[0].mxu0
  %v321 = vadd.f32 %v217, %v320
  %322 = vmatprep.mubr.bf16.mxu0 0
  %323 = vmatmul.mubr.bf16.gmra.mrb[0].mxu0 %v268
  %v324 = vpop.f32.mrb[0].mxu0
  %v325 = vadd.f32 %v213, %v324
  %v326 = vpop.f32.mrb[0].mxu0
  %v327 = vadd.f32 %v217, %v326
  %v328 = vpop.f32.mrb[0].mxu0
  %v329 = vadd.f32 %v213, %v328
  %v330 = vpop.f32.mrb[0].mxu0
  %v331 = vadd.f32 %v217, %v330
  %332 = vdwg.mxu0
  %333 = vst [vmem:[#allocation2] sm:$0xff] %v305
  %334 = vst [vmem:[#allocation2 + $0x8] sm:$0xff] %v307
  %335 = vst [vmem:[#allocation2 + $0x10] sm:$0xff] %v309
  %336 = vst [vmem:[#allocation2 + $0x18] sm:$0xff] %v311
  %337 = vst [vmem:[#allocation2 + $0x20] sm:$0xff] %v315
  %338 = vst [vmem:[#allocation2 + $0x28] sm:$0xff] %v317
  %339 = vst [vmem:[#allocation2 + $0x30] sm:$0xff] %v319
  %340 = vst [vmem:[#allocation2 + $0x38] sm:$0xff] %v321
  %341 = vst [vmem:[#allocation2 + $0x40] sm:$0xff] %v325
  %342 = vst [vmem:[#allocation2 + $0x48] sm:$0xff] %v327
  %343 = vst [vmem:[#allocation2 + $0x50] sm:$0xff] %v329
  %344 = vst [vmem:[#allocation2 + $0x58] sm:$0xff] %v331
  %v345 = vld [vmem:[#allocation2] sm:$0xff]
  %v346 = vld [vmem:[#allocation2 + $0x8] sm:$0xff]
  %v347 = vld [vmem:[%s4] sm:$0xff]
  %v348 = vld [vmem:[%s4 + $0x8] sm:$0xff]
  %v349 = vld [vmem:[%s4 + $0x10] sm:$0xff]
  %v350 = vld [vmem:[%s4 + $0x18] sm:$0xff]
  %v351 = vld [vmem:[%s4 + $0x20] sm:$0xff]
  %v352 = vld [vmem:[%s4 + $0x28] sm:$0xff]
  %v353 = vld [vmem:[%s4 + $0x30] sm:$0xff]
  %v354 = vld [vmem:[%s4 + $0x38] sm:$0xff]
  %v363 = vunpack.c.l.b16 %v347
  %v364 = vunpack.c.h.b16 %v347
  %v365 = vunpack.c.l.b16 %v348
  %v366 = vunpack.c.h.b16 %v348
  %v367 = vunpack.c.l.b16 %v349
  %v368 = vunpack.c.h.b16 %v349
  %v369 = vunpack.c.l.b16 %v350
  %v370 = vunpack.c.h.b16 %v350
  %v371 = vunpack.c.l.b16 %v351
  %v372 = vunpack.c.h.b16 %v351
  %v373 = vunpack.c.l.b16 %v352
  %v374 = vunpack.c.h.b16 %v352
  %v375 = vunpack.c.l.b16 %v353
  %v376 = vunpack.c.h.b16 %v353
  %v377 = vunpack.c.l.b16 %v354
  %v378 = vunpack.c.h.b16 %v354
  %v379 = vpack.c.b16 %v365, %v363
  %v380 = vpack.c.b16 %v366, %v364
  %v381 = vpack.c.b16 %v369, %v367
  %v382 = vpack.c.b16 %v370, %v368
  %v383 = vpack.c.b16 %v373, %v371
  %v384 = vpack.c.b16 %v374, %v372
  %v385 = vpack.c.b16 %v377, %v375
  %v386 = vpack.c.b16 %v378, %v376
  %v396 = vsel %vm260, 0, 0
  %398 = vmatprep.subr.bf16.mxu0 %v380
  %399 = vmatpush1.bf16.msra.mxu0 %v379
  %400 = vmatprep.subr.bf16.mxu0 %v382
  %401 = vmatpush1.bf16.msra.mxu0 %v381
  %402 = vmatprep.subr.bf16.mxu0 %v384
  %403 = vmatpush1.bf16.msra.mxu0 %v383
  %404 = vmatprep.subr.bf16.mxu0 %v386
  %405 = vmatpush1.bf16.msra.mxu0 %v385
  %406 = vmatprep.subr.bf16.mxu0 0
  %407 = vmatpush1.bf16.msra.mxu0 0
  %408 = vmatprep.subr.bf16.mxu0 0
  %409 = vmatpush1.bf16.msra.mxu0 0
  %410 = vmatprep.subr.bf16.mxu0 0
  %411 = vmatpush1.bf16.msra.mxu0 0
  %412 = vmatprep.subr.bf16.mxu0 0
  %413 = vmatpush1.bf16.msra.mxu0 0
  %414 = vmatprep.subr.bf16.mxu0 0
  %415 = vmatpush1.bf16.msra.mxu0 0
  %416 = vmatprep.subr.bf16.mxu0 0
  %417 = vmatpush1.bf16.msra.mxu0 0
  %418 = vmatprep.subr.bf16.mxu0 0
  %419 = vmatpush1.bf16.msra.mxu0 0
  %420 = vmatprep.subr.bf16.mxu0 0
  %421 = vmatpush1.bf16.msra.mxu0 0
  %422 = vmatprep.subr.bf16.mxu0 0
  %423 = vmatpush1.bf16.msra.mxu0 0
  %424 = vmatprep.subr.bf16.mxu0 0
  %425 = vmatpush1.bf16.msra.mxu0 0
  %426 = vmatprep.subr.bf16.mxu0 0
  %427 = vmatpush1.bf16.msra.mxu0 0
  %428 = vmatprep.subr.bf16.mxu0 0
  %429 = vmatpush1.bf16.msra.mxu0 0
  %430 = vmatprep.mubr.bf16.mxu0 0
  %431 = vmatmul.mubr.bf16.gmra.mrb[0].mxu0 %v396
  %v432 = vpop.f32.mrb[0].mxu0
  %v433 = vadd.f32 0.0, %v432
  %v434 = vpop.f32.mrb[0].mxu0
  %v435 = vadd.f32 0.0, %v434
  %v436 = vpop.f32.mrb[0].mxu0
  %v437 = vpop.f32.mrb[0].mxu0
  %438 = vdwg.mxu0
  %v439 = vadd.f32 %v345, %v433
  %v440 = vadd.f32 %v346, %v435
  %v441 = vxor.u32 %v439, 2147483648
  %v442 = vmul.f32 %v441, 1.442695
  %v443 = vpow.pop %v442
  %v444 = vadd.f32 %v443, 1.0
  %v445 = vrcp.pop %v444
  %v446 = vmul.f32 1.0, %v445
  %v447 = vxor.u32 %v440, 2147483648
  %v448 = vmul.f32 %v447, 1.442695
  %v449 = vpow.pop %v448
  %v450 = vadd.f32 %v449, 1.0
  %v451 = vrcp.pop %v450
  %v452 = vmul.f32 1.0, %v451
  %v453 = vtanh.pop %v440
  %v454 = vmul.f32 %v446, 0.0
  %v455 = vmul.f32 %v446, %v453
  %457 = vrot.lane.b32.xlu0 %v455, 64
  %v458 = vpop.permute.xlu0 %457
  %v460 = vadd.f32 %v454, %v458
  %v461 = vtanh.pop %v460
  %v462 = vmul.f32 %v452, %v461
  %v463 = vpack.c.bf16 %v462, %v462
  %v464 = vld [vmem:[%s6] sm:$0xff]
  %v465 = vld [vmem:[%s6 + $0x8] sm:$0xff]
  %v466 = vld [vmem:[%s6 + $0x10] sm:$0xff]
  %v467 = vld [vmem:[%s6 + $0x18] sm:$0xff]
  %v468 = vld [vmem:[%s6 + $0x20] sm:$0xff]
  %v469 = vld [vmem:[%s6 + $0x28] sm:$0xff]
  %v470 = vld [vmem:[%s6 + $0x30] sm:$0xff]
  %v471 = vld [vmem:[%s6 + $0x38] sm:$0xff]
  %v472 = vld [vmem:[%s8] sm:$0x3]
  %v474 = vlaneseq
  %v475 = vshrl.u32 %v474, 7
  %v476 = vsub.s32 0, %v475
  %v477 = vrot.slane %v472, %v476
  %v478 = vlaneseq
  %v479 = vshrl.u32 %v478, 7
  %v480 = vsub.s32 1, %v479
  %v481 = vrot.slane %v472, %v480
  %v492 = vunpack.c.l.b16 %v464
  %v493 = vunpack.c.h.b16 %v464
  %v494 = vunpack.c.l.b16 %v465
  %v495 = vunpack.c.h.b16 %v465
  %v496 = vunpack.c.l.b16 %v466
  %v497 = vunpack.c.h.b16 %v466
  %v498 = vunpack.c.l.b16 %v467
  %v499 = vunpack.c.h.b16 %v467
  %v500 = vunpack.c.l.b16 %v468
  %v501 = vunpack.c.h.b16 %v468
  %v502 = vunpack.c.l.b16 %v469
  %v503 = vunpack.c.h.b16 %v469
  %v504 = vunpack.c.l.b16 %v470
  %v505 = vunpack.c.h.b16 %v470
  %v506 = vunpack.c.l.b16 %v471
  %v507 = vunpack.c.h.b16 %v471
  %v508 = vpack.c.b16 %v494, %v492
  %v509 = vpack.c.b16 %v495, %v493
  %v510 = vpack.c.b16 %v498, %v496
  %v511 = vpack.c.b16 %v499, %v497
  %v512 = vpack.c.b16 %v502, %v500
  %v513 = vpack.c.b16 %v503, %v501
  %v514 = vpack.c.b16 %v506, %v504
  %v515 = vpack.c.b16 %v507, %v505
  %v525 = vsel %vm260, %v463, 0
  %527 = vmatprep.subr.bf16.mxu0 %v509
  %528 = vmatpush1.bf16.msra.mxu0 %v508
  %529 = vmatprep.subr.bf16.mxu0 %v511
  %530 = vmatpush1.bf16.msra.mxu0 %v510
  %531 = vmatprep.subr.bf16.mxu0 %v513
  %532 = vmatpush1.bf16.msra.mxu0 %v512
  %533 = vmatprep.subr.bf16.mxu0 %v515
  %534 = vmatpush1.bf16.msra.mxu0 %v514
  %535 = vmatprep.subr.bf16.mxu0 0
  %536 = vmatpush1.bf16.msra.mxu0 0
  %537 = vmatprep.subr.bf16.mxu0 0
  %538 = vmatpush1.bf16.msra.mxu0 0
  %539 = vmatprep.subr.bf16.mxu0 0
  %540 = vmatpush1.bf16.msra.mxu0 0
  %541 = vmatprep.subr.bf16.mxu0 0
  %542 = vmatpush1.bf16.msra.mxu0 0
  %543 = vmatprep.subr.bf16.mxu0 0
  %544 = vmatpush1.bf16.msra.mxu0 0
  %545 = vmatprep.subr.bf16.mxu0 0
  %546 = vmatpush1.bf16.msra.mxu0 0
  %547 = vmatprep.subr.bf16.mxu0 0
  %548 = vmatpush1.bf16.msra.mxu0 0
  %549 = vmatprep.subr.bf16.mxu0 0
  %550 = vmatpush1.bf16.msra.mxu0 0
  %551 = vmatprep.subr.bf16.mxu0 0
  %552 = vmatpush1.bf16.msra.mxu0 0
  %553 = vmatprep.subr.bf16.mxu0 0
  %554 = vmatpush1.bf16.msra.mxu0 0
  %555 = vmatprep.subr.bf16.mxu0 0
  %556 = vmatpush1.bf16.msra.mxu0 0
  %557 = vmatprep.subr.bf16.mxu0 0
  %558 = vmatpush1.bf16.msra.mxu0 0
  %559 = vmatprep.mubr.bf16.mxu0 0
  %560 = vmatmul.mubr.bf16.gmra.mrb[0].mxu0 %v525
  %v561 = vpop.f32.mrb[0].mxu0
  %v562 = vadd.f32 %v477, %v561
  %v563 = vpop.f32.mrb[0].mxu0
  %v564 = vadd.f32 %v481, %v563
  %v565 = vpop.f32.mrb[0].mxu0
  %v566 = vpop.f32.mrb[0].mxu0
  %567 = vdwg.mxu0
  %568 = vst [vmem:[#allocation3] sm:$0xff] %v562
  %569 = vst [vmem:[#allocation3 + $0x8] sm:$0xff] %v564
  %v570 = vld [vmem:[#allocation2 + $0x10] sm:$0xff]
  %v571 = vld [vmem:[#allocation2 + $0x18] sm:$0xff]
  %v572 = vld [vmem:[%s4] sm:$0xff]
  %v573 = vld [vmem:[%s4 + $0x8] sm:$0xff]
  %v574 = vld [vmem:[%s4 + $0x10] sm:$0xff]
  %v575 = vld [vmem:[%s4 + $0x18] sm:$0xff]
  %v576 = vld [vmem:[%s4 + $0x20] sm:$0xff]
  %v577 = vld [vmem:[%s4 + $0x28] sm:$0xff]
  %v578 = vld [vmem:[%s4 + $0x30] sm:$0xff]
  %v579 = vld [vmem:[%s4 + $0x38] sm:$0xff]
  %v588 = vunpack.c.l.b16 %v572
  %v589 = vunpack.c.h.b16 %v572
  %v590 = vunpack.c.l.b16 %v573
  %v591 = vunpack.c.h.b16 %v573
  %v592 = vunpack.c.l.b16 %v574
  %v593 = vunpack.c.h.b16 %v574
  %v594 = vunpack.c.l.b16 %v575
  %v595 = vunpack.c.h.b16 %v575
  %v596 = vunpack.c.l.b16 %v576
  %v597 = vunpack.c.h.b16 %v576
  %v598 = vunpack.c.l.b16 %v577
  %v599 = vunpack.c.h.b16 %v577
  %v600 = vunpack.c.l.b16 %v578
  %v601 = vunpack.c.h.b16 %v578
  %v602 = vunpack.c.l.b16 %v579
  %v603 = vunpack.c.h.b16 %v579
  %v604 = vpack.c.b16 %v590, %v588
  %v605 = vpack.c.b16 %v591, %v589
  %v606 = vpack.c.b16 %v594, %v592
  %v607 = vpack.c.b16 %v595, %v593
  %v608 = vpack.c.b16 %v598, %v596
  %v609 = vpack.c.b16 %v599, %v597
  %v610 = vpack.c.b16 %v602, %v600
  %v611 = vpack.c.b16 %v603, %v601
  %620 = vmatprep.subr.bf16.mxu0 %v605
  %621 = vmatpush1.bf16.msra.mxu0 %v604
  %622 = vmatprep.subr.bf16.mxu0 %v607
  %623 = vmatpush1.bf16.msra.mxu0 %v606
  %624 = vmatprep.subr.bf16.mxu0 %v609
  %625 = vmatpush1.bf16.msra.mxu0 %v608
  %626 = vmatprep.subr.bf16.mxu0 %v611
  %627 = vmatpush1.bf16.msra.mxu0 %v610
  %628 = vmatprep.subr.bf16.mxu0 0
  %629 = vmatpush1.bf16.msra.mxu0 0
  %630 = vmatprep.subr.bf16.mxu0 0
  %631 = vmatpush1.bf16.msra.mxu0 0
  %632 = vmatprep.subr.bf16.mxu0 0
  %633 = vmatpush1.bf16.msra.mxu0 0
  %634 = vmatprep.subr.bf16.mxu0 0
  %635 = vmatpush1.bf16.msra.mxu0 0
  %636 = vmatprep.subr.bf16.mxu0 0
  %637 = vmatpush1.bf16.msra.mxu0 0
  %638 = vmatprep.subr.bf16.mxu0 0
  %639 = vmatpush1.bf16.msra.mxu0 0
  %640 = vmatprep.subr.bf16.mxu0 0
  %641 = vmatpush1.bf16.msra.mxu0 0
  %642 = vmatprep.subr.bf16.mxu0 0
  %643 = vmatpush1.bf16.msra.mxu0 0
  %644 = vmatprep.subr.bf16.mxu0 0
  %645 = vmatpush1.bf16.msra.mxu0 0
  %646 = vmatprep.subr.bf16.mxu0 0
  %647 = vmatpush1.bf16.msra.mxu0 0
  %648 = vmatprep.subr.bf16.mxu0 0
  %649 = vmatpush1.bf16.msra.mxu0 0
  %650 = vmatprep.subr.bf16.mxu0 0
  %651 = vmatpush1.bf16.msra.mxu0 0
  %652 = vmatprep.mubr.bf16.mxu0 0
  %653 = vmatmul.mubr.bf16.gmra.mrb[0].mxu0 %v525
  %v654 = vpop.f32.mrb[0].mxu0
  %v655 = vadd.f32 0.0, %v654
  %v656 = vpop.f32.mrb[0].mxu0
  %v657 = vadd.f32 0.0, %v656
  %v658 = vpop.f32.mrb[0].mxu0
  %v659 = vpop.f32.mrb[0].mxu0
  %660 = vdwg.mxu0
  %v661 = vadd.f32 %v570, %v655
  %v662 = vadd.f32 %v571, %v657
  %v663 = vxor.u32 %v661, 2147483648
  %v664 = vmul.f32 %v663, 1.442695
  %v665 = vpow.pop %v664
  %v666 = vadd.f32 %v665, 1.0
  %v667 = vrcp.pop %v666
  %v668 = vmul.f32 1.0, %v667
  %v669 = vxor.u32 %v662, 2147483648
  %v670 = vmul.f32 %v669, 1.442695
  %v671 = vpow.pop %v670
  %v672 = vadd.f32 %v671, 1.0
  %v673 = vrcp.pop %v672
  %v674 = vmul.f32 1.0, %v673
  %v675 = vtanh.pop %v662
  %v676 = vmul.f32 %v668, %v460
  %v677 = vmul.f32 %v668, %v675
  %679 = vrot.lane.b32.xlu0 %v677, 64
  %v680 = vpop.permute.xlu0 %679
  %v682 = vadd.f32 %v676, %v680
  %v683 = vtanh.pop %v682
  %v684 = vmul.f32 %v674, %v683
  %v685 = vpack.c.bf16 %v684, %v684
  %v686 = vld [vmem:[%s6] sm:$0xff]
  %v687 = vld [vmem:[%s6 + $0x8] sm:$0xff]
  %v688 = vld [vmem:[%s6 + $0x10] sm:$0xff]
  %v689 = vld [vmem:[%s6 + $0x18] sm:$0xff]
  %v690 = vld [vmem:[%s6 + $0x20] sm:$0xff]
  %v691 = vld [vmem:[%s6 + $0x28] sm:$0xff]
  %v692 = vld [vmem:[%s6 + $0x30] sm:$0xff]
  %v693 = vld [vmem:[%s6 + $0x38] sm:$0xff]
  %v694 = vld [vmem:[%s8] sm:$0x3]
  %v696 = vlaneseq
  %v697 = vshrl.u32 %v696, 7
  %v698 = vsub.s32 0, %v697
  %v699 = vrot.slane %v694, %v698
  %v700 = vlaneseq
  %v701 = vshrl.u32 %v700, 7
  %v702 = vsub.s32 1, %v701
  %v703 = vrot.slane %v694, %v702
  %v714 = vunpack.c.l.b16 %v686
  %v715 = vunpack.c.h.b16 %v686
  %v716 = vunpack.c.l.b16 %v687
  %v717 = vunpack.c.h.b16 %v687
  %v718 = vunpack.c.l.b16 %v688
  %v719 = vunpack.c.h.b16 %v688
  %v720 = vunpack.c.l.b16 %v689
  %v721 = vunpack.c.h.b16 %v689
  %v722 = vunpack.c.l.b16 %v690
  %v723 = vunpack.c.h.b16 %v690
  %v724 = vunpack.c.l.b16 %v691
  %v725 = vunpack.c.h.b16 %v691
  %v726 = vunpack.c.l.b16 %v692
  %v727 = vunpack.c.h.b16 %v692
  %v728 = vunpack.c.l.b16 %v693
  %v729 = vunpack.c.h.b16 %v693
  %v730 = vpack.c.b16 %v716, %v714
  %v731 = vpack.c.b16 %v717, %v715
  %v732 = vpack.c.b16 %v720, %v718
  %v733 = vpack.c.b16 %v721, %v719
  %v734 = vpack.c.b16 %v724, %v722
  %v735 = vpack.c.b16 %v725, %v723
  %v736 = vpack.c.b16 %v728, %v726
  %v737 = vpack.c.b16 %v729, %v727
  %v747 = vsel %vm260, %v685, 0
  %749 = vmatprep.subr.bf16.mxu0 %v731
  %750 = vmatpush1.bf16.msra.mxu0 %v730
  %751 = vmatprep.subr.bf16.mxu0 %v733
  %752 = vmatpush1.bf16.msra.mxu0 %v732
  %753 = vmatprep.subr.bf16.mxu0 %v735
  %754 = vmatpush1.bf16.msra.mxu0 %v734
  %755 = vmatprep.subr.bf16.mxu0 %v737
  %756 = vmatpush1.bf16.msra.mxu0 %v736
  %757 = vmatprep.subr.bf16.mxu0 0
  %758 = vmatpush1.bf16.msra.mxu0 0
  %759 = vmatprep.subr.bf16.mxu0 0
  %760 = vmatpush1.bf16.msra.mxu0 0
  %761 = vmatprep.subr.bf16.mxu0 0
  %762 = vmatpush1.bf16.msra.mxu0 0
  %763 = vmatprep.subr.bf16.mxu0 0
  %764 = vmatpush1.bf16.msra.mxu0 0
  %765 = vmatprep.subr.bf16.mxu0 0
  %766 = vmatpush1.bf16.msra.mxu0 0
  %767 = vmatprep.subr.bf16.mxu0 0
  %768 = vmatpush1.bf16.msra.mxu0 0
  %769 = vmatprep.subr.bf16.mxu0 0
  %770 = vmatpush1.bf16.msra.mxu0 0
  %771 = vmatprep.subr.bf16.mxu0 0
  %772 = vmatpush1.bf16.msra.mxu0 0
  %773 = vmatprep.subr.bf16.mxu0 0
  %774 = vmatpush1.bf16.msra.mxu0 0
  %775 = vmatprep.subr.bf16.mxu0 0
  %776 = vmatpush1.bf16.msra.mxu0 0
  %777 = vmatprep.subr.bf16.mxu0 0
  %778 = vmatpush1.bf16.msra.mxu0 0
  %779 = vmatprep.subr.bf16.mxu0 0
  %780 = vmatpush1.bf16.msra.mxu0 0
  %781 = vmatprep.mubr.bf16.mxu0 0
  %782 = vmatmul.mubr.bf16.gmra.mrb[0].mxu0 %v747
  %v783 = vpop.f32.mrb[0].mxu0
  %v784 = vadd.f32 %v699, %v783
  %v785 = vpop.f32.mrb[0].mxu0
  %v786 = vadd.f32 %v703, %v785
  %v787 = vpop.f32.mrb[0].mxu0
  %v788 = vpop.f32.mrb[0].mxu0
  %789 = vdwg.mxu0
  %790 = vst [vmem:[#allocation3 + $0x10] sm:$0xff] %v784
  %791 = vst [vmem:[#allocation3 + $0x18] sm:$0xff] %v786
  %v792 = vld [vmem:[#allocation2 + $0x20] sm:$0xff]
  %v793 = vld [vmem:[#allocation2 + $0x28] sm:$0xff]
  %v794 = vld [vmem:[%s4] sm:$0xff]
  %v795 = vld [vmem:[%s4 + $0x8] sm:$0xff]
  %v796 = vld [vmem:[%s4 + $0x10] sm:$0xff]
  %v797 = vld [vmem:[%s4 + $0x18] sm:$0xff]
  %v798 = vld [vmem:[%s4 + $0x20] sm:$0xff]
  %v799 = vld [vmem:[%s4 + $0x28] sm:$0xff]
  %v800 = vld [vmem:[%s4 + $0x30] sm:$0xff]
  %v801 = vld [vmem:[%s4 + $0x38] sm:$0xff]
  %v810 = vunpack.c.l.b16 %v794
  %v811 = vunpack.c.h.b16 %v794
  %v812 = vunpack.c.l.b16 %v795
  %v813 = vunpack.c.h.b16 %v795
  %v814 = vunpack.c.l.b16 %v796
  %v815 = vunpack.c.h.b16 %v796
  %v816 = vunpack.c.l.b16 %v797
  %v817 = vunpack.c.h.b16 %v797
  %v818 = vunpack.c.l.b16 %v798
  %v819 = vunpack.c.h.b16 %v798
  %v820 = vunpack.c.l.b16 %v799
  %v821 = vunpack.c.h.b16 %v799
  %v822 = vunpack.c.l.b16 %v800
  %v823 = vunpack.c.h.b16 %v800
  %v824 = vunpack.c.l.b16 %v801
  %v825 = vunpack.c.h.b16 %v801
  %v826 = vpack.c.b16 %v812, %v810
  %v827 = vpack.c.b16 %v813, %v811
  %v828 = vpack.c.b16 %v816, %v814
  %v829 = vpack.c.b16 %v817, %v815
  %v830 = vpack.c.b16 %v820, %v818
  %v831 = vpack.c.b16 %v821, %v819
  %v832 = vpack.c.b16 %v824, %v822
  %v833 = vpack.c.b16 %v825, %v823
  %842 = vmatprep.subr.bf16.mxu0 %v827
  %843 = vmatpush1.bf16.msra.mxu0 %v826
  %844 = vmatprep.subr.bf16.mxu0 %v829
  %845 = vmatpush1.bf16.msra.mxu0 %v828
  %846 = vmatprep.subr.bf16.mxu0 %v831
  %847 = vmatpush1.bf16.msra.mxu0 %v830
  %848 = vmatprep.subr.bf16.mxu0 %v833
  %849 = vmatpush1.bf16.msra.mxu0 %v832
  %850 = vmatprep.subr.bf16.mxu0 0
  %851 = vmatpush1.bf16.msra.mxu0 0
  %852 = vmatprep.subr.bf16.mxu0 0
  %853 = vmatpush1.bf16.msra.mxu0 0
  %854 = vmatprep.subr.bf16.mxu0 0
  %855 = vmatpush1.bf16.msra.mxu0 0
  %856 = vmatprep.subr.bf16.mxu0 0
  %857 = vmatpush1.bf16.msra.mxu0 0
  %858 = vmatprep.subr.bf16.mxu0 0
  %859 = vmatpush1.bf16.msra.mxu0 0
  %860 = vmatprep.subr.bf16.mxu0 0
  %861 = vmatpush1.bf16.msra.mxu0 0
  %862 = vmatprep.subr.bf16.mxu0 0
  %863 = vmatpush1.bf16.msra.mxu0 0
  %864 = vmatprep.subr.bf16.mxu0 0
  %865 = vmatpush1.bf16.msra.mxu0 0
  %866 = vmatprep.subr.bf16.mxu0 0
  %867 = vmatpush1.bf16.msra.mxu0 0
  %868 = vmatprep.subr.bf16.mxu0 0
  %869 = vmatpush1.bf16.msra.mxu0 0
  %870 = vmatprep.subr.bf16.mxu0 0
  %871 = vmatpush1.bf16.msra.mxu0 0
  %872 = vmatprep.subr.bf16.mxu0 0
  %873 = vmatpush1.bf16.msra.mxu0 0
  %874 = vmatprep.mubr.bf16.mxu0 0
  %875 = vmatmul.mubr.bf16.gmra.mrb[0].mxu0 %v747
  %v876 = vpop.f32.mrb[0].mxu0
  %v877 = vadd.f32 0.0, %v876
  %v878 = vpop.f32.mrb[0].mxu0
  %v879 = vadd.f32 0.0, %v878
  %v880 = vpop.f32.mrb[0].mxu0
  %v881 = vpop.f32.mrb[0].mxu0
  %882 = vdwg.mxu0
  %v883 = vadd.f32 %v792, %v877
  %v884 = vadd.f32 %v793, %v879
  %v885 = vxor.u32 %v883, 2147483648
  %v886 = vmul.f32 %v885, 1.442695
  %v887 = vpow.pop %v886
  %v888 = vadd.f32 %v887, 1.0
  %v889 = vrcp.pop %v888
  %v890 = vmul.f32 1.0, %v889
  %v891 = vxor.u32 %v884, 2147483648
  %v892 = vmul.f32 %v891, 1.442695
  %v893 = vpow.pop %v892
  %v894 = vadd.f32 %v893, 1.0
  %v895 = vrcp.pop %v894
  %v896 = vmul.f32 1.0, %v895
  %v897 = vtanh.pop %v884
  %v898 = vmul.f32 %v890, %v682
  %v899 = vmul.f32 %v890, %v897
  %901 = vrot.lane.b32.xlu0 %v899, 64
  %v902 = vpop.permute.xlu0 %901
  %v904 = vadd.f32 %v898, %v902
  %v905 = vtanh.pop %v904
  %v906 = vmul.f32 %v896, %v905
  %v907 = vpack.c.bf16 %v906, %v906
  %v908 = vld [vmem:[%s6] sm:$0xff]
  %v909 = vld [vmem:[%s6 + $0x8] sm:$0xff]
  %v910 = vld [vmem:[%s6 + $0x10] sm:$0xff]
  %v911 = vld [vmem:[%s6 + $0x18] sm:$0xff]
  %v912 = vld [vmem:[%s6 + $0x20] sm:$0xff]
  %v913 = vld [vmem:[%s6 + $0x28] sm:$0xff]
  %v914 = vld [vmem:[%s6 + $0x30] sm:$0xff]
  %v915 = vld [vmem:[%s6 + $0x38] sm:$0xff]
  %v916 = vld [vmem:[%s8] sm:$0x3]
  %v918 = vlaneseq
  %v919 = vshrl.u32 %v918, 7
  %v920 = vsub.s32 0, %v919
  %v921 = vrot.slane %v916, %v920
  %v922 = vlaneseq
  %v923 = vshrl.u32 %v922, 7
  %v924 = vsub.s32 1, %v923
  %v925 = vrot.slane %v916, %v924
  %v936 = vunpack.c.l.b16 %v908
  %v937 = vunpack.c.h.b16 %v908
  %v938 = vunpack.c.l.b16 %v909
  %v939 = vunpack.c.h.b16 %v909
  %v940 = vunpack.c.l.b16 %v910
  %v941 = vunpack.c.h.b16 %v910
  %v942 = vunpack.c.l.b16 %v911
  %v943 = vunpack.c.h.b16 %v911
  %v944 = vunpack.c.l.b16 %v912
  %v945 = vunpack.c.h.b16 %v912
  %v946 = vunpack.c.l.b16 %v913
  %v947 = vunpack.c.h.b16 %v913
  %v948 = vunpack.c.l.b16 %v914
  %v949 = vunpack.c.h.b16 %v914
  %v950 = vunpack.c.l.b16 %v915
  %v951 = vunpack.c.h.b16 %v915
  %v952 = vpack.c.b16 %v938, %v936
  %v953 = vpack.c.b16 %v939, %v937
  %v954 = vpack.c.b16 %v942, %v940
  %v955 = vpack.c.b16 %v943, %v941
  %v956 = vpack.c.b16 %v946, %v944
  %v957 = vpack.c.b16 %v947, %v945
  %v958 = vpack.c.b16 %v950, %v948
  %v959 = vpack.c.b16 %v951, %v949
  %v969 = vsel %vm260, %v907, 0
  %971 = vmatprep.subr.bf16.mxu0 %v953
  %972 = vmatpush1.bf16.msra.mxu0 %v952
  %973 = vmatprep.subr.bf16.mxu0 %v955
  %974 = vmatpush1.bf16.msra.mxu0 %v954
  %975 = vmatprep.subr.bf16.mxu0 %v957
  %976 = vmatpush1.bf16.msra.mxu0 %v956
  %977 = vmatprep.subr.bf16.mxu0 %v959
  %978 = vmatpush1.bf16.msra.mxu0 %v958
  %979 = vmatprep.subr.bf16.mxu0 0
  %980 = vmatpush1.bf16.msra.mxu0 0
  %981 = vmatprep.subr.bf16.mxu0 0
  %982 = vmatpush1.bf16.msra.mxu0 0
  %983 = vmatprep.subr.bf16.mxu0 0
  %984 = vmatpush1.bf16.msra.mxu0 0
  %985 = vmatprep.subr.bf16.mxu0 0
  %986 = vmatpush1.bf16.msra.mxu0 0
  %987 = vmatprep.subr.bf16.mxu0 0
  %988 = vmatpush1.bf16.msra.mxu0 0
  %989 = vmatprep.subr.bf16.mxu0 0
  %990 = vmatpush1.bf16.msra.mxu0 0
  %991 = vmatprep.subr.bf16.mxu0 0
  %992 = vmatpush1.bf16.msra.mxu0 0
  %993 = vmatprep.subr.bf16.mxu0 0
  %994 = vmatpush1.bf16.msra.mxu0 0
  %995 = vmatprep.subr.bf16.mxu0 0
  %996 = vmatpush1.bf16.msra.mxu0 0
  %997 = vmatprep.subr.bf16.mxu0 0
  %998 = vmatpush1.bf16.msra.mxu0 0
  %999 = vmatprep.subr.bf16.mxu0 0
  %1000 = vmatpush1.bf16.msra.mxu0 0
  %1001 = vmatprep.subr.bf16.mxu0 0
  %1002 = vmatpush1.bf16.msra.mxu0 0
  %1003 = vmatprep.mubr.bf16.mxu0 0
  %1004 = vmatmul.mubr.bf16.gmra.mrb[0].mxu0 %v969
  %v1005 = vpop.f32.mrb[0].mxu0
  %v1006 = vadd.f32 %v921, %v1005
  %v1007 = vpop.f32.mrb[0].mxu0
  %v1008 = vadd.f32 %v925, %v1007
  %v1009 = vpop.f32.mrb[0].mxu0
  %v1010 = vpop.f32.mrb[0].mxu0
  %1011 = vdwg.mxu0
  %1012 = vst [vmem:[#allocation3 + $0x20] sm:$0xff] %v1006
  %1013 = vst [vmem:[#allocation3 + $0x28] sm:$0xff] %v1008
  %v1014 = vld [vmem:[#allocation2 + $0x30] sm:$0xff]
  %v1015 = vld [vmem:[#allocation2 + $0x38] sm:$0xff]
  %v1016 = vld [vmem:[%s4] sm:$0xff]
  %v1017 = vld [vmem:[%s4 + $0x8] sm:$0xff]
  %v1018 = vld [vmem:[%s4 + $0x10] sm:$0xff]
  %v1019 = vld [vmem:[%s4 + $0x18] sm:$0xff]
  %v1020 = vld [vmem:[%s4 + $0x20] sm:$0xff]
  %v1021 = vld [vmem:[%s4 + $0x28] sm:$0xff]
  %v1022 = vld [vmem:[%s4 + $0x30] sm:$0xff]
  %v1023 = vld [vmem:[%s4 + $0x38] sm:$0xff]
  %v1032 = vunpack.c.l.b16 %v1016
  %v1033 = vunpack.c.h.b16 %v1016
  %v1034 = vunpack.c.l.b16 %v1017
  %v1035 = vunpack.c.h.b16 %v1017
  %v1036 = vunpack.c.l.b16 %v1018
  %v1037 = vunpack.c.h.b16 %v1018
  %v1038 = vunpack.c.l.b16 %v1019
  %v1039 = vunpack.c.h.b16 %v1019
  %v1040 = vunpack.c.l.b16 %v1020
  %v1041 = vunpack.c.h.b16 %v1020
  %v1042 = vunpack.c.l.b16 %v1021
  %v1043 = vunpack.c.h.b16 %v1021
  %v1044 = vunpack.c.l.b16 %v1022
  %v1045 = vunpack.c.h.b16 %v1022
  %v1046 = vunpack.c.l.b16 %v1023
  %v1047 = vunpack.c.h.b16 %v1023
  %v1048 = vpack.c.b16 %v1034, %v1032
  %v1049 = vpack.c.b16 %v1035, %v1033
  %v1050 = vpack.c.b16 %v1038, %v1036
  %v1051 = vpack.c.b16 %v1039, %v1037
  %v1052 = vpack.c.b16 %v1042, %v1040
  %v1053 = vpack.c.b16 %v1043, %v1041
  %v1054 = vpack.c.b16 %v1046, %v1044
  %v1055 = vpack.c.b16 %v1047, %v1045
  %1064 = vmatprep.subr.bf16.mxu0 %v1049
  %1065 = vmatpush1.bf16.msra.mxu0 %v1048
  %1066 = vmatprep.subr.bf16.mxu0 %v1051
  %1067 = vmatpush1.bf16.msra.mxu0 %v1050
  %1068 = vmatprep.subr.bf16.mxu0 %v1053
  %1069 = vmatpush1.bf16.msra.mxu0 %v1052
  %1070 = vmatprep.subr.bf16.mxu0 %v1055
  %1071 = vmatpush1.bf16.msra.mxu0 %v1054
  %1072 = vmatprep.subr.bf16.mxu0 0
  %1073 = vmatpush1.bf16.msra.mxu0 0
  %1074 = vmatprep.subr.bf16.mxu0 0
  %1075 = vmatpush1.bf16.msra.mxu0 0
  %1076 = vmatprep.subr.bf16.mxu0 0
  %1077 = vmatpush1.bf16.msra.mxu0 0
  %1078 = vmatprep.subr.bf16.mxu0 0
  %1079 = vmatpush1.bf16.msra.mxu0 0
  %1080 = vmatprep.subr.bf16.mxu0 0
  %1081 = vmatpush1.bf16.msra.mxu0 0
  %1082 = vmatprep.subr.bf16.mxu0 0
  %1083 = vmatpush1.bf16.msra.mxu0 0
  %1084 = vmatprep.subr.bf16.mxu0 0
  %1085 = vmatpush1.bf16.msra.mxu0 0
  %1086 = vmatprep.subr.bf16.mxu0 0
  %1087 = vmatpush1.bf16.msra.mxu0 0
  %1088 = vmatprep.subr.bf16.mxu0 0
  %1089 = vmatpush1.bf16.msra.mxu0 0
  %1090 = vmatprep.subr.bf16.mxu0 0
  %1091 = vmatpush1.bf16.msra.mxu0 0
  %1092 = vmatprep.subr.bf16.mxu0 0
  %1093 = vmatpush1.bf16.msra.mxu0 0
  %1094 = vmatprep.subr.bf16.mxu0 0
  %1095 = vmatpush1.bf16.msra.mxu0 0
  %1096 = vmatprep.mubr.bf16.mxu0 0
  %1097 = vmatmul.mubr.bf16.gmra.mrb[0].mxu0 %v969
  %v1098 = vpop.f32.mrb[0].mxu0
  %v1099 = vadd.f32 0.0, %v1098
  %v1100 = vpop.f32.mrb[0].mxu0
  %v1101 = vadd.f32 0.0, %v1100
  %v1102 = vpop.f32.mrb[0].mxu0
  %v1103 = vpop.f32.mrb[0].mxu0
  %1104 = vdwg.mxu0
  %v1105 = vadd.f32 %v1014, %v1099
  %v1106 = vadd.f32 %v1015, %v1101
  %v1107 = vxor.u32 %v1105, 2147483648
  %v1108 = vmul.f32 %v1107, 1.442695
  %v1109 = vpow.pop %v1108
  %v1110 = vadd.f32 %v1109, 1.0
  %v1111 = vrcp.pop %v1110
  %v1112 = vmul.f32 1.0, %v1111
  %v1113 = vxor.u32 %v1106, 2147483648
  %v1114 = vmul.f32 %v1113, 1.442695
  %v1115 = vpow.pop %v1114
  %v1116 = vadd.f32 %v1115, 1.0
  %v1117 = vrcp.pop %v1116
  %v1118 = vmul.f32 1.0, %v1117
  %v1119 = vtanh.pop %v1106
  %v1120 = vmul.f32 %v1112, %v904
  %v1121 = vmul.f32 %v1112, %v1119
  %1123 = vrot.lane.b32.xlu0 %v1121, 64
  %v1124 = vpop.permute.xlu0 %1123
  %v1126 = vadd.f32 %v1120, %v1124
  %v1127 = vtanh.pop %v1126
  %v1128 = vmul.f32 %v1118, %v1127
  %v1129 = vpack.c.bf16 %v1128, %v1128
  %v1130 = vld [vmem:[%s6] sm:$0xff]
  %v1131 = vld [vmem:[%s6 + $0x8] sm:$0xff]
  %v1132 = vld [vmem:[%s6 + $0x10] sm:$0xff]
  %v1133 = vld [vmem:[%s6 + $0x18] sm:$0xff]
  %v1134 = vld [vmem:[%s6 + $0x20] sm:$0xff]
  %v1135 = vld [vmem:[%s6 + $0x28] sm:$0xff]
  %v1136 = vld [vmem:[%s6 + $0x30] sm:$0xff]
  %v1137 = vld [vmem:[%s6 + $0x38] sm:$0xff]
  %v1138 = vld [vmem:[%s8] sm:$0x3]
  %v1140 = vlaneseq
  %v1141 = vshrl.u32 %v1140, 7
  %v1142 = vsub.s32 0, %v1141
  %v1143 = vrot.slane %v1138, %v1142
  %v1144 = vlaneseq
  %v1145 = vshrl.u32 %v1144, 7
  %v1146 = vsub.s32 1, %v1145
  %v1147 = vrot.slane %v1138, %v1146
  %v1158 = vunpack.c.l.b16 %v1130
  %v1159 = vunpack.c.h.b16 %v1130
  %v1160 = vunpack.c.l.b16 %v1131
  %v1161 = vunpack.c.h.b16 %v1131
  %v1162 = vunpack.c.l.b16 %v1132
  %v1163 = vunpack.c.h.b16 %v1132
  %v1164 = vunpack.c.l.b16 %v1133
  %v1165 = vunpack.c.h.b16 %v1133
  %v1166 = vunpack.c.l.b16 %v1134
  %v1167 = vunpack.c.h.b16 %v1134
  %v1168 = vunpack.c.l.b16 %v1135
  %v1169 = vunpack.c.h.b16 %v1135
  %v1170 = vunpack.c.l.b16 %v1136
  %v1171 = vunpack.c.h.b16 %v1136
  %v1172 = vunpack.c.l.b16 %v1137
  %v1173 = vunpack.c.h.b16 %v1137
  %v1174 = vpack.c.b16 %v1160, %v1158
  %v1175 = vpack.c.b16 %v1161, %v1159
  %v1176 = vpack.c.b16 %v1164, %v1162
  %v1177 = vpack.c.b16 %v1165, %v1163
  %v1178 = vpack.c.b16 %v1168, %v1166
  %v1179 = vpack.c.b16 %v1169, %v1167
  %v1180 = vpack.c.b16 %v1172, %v1170
  %v1181 = vpack.c.b16 %v1173, %v1171
  %v1191 = vsel %vm260, %v1129, 0
  %1193 = vmatprep.subr.bf16.mxu0 %v1175
  %1194 = vmatpush1.bf16.msra.mxu0 %v1174
  %1195 = vmatprep.subr.bf16.mxu0 %v1177
  %1196 = vmatpush1.bf16.msra.mxu0 %v1176
  %1197 = vmatprep.subr.bf16.mxu0 %v1179
  %1198 = vmatpush1.bf16.msra.mxu0 %v1178
  %1199 = vmatprep.subr.bf16.mxu0 %v1181
  %1200 = vmatpush1.bf16.msra.mxu0 %v1180
  %1201 = vmatprep.subr.bf16.mxu0 0
  %1202 = vmatpush1.bf16.msra.mxu0 0
  %1203 = vmatprep.subr.bf16.mxu0 0
  %1204 = vmatpush1.bf16.msra.mxu0 0
  %1205 = vmatprep.subr.bf16.mxu0 0
  %1206 = vmatpush1.bf16.msra.mxu0 0
  %1207 = vmatprep.subr.bf16.mxu0 0
  %1208 = vmatpush1.bf16.msra.mxu0 0
  %1209 = vmatprep.subr.bf16.mxu0 0
  %1210 = vmatpush1.bf16.msra.mxu0 0
  %1211 = vmatprep.subr.bf16.mxu0 0
  %1212 = vmatpush1.bf16.msra.mxu0 0
  %1213 = vmatprep.subr.bf16.mxu0 0
  %1214 = vmatpush1.bf16.msra.mxu0 0
  %1215 = vmatprep.subr.bf16.mxu0 0
  %1216 = vmatpush1.bf16.msra.mxu0 0
  %1217 = vmatprep.subr.bf16.mxu0 0
  %1218 = vmatpush1.bf16.msra.mxu0 0
  %1219 = vmatprep.subr.bf16.mxu0 0
  %1220 = vmatpush1.bf16.msra.mxu0 0
  %1221 = vmatprep.subr.bf16.mxu0 0
  %1222 = vmatpush1.bf16.msra.mxu0 0
  %1223 = vmatprep.subr.bf16.mxu0 0
  %1224 = vmatpush1.bf16.msra.mxu0 0
  %1225 = vmatprep.mubr.bf16.mxu0 0
  %1226 = vmatmul.mubr.bf16.gmra.mrb[0].mxu0 %v1191
  %v1227 = vpop.f32.mrb[0].mxu0
  %v1228 = vadd.f32 %v1143, %v1227
  %v1229 = vpop.f32.mrb[0].mxu0
  %v1230 = vadd.f32 %v1147, %v1229
  %v1231 = vpop.f32.mrb[0].mxu0
  %v1232 = vpop.f32.mrb[0].mxu0
  %1233 = vdwg.mxu0
  %1234 = vst [vmem:[#allocation3 + $0x30] sm:$0xff] %v1228
  %1235 = vst [vmem:[#allocation3 + $0x38] sm:$0xff] %v1230
  %v1236 = vld [vmem:[#allocation2 + $0x40] sm:$0xff]
  %v1237 = vld [vmem:[#allocation2 + $0x48] sm:$0xff]
  %v1238 = vld [vmem:[%s4] sm:$0xff]
  %v1239 = vld [vmem:[%s4 + $0x8] sm:$0xff]
  %v1240 = vld [vmem:[%s4 + $0x10] sm:$0xff]
  %v1241 = vld [vmem:[%s4 + $0x18] sm:$0xff]
  %v1242 = vld [vmem:[%s4 + $0x20] sm:$0xff]
  %v1243 = vld [vmem:[%s4 + $0x28] sm:$0xff]
  %v1244 = vld [vmem:[%s4 + $0x30] sm:$0xff]
  %v1245 = vld [vmem:[%s4 + $0x38] sm:$0xff]
  %v1254 = vunpack.c.l.b16 %v1238
  %v1255 = vunpack.c.h.b16 %v1238
  %v1256 = vunpack.c.l.b16 %v1239
  %v1257 = vunpack.c.h.b16 %v1239
  %v1258 = vunpack.c.l.b16 %v1240
  %v1259 = vunpack.c.h.b16 %v1240
  %v1260 = vunpack.c.l.b16 %v1241
  %v1261 = vunpack.c.h.b16 %v1241
  %v1262 = vunpack.c.l.b16 %v1242
  %v1263 = vunpack.c.h.b16 %v1242
  %v1264 = vunpack.c.l.b16 %v1243
  %v1265 = vunpack.c.h.b16 %v1243
  %v1266 = vunpack.c.l.b16 %v1244
  %v1267 = vunpack.c.h.b16 %v1244
  %v1268 = vunpack.c.l.b16 %v1245
  %v1269 = vunpack.c.h.b16 %v1245
  %v1270 = vpack.c.b16 %v1256, %v1254
  %v1271 = vpack.c.b16 %v1257, %v1255
  %v1272 = vpack.c.b16 %v1260, %v1258
  %v1273 = vpack.c.b16 %v1261, %v1259
  %v1274 = vpack.c.b16 %v1264, %v1262
  %v1275 = vpack.c.b16 %v1265, %v1263
  %v1276 = vpack.c.b16 %v1268, %v1266
  %v1277 = vpack.c.b16 %v1269, %v1267
  %1286 = vmatprep.subr.bf16.mxu0 %v1271
  %1287 = vmatpush1.bf16.msra.mxu0 %v1270
  %1288 = vmatprep.subr.bf16.mxu0 %v1273
  %1289 = vmatpush1.bf16.msra.mxu0 %v1272
  %1290 = vmatprep.subr.bf16.mxu0 %v1275
  %1291 = vmatpush1.bf16.msra.mxu0 %v1274
  %1292 = vmatprep.subr.bf16.mxu0 %v1277
  %1293 = vmatpush1.bf16.msra.mxu0 %v1276
  %1294 = vmatprep.subr.bf16.mxu0 0
  %1295 = vmatpush1.bf16.msra.mxu0 0
  %1296 = vmatprep.subr.bf16.mxu0 0
  %1297 = vmatpush1.bf16.msra.mxu0 0
  %1298 = vmatprep.subr.bf16.mxu0 0
  %1299 = vmatpush1.bf16.msra.mxu0 0
  %1300 = vmatprep.subr.bf16.mxu0 0
  %1301 = vmatpush1.bf16.msra.mxu0 0
  %1302 = vmatprep.subr.bf16.mxu0 0
  %1303 = vmatpush1.bf16.msra.mxu0 0
  %1304 = vmatprep.subr.bf16.mxu0 0
  %1305 = vmatpush1.bf16.msra.mxu0 0
  %1306 = vmatprep.subr.bf16.mxu0 0
  %1307 = vmatpush1.bf16.msra.mxu0 0
  %1308 = vmatprep.subr.bf16.mxu0 0
  %1309 = vmatpush1.bf16.msra.mxu0 0
  %1310 = vmatprep.subr.bf16.mxu0 0
  %1311 = vmatpush1.bf16.msra.mxu0 0
  %1312 = vmatprep.subr.bf16.mxu0 0
  %1313 = vmatpush1.bf16.msra.mxu0 0
  %1314 = vmatprep.subr.bf16.mxu0 0
  %1315 = vmatpush1.bf16.msra.mxu0 0
  %1316 = vmatprep.subr.bf16.mxu0 0
  %1317 = vmatpush1.bf16.msra.mxu0 0
  %1318 = vmatprep.mubr.bf16.mxu0 0
  %1319 = vmatmul.mubr.bf16.gmra.mrb[0].mxu0 %v1191
  %v1320 = vpop.f32.mrb[0].mxu0
  %v1321 = vadd.f32 0.0, %v1320
  %v1322 = vpop.f32.mrb[0].mxu0
  %v1323 = vadd.f32 0.0, %v1322
  %v1324 = vpop.f32.mrb[0].mxu0
  %v1325 = vpop.f32.mrb[0].mxu0
  %1326 = vdwg.mxu0
  %v1327 = vadd.f32 %v1236, %v1321
  %v1328 = vadd.f32 %v1237, %v1323
  %v1329 = vxor.u32 %v1327, 2147483648
  %v1330 = vmul.f32 %v1329, 1.442695
  %v1331 = vpow.pop %v1330
  %v1332 = vadd.f32 %v1331, 1.0
  %v1333 = vrcp.pop %v1332
  %v1334 = vmul.f32 1.0, %v1333
  %v1335 = vxor.u32 %v1328, 2147483648
  %v1336 = vmul.f32 %v1335, 1.442695
  %v1337 = vpow.pop %v1336
  %v1338 = vadd.f32 %v1337, 1.0
  %v1339 = vrcp.pop %v1338
  %v1340 = vmul.f32 1.0, %v1339
  %v1341 = vtanh.pop %v1328
  %v1342 = vmul.f32 %v1334, %v1126
  %v1343 = vmul.f32 %v1334, %v1341
  %1345 = vrot.lane.b32.xlu0 %v1343, 64
  %v1346 = vpop.permute.xlu0 %1345
  %v1348 = vadd.f32 %v1342, %v1346
  %v1349 = vtanh.pop %v1348
  %v1350 = vmul.f32 %v1340, %v1349
  %v1351 = vpack.c.bf16 %v1350, %v1350
  %v1352 = vld [vmem:[%s6] sm:$0xff]
  %v1353 = vld [vmem:[%s6 + $0x8] sm:$0xff]
  %v1354 = vld [vmem:[%s6 + $0x10] sm:$0xff]
  %v1355 = vld [vmem:[%s6 + $0x18] sm:$0xff]
  %v1356 = vld [vmem:[%s6 + $0x20] sm:$0xff]
  %v1357 = vld [vmem:[%s6 + $0x28] sm:$0xff]
  %v1358 = vld [vmem:[%s6 + $0x30] sm:$0xff]
  %v1359 = vld [vmem:[%s6 + $0x38] sm:$0xff]
  %v1360 = vld [vmem:[%s8] sm:$0x3]
  %v1362 = vlaneseq
  %v1363 = vshrl.u32 %v1362, 7
  %v1364 = vsub.s32 0, %v1363
  %v1365 = vrot.slane %v1360, %v1364
  %v1366 = vlaneseq
  %v1367 = vshrl.u32 %v1366, 7
  %v1368 = vsub.s32 1, %v1367
  %v1369 = vrot.slane %v1360, %v1368
  %v1380 = vunpack.c.l.b16 %v1352
  %v1381 = vunpack.c.h.b16 %v1352
  %v1382 = vunpack.c.l.b16 %v1353
  %v1383 = vunpack.c.h.b16 %v1353
  %v1384 = vunpack.c.l.b16 %v1354
  %v1385 = vunpack.c.h.b16 %v1354
  %v1386 = vunpack.c.l.b16 %v1355
  %v1387 = vunpack.c.h.b16 %v1355
  %v1388 = vunpack.c.l.b16 %v1356
  %v1389 = vunpack.c.h.b16 %v1356
  %v1390 = vunpack.c.l.b16 %v1357
  %v1391 = vunpack.c.h.b16 %v1357
  %v1392 = vunpack.c.l.b16 %v1358
  %v1393 = vunpack.c.h.b16 %v1358
  %v1394 = vunpack.c.l.b16 %v1359
  %v1395 = vunpack.c.h.b16 %v1359
  %v1396 = vpack.c.b16 %v1382, %v1380
  %v1397 = vpack.c.b16 %v1383, %v1381
  %v1398 = vpack.c.b16 %v1386, %v1384
  %v1399 = vpack.c.b16 %v1387, %v1385
  %v1400 = vpack.c.b16 %v1390, %v1388
  %v1401 = vpack.c.b16 %v1391, %v1389
  %v1402 = vpack.c.b16 %v1394, %v1392
  %v1403 = vpack.c.b16 %v1395, %v1393
  %v1413 = vsel %vm260, %v1351, 0
  %1415 = vmatprep.subr.bf16.mxu0 %v1397
  %1416 = vmatpush1.bf16.msra.mxu0 %v1396
  %1417 = vmatprep.subr.bf16.mxu0 %v1399
  %1418 = vmatpush1.bf16.msra.mxu0 %v1398
  %1419 = vmatprep.subr.bf16.mxu0 %v1401
  %1420 = vmatpush1.bf16.msra.mxu0 %v1400
  %1421 = vmatprep.subr.bf16.mxu0 %v1403
  %1422 = vmatpush1.bf16.msra.mxu0 %v1402
  %1423 = vmatprep.subr.bf16.mxu0 0
  %1424 = vmatpush1.bf16.msra.mxu0 0
  %1425 = vmatprep.subr.bf16.mxu0 0
  %1426 = vmatpush1.bf16.msra.mxu0 0
  %1427 = vmatprep.subr.bf16.mxu0 0
  %1428 = vmatpush1.bf16.msra.mxu0 0
  %1429 = vmatprep.subr.bf16.mxu0 0
  %1430 = vmatpush1.bf16.msra.mxu0 0
  %1431 = vmatprep.subr.bf16.mxu0 0
  %1432 = vmatpush1.bf16.msra.mxu0 0
  %1433 = vmatprep.subr.bf16.mxu0 0
  %1434 = vmatpush1.bf16.msra.mxu0 0
  %1435 = vmatprep.subr.bf16.mxu0 0
  %1436 = vmatpush1.bf16.msra.mxu0 0
  %1437 = vmatprep.subr.bf16.mxu0 0
  %1438 = vmatpush1.bf16.msra.mxu0 0
  %1439 = vmatprep.subr.bf16.mxu0 0
  %1440 = vmatpush1.bf16.msra.mxu0 0
  %1441 = vmatprep.subr.bf16.mxu0 0
  %1442 = vmatpush1.bf16.msra.mxu0 0
  %1443 = vmatprep.subr.bf16.mxu0 0
  %1444 = vmatpush1.bf16.msra.mxu0 0
  %1445 = vmatprep.subr.bf16.mxu0 0
  %1446 = vmatpush1.bf16.msra.mxu0 0
  %1447 = vmatprep.mubr.bf16.mxu0 0
  %1448 = vmatmul.mubr.bf16.gmra.mrb[0].mxu0 %v1413
  %v1449 = vpop.f32.mrb[0].mxu0
  %v1450 = vadd.f32 %v1365, %v1449
  %v1451 = vpop.f32.mrb[0].mxu0
  %v1452 = vadd.f32 %v1369, %v1451
  %v1453 = vpop.f32.mrb[0].mxu0
  %v1454 = vpop.f32.mrb[0].mxu0
  %1455 = vdwg.mxu0
  %1456 = vst [vmem:[#allocation3 + $0x40] sm:$0xff] %v1450
  %1457 = vst [vmem:[#allocation3 + $0x48] sm:$0xff] %v1452
  %v1458 = vld [vmem:[#allocation2 + $0x50] sm:$0xff]
  %v1459 = vld [vmem:[#allocation2 + $0x58] sm:$0xff]
  %v1460 = vld [vmem:[%s4] sm:$0xff]
  %v1461 = vld [vmem:[%s4 + $0x8] sm:$0xff]
  %v1462 = vld [vmem:[%s4 + $0x10] sm:$0xff]
  %v1463 = vld [vmem:[%s4 + $0x18] sm:$0xff]
  %v1464 = vld [vmem:[%s4 + $0x20] sm:$0xff]
  %v1465 = vld [vmem:[%s4 + $0x28] sm:$0xff]
  %v1466 = vld [vmem:[%s4 + $0x30] sm:$0xff]
  %v1467 = vld [vmem:[%s4 + $0x38] sm:$0xff]
  %v1476 = vunpack.c.l.b16 %v1460
  %v1477 = vunpack.c.h.b16 %v1460
  %v1478 = vunpack.c.l.b16 %v1461
  %v1479 = vunpack.c.h.b16 %v1461
  %v1480 = vunpack.c.l.b16 %v1462
  %v1481 = vunpack.c.h.b16 %v1462
  %v1482 = vunpack.c.l.b16 %v1463
  %v1483 = vunpack.c.h.b16 %v1463
  %v1484 = vunpack.c.l.b16 %v1464
  %v1485 = vunpack.c.h.b16 %v1464
  %v1486 = vunpack.c.l.b16 %v1465
  %v1487 = vunpack.c.h.b16 %v1465
  %v1488 = vunpack.c.l.b16 %v1466
  %v1489 = vunpack.c.h.b16 %v1466
  %v1490 = vunpack.c.l.b16 %v1467
  %v1491 = vunpack.c.h.b16 %v1467
  %v1492 = vpack.c.b16 %v1478, %v1476
  %v1493 = vpack.c.b16 %v1479, %v1477
  %v1494 = vpack.c.b16 %v1482, %v1480
  %v1495 = vpack.c.b16 %v1483, %v1481
  %v1496 = vpack.c.b16 %v1486, %v1484
  %v1497 = vpack.c.b16 %v1487, %v1485
  %v1498 = vpack.c.b16 %v1490, %v1488
  %v1499 = vpack.c.b16 %v1491, %v1489
  %1508 = vmatprep.subr.bf16.mxu0 %v1493
  %1509 = vmatpush1.bf16.msra.mxu0 %v1492
  %1510 = vmatprep.subr.bf16.mxu0 %v1495
  %1511 = vmatpush1.bf16.msra.mxu0 %v1494
  %1512 = vmatprep.subr.bf16.mxu0 %v1497
  %1513 = vmatpush1.bf16.msra.mxu0 %v1496
  %1514 = vmatprep.subr.bf16.mxu0 %v1499
  %1515 = vmatpush1.bf16.msra.mxu0 %v1498
  %1516 = vmatprep.subr.bf16.mxu0 0
  %1517 = vmatpush1.bf16.msra.mxu0 0
  %1518 = vmatprep.subr.bf16.mxu0 0
  %1519 = vmatpush1.bf16.msra.mxu0 0
  %1520 = vmatprep.subr.bf16.mxu0 0
  %1521 = vmatpush1.bf16.msra.mxu0 0
  %1522 = vmatprep.subr.bf16.mxu0 0
  %1523 = vmatpush1.bf16.msra.mxu0 0
  %1524 = vmatprep.subr.bf16.mxu0 0
  %1525 = vmatpush1.bf16.msra.mxu0 0
  %1526 = vmatprep.subr.bf16.mxu0 0
  %1527 = vmatpush1.bf16.msra.mxu0 0
  %1528 = vmatprep.subr.bf16.mxu0 0
  %1529 = vmatpush1.bf16.msra.mxu0 0
  %1530 = vmatprep.subr.bf16.mxu0 0
  %1531 = vmatpush1.bf16.msra.mxu0 0
  %1532 = vmatprep.subr.bf16.mxu0 0
  %1533 = vmatpush1.bf16.msra.mxu0 0
  %1534 = vmatprep.subr.bf16.mxu0 0
  %1535 = vmatpush1.bf16.msra.mxu0 0
  %1536 = vmatprep.subr.bf16.mxu0 0
  %1537 = vmatpush1.bf16.msra.mxu0 0
  %1538 = vmatprep.subr.bf16.mxu0 0
  %1539 = vmatpush1.bf16.msra.mxu0 0
  %1540 = vmatprep.mubr.bf16.mxu0 0
  %1541 = vmatmul.mubr.bf16.gmra.mrb[0].mxu0 %v1413
  %v1542 = vpop.f32.mrb[0].mxu0
  %v1543 = vadd.f32 0.0, %v1542
  %v1544 = vpop.f32.mrb[0].mxu0
  %v1545 = vadd.f32 0.0, %v1544
  %v1546 = vpop.f32.mrb[0].mxu0
  %v1547 = vpop.f32.mrb[0].mxu0
  %1548 = vdwg.mxu0
  %v1549 = vadd.f32 %v1458, %v1543
  %v1550 = vadd.f32 %v1459, %v1545
  %v1551 = vxor.u32 %v1549, 2147483648
  %v1552 = vmul.f32 %v1551, 1.442695
  %v1553 = vpow.pop %v1552
  %v1554 = vadd.f32 %v1553, 1.0
  %v1555 = vrcp.pop %v1554
  %v1556 = vmul.f32 1.0, %v1555
  %v1557 = vxor.u32 %v1550, 2147483648
  %v1558 = vmul.f32 %v1557, 1.442695
  %v1559 = vpow.pop %v1558
  %v1560 = vadd.f32 %v1559, 1.0
  %v1561 = vrcp.pop %v1560
  %v1562 = vmul.f32 1.0, %v1561
  %v1563 = vtanh.pop %v1550
  %v1564 = vmul.f32 %v1556, %v1348
  %v1565 = vmul.f32 %v1556, %v1563
  %1567 = vrot.lane.b32.xlu0 %v1565, 64
  %v1568 = vpop.permute.xlu0 %1567
  %v1570 = vadd.f32 %v1564, %v1568
  %v1571 = vtanh.pop %v1570
  %v1572 = vmul.f32 %v1562, %v1571
  %v1573 = vpack.c.bf16 %v1572, %v1572
  %v1574 = vld [vmem:[%s6] sm:$0xff]
  %v1575 = vld [vmem:[%s6 + $0x8] sm:$0xff]
  %v1576 = vld [vmem:[%s6 + $0x10] sm:$0xff]
  %v1577 = vld [vmem:[%s6 + $0x18] sm:$0xff]
  %v1578 = vld [vmem:[%s6 + $0x20] sm:$0xff]
  %v1579 = vld [vmem:[%s6 + $0x28] sm:$0xff]
  %v1580 = vld [vmem:[%s6 + $0x30] sm:$0xff]
  %v1581 = vld [vmem:[%s6 + $0x38] sm:$0xff]
  %v1582 = vld [vmem:[%s8] sm:$0x3]
  %v1584 = vlaneseq
  %v1585 = vshrl.u32 %v1584, 7
  %v1586 = vsub.s32 0, %v1585
  %v1587 = vrot.slane %v1582, %v1586
  %v1588 = vlaneseq
  %v1589 = vshrl.u32 %v1588, 7
  %v1590 = vsub.s32 1, %v1589
  %v1591 = vrot.slane %v1582, %v1590
  %v1602 = vunpack.c.l.b16 %v1574
  %v1603 = vunpack.c.h.b16 %v1574
  %v1604 = vunpack.c.l.b16 %v1575
  %v1605 = vunpack.c.h.b16 %v1575
  %v1606 = vunpack.c.l.b16 %v1576
  %v1607 = vunpack.c.h.b16 %v1576
  %v1608 = vunpack.c.l.b16 %v1577
  %v1609 = vunpack.c.h.b16 %v1577
  %v1610 = vunpack.c.l.b16 %v1578
  %v1611 = vunpack.c.h.b16 %v1578
  %v1612 = vunpack.c.l.b16 %v1579
  %v1613 = vunpack.c.h.b16 %v1579
  %v1614 = vunpack.c.l.b16 %v1580
  %v1615 = vunpack.c.h.b16 %v1580
  %v1616 = vunpack.c.l.b16 %v1581
  %v1617 = vunpack.c.h.b16 %v1581
  %v1618 = vpack.c.b16 %v1604, %v1602
  %v1619 = vpack.c.b16 %v1605, %v1603
  %v1620 = vpack.c.b16 %v1608, %v1606
  %v1621 = vpack.c.b16 %v1609, %v1607
  %v1622 = vpack.c.b16 %v1612, %v1610
  %v1623 = vpack.c.b16 %v1613, %v1611
  %v1624 = vpack.c.b16 %v1616, %v1614
  %v1625 = vpack.c.b16 %v1617, %v1615
  %v1635 = vsel %vm260, %v1573, 0
  %1637 = vmatprep.subr.bf16.mxu0 %v1619
  %1638 = vmatpush1.bf16.msra.mxu0 %v1618
  %1639 = vmatprep.subr.bf16.mxu0 %v1621
  %1640 = vmatpush1.bf16.msra.mxu0 %v1620
  %1641 = vmatprep.subr.bf16.mxu0 %v1623
  %1642 = vmatpush1.bf16.msra.mxu0 %v1622
  %1643 = vmatprep.subr.bf16.mxu0 %v1625
  %1644 = vmatpush1.bf16.msra.mxu0 %v1624
  %1645 = vmatprep.subr.bf16.mxu0 0
  %1646 = vmatpush1.bf16.msra.mxu0 0
  %1647 = vmatprep.subr.bf16.mxu0 0
  %1648 = vmatpush1.bf16.msra.mxu0 0
  %1649 = vmatprep.subr.bf16.mxu0 0
  %1650 = vmatpush1.bf16.msra.mxu0 0
  %1651 = vmatprep.subr.bf16.mxu0 0
  %1652 = vmatpush1.bf16.msra.mxu0 0
  %1653 = vmatprep.subr.bf16.mxu0 0
  %1654 = vmatpush1.bf16.msra.mxu0 0
  %1655 = vmatprep.subr.bf16.mxu0 0
  %1656 = vmatpush1.bf16.msra.mxu0 0
  %1657 = vmatprep.subr.bf16.mxu0 0
  %1658 = vmatpush1.bf16.msra.mxu0 0
  %1659 = vmatprep.subr.bf16.mxu0 0
  %1660 = vmatpush1.bf16.msra.mxu0 0
  %1661 = vmatprep.subr.bf16.mxu0 0
  %1662 = vmatpush1.bf16.msra.mxu0 0
  %1663 = vmatprep.subr.bf16.mxu0 0
  %1664 = vmatpush1.bf16.msra.mxu0 0
  %1665 = vmatprep.subr.bf16.mxu0 0
  %1666 = vmatpush1.bf16.msra.mxu0 0
  %1667 = vmatprep.subr.bf16.mxu0 0
  %1668 = vmatpush1.bf16.msra.mxu0 0
  %1669 = vmatprep.mubr.bf16.mxu0 0
  %1670 = vmatmul.mubr.bf16.gmra.mrb[0].mxu0 %v1635
  %v1671 = vpop.f32.mrb[0].mxu0
  %v1672 = vadd.f32 %v1587, %v1671
  %v1673 = vpop.f32.mrb[0].mxu0
  %v1674 = vadd.f32 %v1591, %v1673
  %v1675 = vpop.f32.mrb[0].mxu0
  %v1676 = vpop.f32.mrb[0].mxu0
  %1677 = vdwg.mxu0
  %1678 = vst [vmem:[#allocation3 + $0x50] sm:$0xff] %v1672
  %1679 = vst [vmem:[#allocation3 + $0x58] sm:$0xff] %v1674
  %v1680 = vld [vmem:[#allocation3] sm:$0xff]
  %v1681 = vld [vmem:[#allocation3 + $0x8] sm:$0xff]
  %v1682 = vld [vmem:[%s7] sm:$0xff]
  %v1683 = vld [vmem:[%s7 + $0x8] sm:$0xff]
  %v1684 = vld [vmem:[%s7 + $0x10] sm:$0xff]
  %v1685 = vld [vmem:[%s7 + $0x18] sm:$0xff]
  %v1686 = vld [vmem:[%s7 + $0x20] sm:$0xff]
  %v1687 = vld [vmem:[%s7 + $0x28] sm:$0xff]
  %v1688 = vld [vmem:[%s7 + $0x30] sm:$0xff]
  %v1689 = vld [vmem:[%s7 + $0x38] sm:$0xff]
  %v1698 = vunpack.c.l.b16 %v1682
  %v1699 = vunpack.c.h.b16 %v1682
  %v1700 = vunpack.c.l.b16 %v1683
  %v1701 = vunpack.c.h.b16 %v1683
  %v1702 = vunpack.c.l.b16 %v1684
  %v1703 = vunpack.c.h.b16 %v1684
  %v1704 = vunpack.c.l.b16 %v1685
  %v1705 = vunpack.c.h.b16 %v1685
  %v1706 = vunpack.c.l.b16 %v1686
  %v1707 = vunpack.c.h.b16 %v1686
  %v1708 = vunpack.c.l.b16 %v1687
  %v1709 = vunpack.c.h.b16 %v1687
  %v1710 = vunpack.c.l.b16 %v1688
  %v1711 = vunpack.c.h.b16 %v1688
  %v1712 = vunpack.c.l.b16 %v1689
  %v1713 = vunpack.c.h.b16 %v1689
  %v1714 = vpack.c.b16 %v1700, %v1698
  %v1715 = vpack.c.b16 %v1701, %v1699
  %v1716 = vpack.c.b16 %v1704, %v1702
  %v1717 = vpack.c.b16 %v1705, %v1703
  %v1718 = vpack.c.b16 %v1708, %v1706
  %v1719 = vpack.c.b16 %v1709, %v1707
  %v1720 = vpack.c.b16 %v1712, %v1710
  %v1721 = vpack.c.b16 %v1713, %v1711
  %1730 = vmatprep.subr.bf16.mxu0 %v1715
  %1731 = vmatpush1.bf16.msra.mxu0 %v1714
  %1732 = vmatprep.subr.bf16.mxu0 %v1717
  %1733 = vmatpush1.bf16.msra.mxu0 %v1716
  %1734 = vmatprep.subr.bf16.mxu0 %v1719
  %1735 = vmatpush1.bf16.msra.mxu0 %v1718
  %1736 = vmatprep.subr.bf16.mxu0 %v1721
  %1737 = vmatpush1.bf16.msra.mxu0 %v1720
  %1738 = vmatprep.subr.bf16.mxu0 0
  %1739 = vmatpush1.bf16.msra.mxu0 0
  %1740 = vmatprep.subr.bf16.mxu0 0
  %1741 = vmatpush1.bf16.msra.mxu0 0
  %1742 = vmatprep.subr.bf16.mxu0 0
  %1743 = vmatpush1.bf16.msra.mxu0 0
  %1744 = vmatprep.subr.bf16.mxu0 0
  %1745 = vmatpush1.bf16.msra.mxu0 0
  %1746 = vmatprep.subr.bf16.mxu0 0
  %1747 = vmatpush1.bf16.msra.mxu0 0
  %1748 = vmatprep.subr.bf16.mxu0 0
  %1749 = vmatpush1.bf16.msra.mxu0 0
  %1750 = vmatprep.subr.bf16.mxu0 0
  %1751 = vmatpush1.bf16.msra.mxu0 0
  %1752 = vmatprep.subr.bf16.mxu0 0
  %1753 = vmatpush1.bf16.msra.mxu0 0
  %1754 = vmatprep.subr.bf16.mxu0 0
  %1755 = vmatpush1.bf16.msra.mxu0 0
  %1756 = vmatprep.subr.bf16.mxu0 0
  %1757 = vmatpush1.bf16.msra.mxu0 0
  %1758 = vmatprep.subr.bf16.mxu0 0
  %1759 = vmatpush1.bf16.msra.mxu0 0
  %1760 = vmatprep.subr.bf16.mxu0 0
  %1761 = vmatpush1.bf16.msra.mxu0 0
  %1762 = vmatprep.mubr.bf16.mxu0 0
  %1763 = vmatmul.mubr.bf16.gmra.mrb[0].mxu0 %v396
  %v1764 = vpop.f32.mrb[0].mxu0
  %v1765 = vadd.f32 0.0, %v1764
  %v1766 = vpop.f32.mrb[0].mxu0
  %v1767 = vadd.f32 0.0, %v1766
  %v1768 = vpop.f32.mrb[0].mxu0
  %v1769 = vpop.f32.mrb[0].mxu0
  %1770 = vdwg.mxu0
  %v1771 = vadd.f32 %v1680, %v1765
  %v1772 = vadd.f32 %v1681, %v1767
  %v1773 = vxor.u32 %v1771, 2147483648
  %v1774 = vmul.f32 %v1773, 1.442695
  %v1775 = vpow.pop %v1774
  %v1776 = vadd.f32 %v1775, 1.0
  %v1777 = vrcp.pop %v1776
  %v1778 = vmul.f32 1.0, %v1777
  %v1779 = vxor.u32 %v1772, 2147483648
  %v1780 = vmul.f32 %v1779, 1.442695
  %v1781 = vpow.pop %v1780
  %v1782 = vadd.f32 %v1781, 1.0
  %v1783 = vrcp.pop %v1782
  %v1784 = vmul.f32 1.0, %v1783
  %v1785 = vtanh.pop %v1772
  %v1786 = vmul.f32 %v1778, 0.0
  %v1787 = vmul.f32 %v1778, %v1785
  %1789 = vrot.lane.b32.xlu0 %v1787, 64
  %v1790 = vpop.permute.xlu0 %1789
  %v1792 = vadd.f32 %v1786, %v1790
  %v1793 = vtanh.pop %v1792
  %v1794 = vmul.f32 %v1784, %v1793
  %v1795 = vpack.c.bf16 %v1794, %v1794
  %v1796 = vld [vmem:[%s9] sm:$0xff]
  %v1797 = vld [vmem:[%s9 + $0x8] sm:$0xff]
  %v1798 = vld [vmem:[%s9 + $0x10] sm:$0xff]
  %v1799 = vld [vmem:[%s9 + $0x18] sm:$0xff]
  %v1800 = vld [vmem:[%s9 + $0x20] sm:$0xff]
  %v1801 = vld [vmem:[%s9 + $0x28] sm:$0xff]
  %v1802 = vld [vmem:[%s9 + $0x30] sm:$0xff]
  %v1803 = vld [vmem:[%s9 + $0x38] sm:$0xff]
  %v1804 = vld [vmem:[%s9 + $0x40] sm:$0xff]
  %v1805 = vld [vmem:[%s9 + $0x48] sm:$0xff]
  %v1806 = vld [vmem:[%s9 + $0x50] sm:$0xff]
  %v1807 = vld [vmem:[%s9 + $0x58] sm:$0xff]
  %v1808 = vld [vmem:[%s9 + $0x60] sm:$0xff]
  %v1809 = vld [vmem:[%s9 + $0x68] sm:$0xff]
  %v1810 = vld [vmem:[%s9 + $0x70] sm:$0xff]
  %v1811 = vld [vmem:[%s9 + $0x78] sm:$0xff]
  %v1812 = vld [vmem:[%s9 + $0x80] sm:$0xff]
  %v1813 = vld [vmem:[%s9 + $0x88] sm:$0xff]
  %v1814 = vld [vmem:[%s9 + $0x90] sm:$0xff]
  %v1815 = vld [vmem:[%s9 + $0x98] sm:$0xff]
  %v1816 = vld [vmem:[%s9 + $0xa0] sm:$0xff]
  %v1817 = vld [vmem:[%s9 + $0xa8] sm:$0xff]
  %v1818 = vld [vmem:[%s9 + $0xb0] sm:$0xff]
  %v1819 = vld [vmem:[%s9 + $0xb8] sm:$0xff]
  %v1820 = vld [vmem:[%s10] sm:$0x3f]
  %v1822 = vlaneseq
  %v1823 = vshrl.u32 %v1822, 7
  %v1824 = vsub.s32 0, %v1823
  %v1825 = vrot.slane %v1820, %v1824
  %v1826 = vlaneseq
  %v1827 = vshrl.u32 %v1826, 7
  %v1828 = vsub.s32 1, %v1827
  %v1829 = vrot.slane %v1820, %v1828
  %v1830 = vlaneseq
  %v1831 = vshrl.u32 %v1830, 7
  %v1832 = vsub.s32 2, %v1831
  %v1833 = vrot.slane %v1820, %v1832
  %v1834 = vlaneseq
  %v1835 = vshrl.u32 %v1834, 7
  %v1836 = vsub.s32 3, %v1835
  %v1837 = vrot.slane %v1820, %v1836
  %v1838 = vlaneseq
  %v1839 = vshrl.u32 %v1838, 7
  %v1840 = vsub.s32 4, %v1839
  %v1841 = vrot.slane %v1820, %v1840
  %v1842 = vlaneseq
  %v1843 = vshrl.u32 %v1842, 7
  %v1844 = vsub.s32 5, %v1843
  %v1845 = vrot.slane %v1820, %v1844
  %v1876 = vunpack.c.l.b16 %v1796
  %v1877 = vunpack.c.h.b16 %v1796
  %v1878 = vunpack.c.l.b16 %v1797
  %v1879 = vunpack.c.h.b16 %v1797
  %v1880 = vunpack.c.l.b16 %v1798
  %v1881 = vunpack.c.h.b16 %v1798
  %v1882 = vunpack.c.l.b16 %v1799
  %v1883 = vunpack.c.h.b16 %v1799
  %v1884 = vunpack.c.l.b16 %v1800
  %v1885 = vunpack.c.h.b16 %v1800
  %v1886 = vunpack.c.l.b16 %v1801
  %v1887 = vunpack.c.h.b16 %v1801
  %v1888 = vunpack.c.l.b16 %v1802
  %v1889 = vunpack.c.h.b16 %v1802
  %v1890 = vunpack.c.l.b16 %v1803
  %v1891 = vunpack.c.h.b16 %v1803
  %v1892 = vunpack.c.l.b16 %v1804
  %v1893 = vunpack.c.h.b16 %v1804
  %v1894 = vunpack.c.l.b16 %v1805
  %v1895 = vunpack.c.h.b16 %v1805
  %v1896 = vunpack.c.l.b16 %v1806
  %v1897 = vunpack.c.h.b16 %v1806
  %v1898 = vunpack.c.l.b16 %v1807
  %v1899 = vunpack.c.h.b16 %v1807
  %v1900 = vunpack.c.l.b16 %v1808
  %v1901 = vunpack.c.h.b16 %v1808
  %v1902 = vunpack.c.l.b16 %v1809
  %v1903 = vunpack.c.h.b16 %v1809
  %v1904 = vunpack.c.l.b16 %v1810
  %v1905 = vunpack.c.h.b16 %v1810
  %v1906 = vunpack.c.l.b16 %v1811
  %v1907 = vunpack.c.h.b16 %v1811
  %v1908 = vunpack.c.l.b16 %v1812
  %v1909 = vunpack.c.h.b16 %v1812
  %v1910 = vunpack.c.l.b16 %v1813
  %v1911 = vunpack.c.h.b16 %v1813
  %v1912 = vunpack.c.l.b16 %v1814
  %v1913 = vunpack.c.h.b16 %v1814
  %v1914 = vunpack.c.l.b16 %v1815
  %v1915 = vunpack.c.h.b16 %v1815
  %v1916 = vunpack.c.l.b16 %v1816
  %v1917 = vunpack.c.h.b16 %v1816
  %v1918 = vunpack.c.l.b16 %v1817
  %v1919 = vunpack.c.h.b16 %v1817
  %v1920 = vunpack.c.l.b16 %v1818
  %v1921 = vunpack.c.h.b16 %v1818
  %v1922 = vunpack.c.l.b16 %v1819
  %v1923 = vunpack.c.h.b16 %v1819
  %v1924 = vpack.c.b16 %v1882, %v1876
  %v1925 = vpack.c.b16 %v1883, %v1877
  %v1926 = vpack.c.b16 %v1884, %v1878
  %v1927 = vpack.c.b16 %v1885, %v1879
  %v1928 = vpack.c.b16 %v1886, %v1880
  %v1929 = vpack.c.b16 %v1887, %v1881
  %v1930 = vpack.c.b16 %v1894, %v1888
  %v1931 = vpack.c.b16 %v1895, %v1889
  %v1932 = vpack.c.b16 %v1896, %v1890
  %v1933 = vpack.c.b16 %v1897, %v1891
  %v1934 = vpack.c.b16 %v1898, %v1892
  %v1935 = vpack.c.b16 %v1899, %v1893
  %v1936 = vpack.c.b16 %v1906, %v1900
  %v1937 = vpack.c.b16 %v1907, %v1901
  %v1938 = vpack.c.b16 %v1908, %v1902
  %v1939 = vpack.c.b16 %v1909, %v1903
  %v1940 = vpack.c.b16 %v1910, %v1904
  %v1941 = vpack.c.b16 %v1911, %v1905
  %v1942 = vpack.c.b16 %v1918, %v1912
  %v1943 = vpack.c.b16 %v1919, %v1913
  %v1944 = vpack.c.b16 %v1920, %v1914
  %v1945 = vpack.c.b16 %v1921, %v1915
  %v1946 = vpack.c.b16 %v1922, %v1916
  %v1947 = vpack.c.b16 %v1923, %v1917
  %v1973 = vsel %vm260, %v1795, 0
  %1975 = vmatprep.subr.bf16.mxu0 %v1925
  %1976 = vmatpush1.bf16.msra.mxu0 %v1924
  %1977 = vmatprep.subr.bf16.mxu0 %v1931
  %1978 = vmatpush1.bf16.msra.mxu0 %v1930
  %1979 = vmatprep.subr.bf16.mxu0 %v1937
  %1980 = vmatpush1.bf16.msra.mxu0 %v1936
  %1981 = vmatprep.subr.bf16.mxu0 %v1943
  %1982 = vmatpush1.bf16.msra.mxu0 %v1942
  %1983 = vmatprep.subr.bf16.mxu0 0
  %1984 = vmatpush1.bf16.msra.mxu0 0
  %1985 = vmatprep.subr.bf16.mxu0 0
  %1986 = vmatpush1.bf16.msra.mxu0 0
  %1987 = vmatprep.subr.bf16.mxu0 0
  %1988 = vmatpush1.bf16.msra.mxu0 0
  %1989 = vmatprep.subr.bf16.mxu0 0
  %1990 = vmatpush1.bf16.msra.mxu0 0
  %1991 = vmatprep.subr.bf16.mxu0 0
  %1992 = vmatpush1.bf16.msra.mxu0 0
  %1993 = vmatprep.subr.bf16.mxu0 0
  %1994 = vmatpush1.bf16.msra.mxu0 0
  %1995 = vmatprep.subr.bf16.mxu0 0
  %1996 = vmatpush1.bf16.msra.mxu0 0
  %1997 = vmatprep.subr.bf16.mxu0 0
  %1998 = vmatpush1.bf16.msra.mxu0 0
  %1999 = vmatprep.subr.bf16.mxu0 0
  %2000 = vmatpush1.bf16.msra.mxu0 0
  %2001 = vmatprep.subr.bf16.mxu0 0
  %2002 = vmatpush1.bf16.msra.mxu0 0
  %2003 = vmatprep.subr.bf16.mxu0 0
  %2004 = vmatpush1.bf16.msra.mxu0 0
  %2005 = vmatprep.subr.bf16.mxu0 0
  %2006 = vmatpush1.bf16.msra.mxu0 0
  %2007 = vmatprep.mubr.bf16.mxu0 0
  %2008 = vmatmul.mubr.bf16.gmra.mrb[0].mxu0 %v1973
  %v2009 = vpop.f32.mrb[0].mxu0
  %v2010 = vadd.f32 %v1825, %v2009
  %v2011 = vpop.f32.mrb[0].mxu0
  %v2012 = vadd.f32 %v1829, %v2011
  %v2013 = vpop.f32.mrb[0].mxu0
  %v2014 = vpop.f32.mrb[0].mxu0
  %2015 = vdwg.mxu0
  %2016 = vmatprep.subr.bf16.mxu0 %v1927
  %2017 = vmatpush1.bf16.msra.mxu0 %v1926
  %2018 = vmatprep.subr.bf16.mxu0 %v1933
  %2019 = vmatpush1.bf16.msra.mxu0 %v1932
  %2020 = vmatprep.subr.bf16.mxu0 %v1939
  %2021 = vmatpush1.bf16.msra.mxu0 %v1938
  %2022 = vmatprep.subr.bf16.mxu0 %v1945
  %2023 = vmatpush1.bf16.msra.mxu0 %v1944
  %2024 = vmatprep.subr.bf16.mxu0 0
  %2025 = vmatpush1.bf16.msra.mxu0 0
  %2026 = vmatprep.subr.bf16.mxu0 0
  %2027 = vmatpush1.bf16.msra.mxu0 0
  %2028 = vmatprep.subr.bf16.mxu0 0
  %2029 = vmatpush1.bf16.msra.mxu0 0
  %2030 = vmatprep.subr.bf16.mxu0 0
  %2031 = vmatpush1.bf16.msra.mxu0 0
  %2032 = vmatprep.subr.bf16.mxu0 0
  %2033 = vmatpush1.bf16.msra.mxu0 0
  %2034 = vmatprep.subr.bf16.mxu0 0
  %2035 = vmatpush1.bf16.msra.mxu0 0
  %2036 = vmatprep.subr.bf16.mxu0 0
  %2037 = vmatpush1.bf16.msra.mxu0 0
  %2038 = vmatprep.subr.bf16.mxu0 0
  %2039 = vmatpush1.bf16.msra.mxu0 0
  %2040 = vmatprep.subr.bf16.mxu0 0
  %2041 = vmatpush1.bf16.msra.mxu0 0
  %2042 = vmatprep.subr.bf16.mxu0 0
  %2043 = vmatpush1.bf16.msra.mxu0 0
  %2044 = vmatprep.subr.bf16.mxu0 0
  %2045 = vmatpush1.bf16.msra.mxu0 0
  %2046 = vmatprep.subr.bf16.mxu0 0
  %2047 = vmatpush1.bf16.msra.mxu0 0
  %2048 = vmatprep.mubr.bf16.mxu0 0
  %2049 = vmatmul.mubr.bf16.gmra.mrb[0].mxu0 %v1973
  %v2050 = vpop.f32.mrb[0].mxu0
  %v2051 = vadd.f32 %v1833, %v2050
  %v2052 = vpop.f32.mrb[0].mxu0
  %v2053 = vadd.f32 %v1837, %v2052
  %v2054 = vpop.f32.mrb[0].mxu0
  %v2055 = vpop.f32.mrb[0].mxu0
  %2056 = vdwg.mxu0
  %2057 = vmatprep.subr.bf16.mxu0 %v1929
  %2058 = vmatpush1.bf16.msra.mxu0 %v1928
  %2059 = vmatprep.subr.bf16.mxu0 %v1935
  %2060 = vmatpush1.bf16.msra.mxu0 %v1934
  %2061 = vmatprep.subr.bf16.mxu0 %v1941
  %2062 = vmatpush1.bf16.msra.mxu0 %v1940
  %2063 = vmatprep.subr.bf16.mxu0 %v1947
  %2064 = vmatpush1.bf16.msra.mxu0 %v1946
  %2065 = vmatprep.subr.bf16.mxu0 0
  %2066 = vmatpush1.bf16.msra.mxu0 0
  %2067 = vmatprep.subr.bf16.mxu0 0
  %2068 = vmatpush1.bf16.msra.mxu0 0
  %2069 = vmatprep.subr.bf16.mxu0 0
  %2070 = vmatpush1.bf16.msra.mxu0 0
  %2071 = vmatprep.subr.bf16.mxu0 0
  %2072 = vmatpush1.bf16.msra.mxu0 0
  %2073 = vmatprep.subr.bf16.mxu0 0
  %2074 = vmatpush1.bf16.msra.mxu0 0
  %2075 = vmatprep.subr.bf16.mxu0 0
  %2076 = vmatpush1.bf16.msra.mxu0 0
  %2077 = vmatprep.subr.bf16.mxu0 0
  %2078 = vmatpush1.bf16.msra.mxu0 0
  %2079 = vmatprep.subr.bf16.mxu0 0
  %2080 = vmatpush1.bf16.msra.mxu0 0
  %2081 = vmatprep.subr.bf16.mxu0 0
  %2082 = vmatpush1.bf16.msra.mxu0 0
  %2083 = vmatprep.subr.bf16.mxu0 0
  %2084 = vmatpush1.bf16.msra.mxu0 0
  %2085 = vmatprep.subr.bf16.mxu0 0
  %2086 = vmatpush1.bf16.msra.mxu0 0
  %2087 = vmatprep.subr.bf16.mxu0 0
  %2088 = vmatpush1.bf16.msra.mxu0 0
  %2089 = vmatprep.mubr.bf16.mxu0 0
  %2090 = vmatmul.mubr.bf16.gmra.mrb[0].mxu0 %v1973
  %v2091 = vpop.f32.mrb[0].mxu0
  %v2092 = vadd.f32 %v1841, %v2091
  %v2093 = vpop.f32.mrb[0].mxu0
  %v2094 = vadd.f32 %v1845, %v2093
  %v2095 = vpop.f32.mrb[0].mxu0
  %v2096 = vpop.f32.mrb[0].mxu0
  %2097 = vdwg.mxu0
  %2098 = vst [vmem:[%s11 + $0x20] sm:$0xff] %v2092
  %2099 = vst [vmem:[%s11 + $0x28] sm:$0xff] %v2094
  %v2100 = vmul.f32 %v2051, 1.442695
  %v2101 = vpow.pop %v2100
  %v2102 = vmul.f32 %v2053, 1.442695
  %v2103 = vpow.pop %v2102
  %v2104 = vmul.f32 %v2101, 1.118034
  %v2105 = vmul.f32 %v2103, 1.118034
  %2106 = vst [vmem:[%s11 + $0x10] sm:$0xff] %v2104
  %2107 = vst [vmem:[%s11 + $0x18] sm:$0xff] %v2105
  %2109 = vrot.lane.b32.xlu0 %v2010, 96
  %v2110 = vpop.permute.xlu0 %2109
  %v2112 = vmax.f32 %v2010, %v2110
  %2113 = vrot.lane.b32.xlu0 %v2010, 64
  %v2114 = vpop.permute.xlu0 %2113
  %v2116 = vmax.f32 %v2112, %v2114
  %2117 = vrot.lane.b32.xlu0 %v2010, 32
  %v2118 = vpop.permute.xlu0 %2117
  %v2120 = vmax.f32 %v2116, %v2118
  %v2121 = vmax.f32 %v2120, %v2012
  %v2122 = vsub.f32 %v2010, %v2121
  %v2123 = vmul.f32 %v2122, 1.442695
  %v2124 = vpow.pop %v2123
  %2126 = vrot.lane.b32.xlu0 %v2121, 32
  %v2127 = vpop.permute.xlu0 %2126
  %v2129 = vsub.f32 %v2010, %v2127
  %v2130 = vmul.f32 %v2129, 1.442695
  %v2131 = vpow.pop %v2130
  %2132 = vrot.lane.b32.xlu0 %v2121, 64
  %v2133 = vpop.permute.xlu0 %2132
  %v2135 = vsub.f32 %v2010, %v2133
  %v2136 = vmul.f32 %v2135, 1.442695
  %v2137 = vpow.pop %v2136
  %2138 = vrot.lane.b32.xlu0 %v2121, 96
  %v2139 = vpop.permute.xlu0 %2138
  %v2141 = vsub.f32 %v2010, %v2139
  %v2142 = vmul.f32 %v2141, 1.442695
  %v2143 = vpow.pop %v2142
  %v2144 = vsub.f32 %v2012, %v2121
  %v2145 = vmul.f32 %v2144, 1.442695
  %v2146 = vpow.pop %v2145
  %2148 = vrot.lane.b32.xlu0 %v2131, 96
  %v2149 = vpop.permute.xlu0 %2148
  %v2151 = vadd.f32 %v2124, %v2149
  %2153 = vrot.lane.b32.xlu0 %v2137, 64
  %v2154 = vpop.permute.xlu0 %2153
  %v2156 = vadd.f32 %v2151, %v2154
  %2158 = vrot.lane.b32.xlu0 %v2143, 32
  %v2159 = vpop.permute.xlu0 %2158
  %v2161 = vadd.f32 %v2156, %v2159
  %v2162 = vadd.f32 %v2161, %v2146
  %v2163 = vmul.f32 %v2162, 1.25
  %v2164 = vrcp.pop %v2163
  %v2165 = vmul.f32 %v2124, %v2164
  %2167 = vrot.lane.b32.xlu0 %v2164, 32
  %v2168 = vpop.permute.xlu0 %2167
  %v2170 = vmul.f32 %v2131, %v2168
  %2171 = vrot.lane.b32.xlu0 %v2164, 64
  %v2172 = vpop.permute.xlu0 %2171
  %v2174 = vmul.f32 %v2137, %v2172
  %2175 = vrot.lane.b32.xlu0 %v2164, 96
  %v2176 = vpop.permute.xlu0 %2175
  %v2178 = vmul.f32 %v2143, %v2176
  %v2179 = vmul.f32 %v2146, %v2164
  %vm2180 = vcmask 261120
  %v2181 = vsel %vm2180, %v2165, %v2170
  %v2182 = vsel %vm260, %v2181, %v2174
  %vm2183 = vcmask 785408
  %v2184 = vsel %vm2183, %v2182, %v2178
  %v2185 = vsel %vm2180, %v2179, 0.0
  %2186 = vst [vmem:[%s11] sm:$0xff] %v2184
  %2187 = vst [vmem:[%s11 + $0x8] sm:$0xff] %v2185
  %v2188 = vld [vmem:[#allocation3 + $0x10] sm:$0xff]
  %v2189 = vld [vmem:[#allocation3 + $0x18] sm:$0xff]
  %v2190 = vld [vmem:[%s7] sm:$0xff]
  %v2191 = vld [vmem:[%s7 + $0x8] sm:$0xff]
  %v2192 = vld [vmem:[%s7 + $0x10] sm:$0xff]
  %v2193 = vld [vmem:[%s7 + $0x18] sm:$0xff]
  %v2194 = vld [vmem:[%s7 + $0x20] sm:$0xff]
  %v2195 = vld [vmem:[%s7 + $0x28] sm:$0xff]
  %v2196 = vld [vmem:[%s7 + $0x30] sm:$0xff]
  %v2197 = vld [vmem:[%s7 + $0x38] sm:$0xff]
  %v2206 = vunpack.c.l.b16 %v2190
  %v2207 = vunpack.c.h.b16 %v2190
  %v2208 = vunpack.c.l.b16 %v2191
  %v2209 = vunpack.c.h.b16 %v2191
  %v2210 = vunpack.c.l.b16 %v2192
  %v2211 = vunpack.c.h.b16 %v2192
  %v2212 = vunpack.c.l.b16 %v2193
  %v2213 = vunpack.c.h.b16 %v2193
  %v2214 = vunpack.c.l.b16 %v2194
  %v2215 = vunpack.c.h.b16 %v2194
  %v2216 = vunpack.c.l.b16 %v2195
  %v2217 = vunpack.c.h.b16 %v2195
  %v2218 = vunpack.c.l.b16 %v2196
  %v2219 = vunpack.c.h.b16 %v2196
  %v2220 = vunpack.c.l.b16 %v2197
  %v2221 = vunpack.c.h.b16 %v2197
  %v2222 = vpack.c.b16 %v2208, %v2206
  %v2223 = vpack.c.b16 %v2209, %v2207
  %v2224 = vpack.c.b16 %v2212, %v2210
  %v2225 = vpack.c.b16 %v2213, %v2211
  %v2226 = vpack.c.b16 %v2216, %v2214
  %v2227 = vpack.c.b16 %v2217, %v2215
  %v2228 = vpack.c.b16 %v2220, %v2218
  %v2229 = vpack.c.b16 %v2221, %v2219
  %2238 = vmatprep.subr.bf16.mxu0 %v2223
  %2239 = vmatpush1.bf16.msra.mxu0 %v2222
  %2240 = vmatprep.subr.bf16.mxu0 %v2225
  %2241 = vmatpush1.bf16.msra.mxu0 %v2224
  %2242 = vmatprep.subr.bf16.mxu0 %v2227
  %2243 = vmatpush1.bf16.msra.mxu0 %v2226
  %2244 = vmatprep.subr.bf16.mxu0 %v2229
  %2245 = vmatpush1.bf16.msra.mxu0 %v2228
  %2246 = vmatprep.subr.bf16.mxu0 0
  %2247 = vmatpush1.bf16.msra.mxu0 0
  %2248 = vmatprep.subr.bf16.mxu0 0
  %2249 = vmatpush1.bf16.msra.mxu0 0
  %2250 = vmatprep.subr.bf16.mxu0 0
  %2251 = vmatpush1.bf16.msra.mxu0 0
  %2252 = vmatprep.subr.bf16.mxu0 0
  %2253 = vmatpush1.bf16.msra.mxu0 0
  %2254 = vmatprep.subr.bf16.mxu0 0
  %2255 = vmatpush1.bf16.msra.mxu0 0
  %2256 = vmatprep.subr.bf16.mxu0 0
  %2257 = vmatpush1.bf16.msra.mxu0 0
  %2258 = vmatprep.subr.bf16.mxu0 0
  %2259 = vmatpush1.bf16.msra.mxu0 0
  %2260 = vmatprep.subr.bf16.mxu0 0
  %2261 = vmatpush1.bf16.msra.mxu0 0
  %2262 = vmatprep.subr.bf16.mxu0 0
  %2263 = vmatpush1.bf16.msra.mxu0 0
  %2264 = vmatprep.subr.bf16.mxu0 0
  %2265 = vmatpush1.bf16.msra.mxu0 0
  %2266 = vmatprep.subr.bf16.mxu0 0
  %2267 = vmatpush1.bf16.msra.mxu0 0
  %2268 = vmatprep.subr.bf16.mxu0 0
  %2269 = vmatpush1.bf16.msra.mxu0 0
  %2270 = vmatprep.mubr.bf16.mxu0 0
  %2271 = vmatmul.mubr.bf16.gmra.mrb[0].mxu0 %v1973
  %v2272 = vpop.f32.mrb[0].mxu0
  %v2273 = vadd.f32 0.0, %v2272
  %v2274 = vpop.f32.mrb[0].mxu0
  %v2275 = vadd.f32 0.0, %v2274
  %v2276 = vpop.f32.mrb[0].mxu0
  %v2277 = vpop.f32.mrb[0].mxu0
  %2278 = vdwg.mxu0
  %v2279 = vadd.f32 %v2188, %v2273
  %v2280 = vadd.f32 %v2189, %v2275
  %v2281 = vxor.u32 %v2279, 2147483648
  %v2282 = vmul.f32 %v2281, 1.442695
  %v2283 = vpow.pop %v2282
  %v2284 = vadd.f32 %v2283, 1.0
  %v2285 = vrcp.pop %v2284
  %v2286 = vmul.f32 1.0, %v2285
  %v2287 = vxor.u32 %v2280, 2147483648
  %v2288 = vmul.f32 %v2287, 1.442695
  %v2289 = vpow.pop %v2288
  %v2290 = vadd.f32 %v2289, 1.0
  %v2291 = vrcp.pop %v2290
  %v2292 = vmul.f32 1.0, %v2291
  %v2293 = vtanh.pop %v2280
  %v2294 = vmul.f32 %v2286, %v1792
  %v2295 = vmul.f32 %v2286, %v2293
  %2297 = vrot.lane.b32.xlu0 %v2295, 64
  %v2298 = vpop.permute.xlu0 %2297
  %v2300 = vadd.f32 %v2294, %v2298
  %v2301 = vtanh.pop %v2300
  %v2302 = vmul.f32 %v2292, %v2301
  %v2303 = vpack.c.bf16 %v2302, %v2302
  %v2304 = vld [vmem:[%s9] sm:$0xff]
  %v2305 = vld [vmem:[%s9 + $0x8] sm:$0xff]
  %v2306 = vld [vmem:[%s9 + $0x10] sm:$0xff]
  %v2307 = vld [vmem:[%s9 + $0x18] sm:$0xff]
  %v2308 = vld [vmem:[%s9 + $0x20] sm:$0xff]
  %v2309 = vld [vmem:[%s9 + $0x28] sm:$0xff]
  %v2310 = vld [vmem:[%s9 + $0x30] sm:$0xff]
  %v2311 = vld [vmem:[%s9 + $0x38] sm:$0xff]
  %v2312 = vld [vmem:[%s9 + $0x40] sm:$0xff]
  %v2313 = vld [vmem:[%s9 + $0x48] sm:$0xff]
  %v2314 = vld [vmem:[%s9 + $0x50] sm:$0xff]
  %v2315 = vld [vmem:[%s9 + $0x58] sm:$0xff]
  %v2316 = vld [vmem:[%s9 + $0x60] sm:$0xff]
  %v2317 = vld [vmem:[%s9 + $0x68] sm:$0xff]
  %v2318 = vld [vmem:[%s9 + $0x70] sm:$0xff]
  %v2319 = vld [vmem:[%s9 + $0x78] sm:$0xff]
  %v2320 = vld [vmem:[%s9 + $0x80] sm:$0xff]
  %v2321 = vld [vmem:[%s9 + $0x88] sm:$0xff]
  %v2322 = vld [vmem:[%s9 + $0x90] sm:$0xff]
  %v2323 = vld [vmem:[%s9 + $0x98] sm:$0xff]
  %v2324 = vld [vmem:[%s9 + $0xa0] sm:$0xff]
  %v2325 = vld [vmem:[%s9 + $0xa8] sm:$0xff]
  %v2326 = vld [vmem:[%s9 + $0xb0] sm:$0xff]
  %v2327 = vld [vmem:[%s9 + $0xb8] sm:$0xff]
  %v2328 = vld [vmem:[%s10] sm:$0x3f]
  %v2330 = vlaneseq
  %v2331 = vshrl.u32 %v2330, 7
  %v2332 = vsub.s32 0, %v2331
  %v2333 = vrot.slane %v2328, %v2332
  %v2334 = vlaneseq
  %v2335 = vshrl.u32 %v2334, 7
  %v2336 = vsub.s32 1, %v2335
  %v2337 = vrot.slane %v2328, %v2336
  %v2338 = vlaneseq
  %v2339 = vshrl.u32 %v2338, 7
  %v2340 = vsub.s32 2, %v2339
  %v2341 = vrot.slane %v2328, %v2340
  %v2342 = vlaneseq
  %v2343 = vshrl.u32 %v2342, 7
  %v2344 = vsub.s32 3, %v2343
  %v2345 = vrot.slane %v2328, %v2344
  %v2346 = vlaneseq
  %v2347 = vshrl.u32 %v2346, 7
  %v2348 = vsub.s32 4, %v2347
  %v2349 = vrot.slane %v2328, %v2348
  %v2350 = vlaneseq
  %v2351 = vshrl.u32 %v2350, 7
  %v2352 = vsub.s32 5, %v2351
  %v2353 = vrot.slane %v2328, %v2352
  %v2384 = vunpack.c.l.b16 %v2304
  %v2385 = vunpack.c.h.b16 %v2304
  %v2386 = vunpack.c.l.b16 %v2305
  %v2387 = vunpack.c.h.b16 %v2305
  %v2388 = vunpack.c.l.b16 %v2306
  %v2389 = vunpack.c.h.b16 %v2306
  %v2390 = vunpack.c.l.b16 %v2307
  %v2391 = vunpack.c.h.b16 %v2307
  %v2392 = vunpack.c.l.b16 %v2308
  %v2393 = vunpack.c.h.b16 %v2308
  %v2394 = vunpack.c.l.b16 %v2309
  %v2395 = vunpack.c.h.b16 %v2309
  %v2396 = vunpack.c.l.b16 %v2310
  %v2397 = vunpack.c.h.b16 %v2310
  %v2398 = vunpack.c.l.b16 %v2311
  %v2399 = vunpack.c.h.b16 %v2311
  %v2400 = vunpack.c.l.b16 %v2312
  %v2401 = vunpack.c.h.b16 %v2312
  %v2402 = vunpack.c.l.b16 %v2313
  %v2403 = vunpack.c.h.b16 %v2313
  %v2404 = vunpack.c.l.b16 %v2314
  %v2405 = vunpack.c.h.b16 %v2314
  %v2406 = vunpack.c.l.b16 %v2315
  %v2407 = vunpack.c.h.b16 %v2315
  %v2408 = vunpack.c.l.b16 %v2316
  %v2409 = vunpack.c.h.b16 %v2316
  %v2410 = vunpack.c.l.b16 %v2317
  %v2411 = vunpack.c.h.b16 %v2317
  %v2412 = vunpack.c.l.b16 %v2318
  %v2413 = vunpack.c.h.b16 %v2318
  %v2414 = vunpack.c.l.b16 %v2319
  %v2415 = vunpack.c.h.b16 %v2319
  %v2416 = vunpack.c.l.b16 %v2320
  %v2417 = vunpack.c.h.b16 %v2320
  %v2418 = vunpack.c.l.b16 %v2321
  %v2419 = vunpack.c.h.b16 %v2321
  %v2420 = vunpack.c.l.b16 %v2322
  %v2421 = vunpack.c.h.b16 %v2322
  %v2422 = vunpack.c.l.b16 %v2323
  %v2423 = vunpack.c.h.b16 %v2323
  %v2424 = vunpack.c.l.b16 %v2324
  %v2425 = vunpack.c.h.b16 %v2324
  %v2426 = vunpack.c.l.b16 %v2325
  %v2427 = vunpack.c.h.b16 %v2325
  %v2428 = vunpack.c.l.b16 %v2326
  %v2429 = vunpack.c.h.b16 %v2326
  %v2430 = vunpack.c.l.b16 %v2327
  %v2431 = vunpack.c.h.b16 %v2327
  %v2432 = vpack.c.b16 %v2390, %v2384
  %v2433 = vpack.c.b16 %v2391, %v2385
  %v2434 = vpack.c.b16 %v2392, %v2386
  %v2435 = vpack.c.b16 %v2393, %v2387
  %v2436 = vpack.c.b16 %v2394, %v2388
  %v2437 = vpack.c.b16 %v2395, %v2389
  %v2438 = vpack.c.b16 %v2402, %v2396
  %v2439 = vpack.c.b16 %v2403, %v2397
  %v2440 = vpack.c.b16 %v2404, %v2398
  %v2441 = vpack.c.b16 %v2405, %v2399
  %v2442 = vpack.c.b16 %v2406, %v2400
  %v2443 = vpack.c.b16 %v2407, %v2401
  %v2444 = vpack.c.b16 %v2414, %v2408
  %v2445 = vpack.c.b16 %v2415, %v2409
  %v2446 = vpack.c.b16 %v2416, %v2410
  %v2447 = vpack.c.b16 %v2417, %v2411
  %v2448 = vpack.c.b16 %v2418, %v2412
  %v2449 = vpack.c.b16 %v2419, %v2413
  %v2450 = vpack.c.b16 %v2426, %v2420
  %v2451 = vpack.c.b16 %v2427, %v2421
  %v2452 = vpack.c.b16 %v2428, %v2422
  %v2453 = vpack.c.b16 %v2429, %v2423
  %v2454 = vpack.c.b16 %v2430, %v2424
  %v2455 = vpack.c.b16 %v2431, %v2425
  %v2481 = vsel %vm260, %v2303, 0
  %2483 = vmatprep.subr.bf16.mxu0 %v2433
  %2484 = vmatpush1.bf16.msra.mxu0 %v2432
  %2485 = vmatprep.subr.bf16.mxu0 %v2439
  %2486 = vmatpush1.bf16.msra.mxu0 %v2438
  %2487 = vmatprep.subr.bf16.mxu0 %v2445
  %2488 = vmatpush1.bf16.msra.mxu0 %v2444
  %2489 = vmatprep.subr.bf16.mxu0 %v2451
  %2490 = vmatpush1.bf16.msra.mxu0 %v2450
  %2491 = vmatprep.subr.bf16.mxu0 0
  %2492 = vmatpush1.bf16.msra.mxu0 0
  %2493 = vmatprep.subr.bf16.mxu0 0
  %2494 = vmatpush1.bf16.msra.mxu0 0
  %2495 = vmatprep.subr.bf16.mxu0 0
  %2496 = vmatpush1.bf16.msra.mxu0 0
  %2497 = vmatprep.subr.bf16.mxu0 0
  %2498 = vmatpush1.bf16.msra.mxu0 0
  %2499 = vmatprep.subr.bf16.mxu0 0
  %2500 = vmatpush1.bf16.msra.mxu0 0
  %2501 = vmatprep.subr.bf16.mxu0 0
  %2502 = vmatpush1.bf16.msra.mxu0 0
  %2503 = vmatprep.subr.bf16.mxu0 0
  %2504 = vmatpush1.bf16.msra.mxu0 0
  %2505 = vmatprep.subr.bf16.mxu0 0
  %2506 = vmatpush1.bf16.msra.mxu0 0
  %2507 = vmatprep.subr.bf16.mxu0 0
  %2508 = vmatpush1.bf16.msra.mxu0 0
  %2509 = vmatprep.subr.bf16.mxu0 0
  %2510 = vmatpush1.bf16.msra.mxu0 0
  %2511 = vmatprep.subr.bf16.mxu0 0
  %2512 = vmatpush1.bf16.msra.mxu0 0
  %2513 = vmatprep.subr.bf16.mxu0 0
  %2514 = vmatpush1.bf16.msra.mxu0 0
  %2515 = vmatprep.mubr.bf16.mxu0 0
  %2516 = vmatmul.mubr.bf16.gmra.mrb[0].mxu0 %v2481
  %v2517 = vpop.f32.mrb[0].mxu0
  %v2518 = vadd.f32 %v2333, %v2517
  %v2519 = vpop.f32.mrb[0].mxu0
  %v2520 = vadd.f32 %v2337, %v2519
  %v2521 = vpop.f32.mrb[0].mxu0
  %v2522 = vpop.f32.mrb[0].mxu0
  %2523 = vdwg.mxu0
  %2524 = vmatprep.subr.bf16.mxu0 %v2435
  %2525 = vmatpush1.bf16.msra.mxu0 %v2434
  %2526 = vmatprep.subr.bf16.mxu0 %v2441
  %2527 = vmatpush1.bf16.msra.mxu0 %v2440
  %2528 = vmatprep.subr.bf16.mxu0 %v2447
  %2529 = vmatpush1.bf16.msra.mxu0 %v2446
  %2530 = vmatprep.subr.bf16.mxu0 %v2453
  %2531 = vmatpush1.bf16.msra.mxu0 %v2452
  %2532 = vmatprep.subr.bf16.mxu0 0
  %2533 = vmatpush1.bf16.msra.mxu0 0
  %2534 = vmatprep.subr.bf16.mxu0 0
  %2535 = vmatpush1.bf16.msra.mxu0 0
  %2536 = vmatprep.subr.bf16.mxu0 0
  %2537 = vmatpush1.bf16.msra.mxu0 0
  %2538 = vmatprep.subr.bf16.mxu0 0
  %2539 = vmatpush1.bf16.msra.mxu0 0
  %2540 = vmatprep.subr.bf16.mxu0 0
  %2541 = vmatpush1.bf16.msra.mxu0 0
  %2542 = vmatprep.subr.bf16.mxu0 0
  %2543 = vmatpush1.bf16.msra.mxu0 0
  %2544 = vmatprep.subr.bf16.mxu0 0
  %2545 = vmatpush1.bf16.msra.mxu0 0
  %2546 = vmatprep.subr.bf16.mxu0 0
  %2547 = vmatpush1.bf16.msra.mxu0 0
  %2548 = vmatprep.subr.bf16.mxu0 0
  %2549 = vmatpush1.bf16.msra.mxu0 0
  %2550 = vmatprep.subr.bf16.mxu0 0
  %2551 = vmatpush1.bf16.msra.mxu0 0
  %2552 = vmatprep.subr.bf16.mxu0 0
  %2553 = vmatpush1.bf16.msra.mxu0 0
  %2554 = vmatprep.subr.bf16.mxu0 0
  %2555 = vmatpush1.bf16.msra.mxu0 0
  %2556 = vmatprep.mubr.bf16.mxu0 0
  %2557 = vmatmul.mubr.bf16.gmra.mrb[0].mxu0 %v2481
  %v2558 = vpop.f32.mrb[0].mxu0
  %v2559 = vadd.f32 %v2341, %v2558
  %v2560 = vpop.f32.mrb[0].mxu0
  %v2561 = vadd.f32 %v2345, %v2560
  %v2562 = vpop.f32.mrb[0].mxu0
  %v2563 = vpop.f32.mrb[0].mxu0
  %2564 = vdwg.mxu0
  %2565 = vmatprep.subr.bf16.mxu0 %v2437
  %2566 = vmatpush1.bf16.msra.mxu0 %v2436
  %2567 = vmatprep.subr.bf16.mxu0 %v2443
  %2568 = vmatpush1.bf16.msra.mxu0 %v2442
  %2569 = vmatprep.subr.bf16.mxu0 %v2449
  %2570 = vmatpush1.bf16.msra.mxu0 %v2448
  %2571 = vmatprep.subr.bf16.mxu0 %v2455
  %2572 = vmatpush1.bf16.msra.mxu0 %v2454
  %2573 = vmatprep.subr.bf16.mxu0 0
  %2574 = vmatpush1.bf16.msra.mxu0 0
  %2575 = vmatprep.subr.bf16.mxu0 0
  %2576 = vmatpush1.bf16.msra.mxu0 0
  %2577 = vmatprep.subr.bf16.mxu0 0
  %2578 = vmatpush1.bf16.msra.mxu0 0
  %2579 = vmatprep.subr.bf16.mxu0 0
  %2580 = vmatpush1.bf16.msra.mxu0 0
  %2581 = vmatprep.subr.bf16.mxu0 0
  %2582 = vmatpush1.bf16.msra.mxu0 0
  %2583 = vmatprep.subr.bf16.mxu0 0
  %2584 = vmatpush1.bf16.msra.mxu0 0
  %2585 = vmatprep.subr.bf16.mxu0 0
  %2586 = vmatpush1.bf16.msra.mxu0 0
  %2587 = vmatprep.subr.bf16.mxu0 0
  %2588 = vmatpush1.bf16.msra.mxu0 0
  %2589 = vmatprep.subr.bf16.mxu0 0
  %2590 = vmatpush1.bf16.msra.mxu0 0
  %2591 = vmatprep.subr.bf16.mxu0 0
  %2592 = vmatpush1.bf16.msra.mxu0 0
  %2593 = vmatprep.subr.bf16.mxu0 0
  %2594 = vmatpush1.bf16.msra.mxu0 0
  %2595 = vmatprep.subr.bf16.mxu0 0
  %2596 = vmatpush1.bf16.msra.mxu0 0
  %2597 = vmatprep.mubr.bf16.mxu0 0
  %2598 = vmatmul.mubr.bf16.gmra.mrb[0].mxu0 %v2481
  %v2599 = vpop.f32.mrb[0].mxu0
  %v2600 = vadd.f32 %v2349, %v2599
  %v2601 = vpop.f32.mrb[0].mxu0
  %v2602 = vadd.f32 %v2353, %v2601
  %v2603 = vpop.f32.mrb[0].mxu0
  %v2604 = vpop.f32.mrb[0].mxu0
  %2605 = vdwg.mxu0
  %2606 = vst [vmem:[%s11 + $0x50] sm:$0xff] %v2600
  %2607 = vst [vmem:[%s11 + $0x58] sm:$0xff] %v2602
  %v2608 = vmul.f32 %v2559, 1.442695
  %v2609 = vpow.pop %v2608
  %v2610 = vmul.f32 %v2561, 1.442695
  %v2611 = vpow.pop %v2610
  %v2612 = vmul.f32 %v2609, 1.118034
  %v2613 = vmul.f32 %v2611, 1.118034
  %2614 = vst [vmem:[%s11 + $0x40] sm:$0xff] %v2612
  %2615 = vst [vmem:[%s11 + $0x48] sm:$0xff] %v2613
  %2617 = vrot.lane.b32.xlu0 %v2518, 96
  %v2618 = vpop.permute.xlu0 %2617
  %v2620 = vmax.f32 %v2518, %v2618
  %2621 = vrot.lane.b32.xlu0 %v2518, 64
  %v2622 = vpop.permute.xlu0 %2621
  %v2624 = vmax.f32 %v2620, %v2622
  %2625 = vrot.lane.b32.xlu0 %v2518, 32
  %v2626 = vpop.permute.xlu0 %2625
  %v2628 = vmax.f32 %v2624, %v2626
  %v2629 = vmax.f32 %v2628, %v2520
  %v2630 = vsub.f32 %v2518, %v2629
  %v2631 = vmul.f32 %v2630, 1.442695
  %v2632 = vpow.pop %v2631
  %2634 = vrot.lane.b32.xlu0 %v2629, 32
  %v2635 = vpop.permute.xlu0 %2634
  %v2637 = vsub.f32 %v2518, %v2635
  %v2638 = vmul.f32 %v2637, 1.442695
  %v2639 = vpow.pop %v2638
  %2640 = vrot.lane.b32.xlu0 %v2629, 64
  %v2641 = vpop.permute.xlu0 %2640
  %v2643 = vsub.f32 %v2518, %v2641
  %v2644 = vmul.f32 %v2643, 1.442695
  %v2645 = vpow.pop %v2644
  %2646 = vrot.lane.b32.xlu0 %v2629, 96
  %v2647 = vpop.permute.xlu0 %2646
  %v2649 = vsub.f32 %v2518, %v2647
  %v2650 = vmul.f32 %v2649, 1.442695
  %v2651 = vpow.pop %v2650
  %v2652 = vsub.f32 %v2520, %v2629
  %v2653 = vmul.f32 %v2652, 1.442695
  %v2654 = vpow.pop %v2653
  %2656 = vrot.lane.b32.xlu0 %v2639, 96
  %v2657 = vpop.permute.xlu0 %2656
  %v2659 = vadd.f32 %v2632, %v2657
  %2661 = vrot.lane.b32.xlu0 %v2645, 64
  %v2662 = vpop.permute.xlu0 %2661
  %v2664 = vadd.f32 %v2659, %v2662
  %2666 = vrot.lane.b32.xlu0 %v2651, 32
  %v2667 = vpop.permute.xlu0 %2666
  %v2669 = vadd.f32 %v2664, %v2667
  %v2670 = vadd.f32 %v2669, %v2654
  %v2671 = vmul.f32 %v2670, 1.25
  %v2672 = vrcp.pop %v2671
  %v2673 = vmul.f32 %v2632, %v2672
  %2675 = vrot.lane.b32.xlu0 %v2672, 32
  %v2676 = vpop.permute.xlu0 %2675
  %v2678 = vmul.f32 %v2639, %v2676
  %2679 = vrot.lane.b32.xlu0 %v2672, 64
  %v2680 = vpop.permute.xlu0 %2679
  %v2682 = vmul.f32 %v2645, %v2680
  %2683 = vrot.lane.b32.xlu0 %v2672, 96
  %v2684 = vpop.permute.xlu0 %2683
  %v2686 = vmul.f32 %v2651, %v2684
  %v2687 = vmul.f32 %v2654, %v2672
  %v2688 = vsel %vm2180, %v2673, %v2678
  %v2689 = vsel %vm260, %v2688, %v2682
  %v2690 = vsel %vm2183, %v2689, %v2686
  %v2691 = vsel %vm2180, %v2687, 0.0
  %2692 = vst [vmem:[%s11 + $0x30] sm:$0xff] %v2690
  %2693 = vst [vmem:[%s11 + $0x38] sm:$0xff] %v2691
  %v2694 = vld [vmem:[#allocation3 + $0x20] sm:$0xff]
  %v2695 = vld [vmem:[#allocation3 + $0x28] sm:$0xff]
  %v2696 = vld [vmem:[%s7] sm:$0xff]
  %v2697 = vld [vmem:[%s7 + $0x8] sm:$0xff]
  %v2698 = vld [vmem:[%s7 + $0x10] sm:$0xff]
  %v2699 = vld [vmem:[%s7 + $0x18] sm:$0xff]
  %v2700 = vld [vmem:[%s7 + $0x20] sm:$0xff]
  %v2701 = vld [vmem:[%s7 + $0x28] sm:$0xff]
  %v2702 = vld [vmem:[%s7 + $0x30] sm:$0xff]
  %v2703 = vld [vmem:[%s7 + $0x38] sm:$0xff]
  %v2712 = vunpack.c.l.b16 %v2696
  %v2713 = vunpack.c.h.b16 %v2696
  %v2714 = vunpack.c.l.b16 %v2697
  %v2715 = vunpack.c.h.b16 %v2697
  %v2716 = vunpack.c.l.b16 %v2698
  %v2717 = vunpack.c.h.b16 %v2698
  %v2718 = vunpack.c.l.b16 %v2699
  %v2719 = vunpack.c.h.b16 %v2699
  %v2720 = vunpack.c.l.b16 %v2700
  %v2721 = vunpack.c.h.b16 %v2700
  %v2722 = vunpack.c.l.b16 %v2701
  %v2723 = vunpack.c.h.b16 %v2701
  %v2724 = vunpack.c.l.b16 %v2702
  %v2725 = vunpack.c.h.b16 %v2702
  %v2726 = vunpack.c.l.b16 %v2703
  %v2727 = vunpack.c.h.b16 %v2703
  %v2728 = vpack.c.b16 %v2714, %v2712
  %v2729 = vpack.c.b16 %v2715, %v2713
  %v2730 = vpack.c.b16 %v2718, %v2716
  %v2731 = vpack.c.b16 %v2719, %v2717
  %v2732 = vpack.c.b16 %v2722, %v2720
  %v2733 = vpack.c.b16 %v2723, %v2721
  %v2734 = vpack.c.b16 %v2726, %v2724
  %v2735 = vpack.c.b16 %v2727, %v2725
  %2744 = vmatprep.subr.bf16.mxu0 %v2729
  %2745 = vmatpush1.bf16.msra.mxu0 %v2728
  %2746 = vmatprep.subr.bf16.mxu0 %v2731
  %2747 = vmatpush1.bf16.msra.mxu0 %v2730
  %2748 = vmatprep.subr.bf16.mxu0 %v2733
  %2749 = vmatpush1.bf16.msra.mxu0 %v2732
  %2750 = vmatprep.subr.bf16.mxu0 %v2735
  %2751 = vmatpush1.bf16.msra.mxu0 %v2734
  %2752 = vmatprep.subr.bf16.mxu0 0
  %2753 = vmatpush1.bf16.msra.mxu0 0
  %2754 = vmatprep.subr.bf16.mxu0 0
  %2755 = vmatpush1.bf16.msra.mxu0 0
  %2756 = vmatprep.subr.bf16.mxu0 0
  %2757 = vmatpush1.bf16.msra.mxu0 0
  %2758 = vmatprep.subr.bf16.mxu0 0
  %2759 = vmatpush1.bf16.msra.mxu0 0
  %2760 = vmatprep.subr.bf16.mxu0 0
  %2761 = vmatpush1.bf16.msra.mxu0 0
  %2762 = vmatprep.subr.bf16.mxu0 0
  %2763 = vmatpush1.bf16.msra.mxu0 0
  %2764 = vmatprep.subr.bf16.mxu0 0
  %2765 = vmatpush1.bf16.msra.mxu0 0
  %2766 = vmatprep.subr.bf16.mxu0 0
  %2767 = vmatpush1.bf16.msra.mxu0 0
  %2768 = vmatprep.subr.bf16.mxu0 0
  %2769 = vmatpush1.bf16.msra.mxu0 0
  %2770 = vmatprep.subr.bf16.mxu0 0
  %2771 = vmatpush1.bf16.msra.mxu0 0
  %2772 = vmatprep.subr.bf16.mxu0 0
  %2773 = vmatpush1.bf16.msra.mxu0 0
  %2774 = vmatprep.subr.bf16.mxu0 0
  %2775 = vmatpush1.bf16.msra.mxu0 0
  %2776 = vmatprep.mubr.bf16.mxu0 0
  %2777 = vmatmul.mubr.bf16.gmra.mrb[0].mxu0 %v2481
  %v2778 = vpop.f32.mrb[0].mxu0
  %v2779 = vadd.f32 0.0, %v2778
  %v2780 = vpop.f32.mrb[0].mxu0
  %v2781 = vadd.f32 0.0, %v2780
  %v2782 = vpop.f32.mrb[0].mxu0
  %v2783 = vpop.f32.mrb[0].mxu0
  %2784 = vdwg.mxu0
  %v2785 = vadd.f32 %v2694, %v2779
  %v2786 = vadd.f32 %v2695, %v2781
  %v2787 = vxor.u32 %v2785, 2147483648
  %v2788 = vmul.f32 %v2787, 1.442695
  %v2789 = vpow.pop %v2788
  %v2790 = vadd.f32 %v2789, 1.0
  %v2791 = vrcp.pop %v2790
  %v2792 = vmul.f32 1.0, %v2791
  %v2793 = vxor.u32 %v2786, 2147483648
  %v2794 = vmul.f32 %v2793, 1.442695
  %v2795 = vpow.pop %v2794
  %v2796 = vadd.f32 %v2795, 1.0
  %v2797 = vrcp.pop %v2796
  %v2798 = vmul.f32 1.0, %v2797
  %v2799 = vtanh.pop %v2786
  %v2800 = vmul.f32 %v2792, %v2300
  %v2801 = vmul.f32 %v2792, %v2799
  %2803 = vrot.lane.b32.xlu0 %v2801, 64
  %v2804 = vpop.permute.xlu0 %2803
  %v2806 = vadd.f32 %v2800, %v2804
  %v2807 = vtanh.pop %v2806
  %v2808 = vmul.f32 %v2798, %v2807
  %v2809 = vpack.c.bf16 %v2808, %v2808
  %v2810 = vld [vmem:[%s9] sm:$0xff]
  %v2811 = vld [vmem:[%s9 + $0x8] sm:$0xff]
  %v2812 = vld [vmem:[%s9 + $0x10] sm:$0xff]
  %v2813 = vld [vmem:[%s9 + $0x18] sm:$0xff]
  %v2814 = vld [vmem:[%s9 + $0x20] sm:$0xff]
  %v2815 = vld [vmem:[%s9 + $0x28] sm:$0xff]
  %v2816 = vld [vmem:[%s9 + $0x30] sm:$0xff]
  %v2817 = vld [vmem:[%s9 + $0x38] sm:$0xff]
  %v2818 = vld [vmem:[%s9 + $0x40] sm:$0xff]
  %v2819 = vld [vmem:[%s9 + $0x48] sm:$0xff]
  %v2820 = vld [vmem:[%s9 + $0x50] sm:$0xff]
  %v2821 = vld [vmem:[%s9 + $0x58] sm:$0xff]
  %v2822 = vld [vmem:[%s9 + $0x60] sm:$0xff]
  %v2823 = vld [vmem:[%s9 + $0x68] sm:$0xff]
  %v2824 = vld [vmem:[%s9 + $0x70] sm:$0xff]
  %v2825 = vld [vmem:[%s9 + $0x78] sm:$0xff]
  %v2826 = vld [vmem:[%s9 + $0x80] sm:$0xff]
  %v2827 = vld [vmem:[%s9 + $0x88] sm:$0xff]
  %v2828 = vld [vmem:[%s9 + $0x90] sm:$0xff]
  %v2829 = vld [vmem:[%s9 + $0x98] sm:$0xff]
  %v2830 = vld [vmem:[%s9 + $0xa0] sm:$0xff]
  %v2831 = vld [vmem:[%s9 + $0xa8] sm:$0xff]
  %v2832 = vld [vmem:[%s9 + $0xb0] sm:$0xff]
  %v2833 = vld [vmem:[%s9 + $0xb8] sm:$0xff]
  %v2834 = vld [vmem:[%s10] sm:$0x3f]
  %v2836 = vlaneseq
  %v2837 = vshrl.u32 %v2836, 7
  %v2838 = vsub.s32 0, %v2837
  %v2839 = vrot.slane %v2834, %v2838
  %v2840 = vlaneseq
  %v2841 = vshrl.u32 %v2840, 7
  %v2842 = vsub.s32 1, %v2841
  %v2843 = vrot.slane %v2834, %v2842
  %v2844 = vlaneseq
  %v2845 = vshrl.u32 %v2844, 7
  %v2846 = vsub.s32 2, %v2845
  %v2847 = vrot.slane %v2834, %v2846
  %v2848 = vlaneseq
  %v2849 = vshrl.u32 %v2848, 7
  %v2850 = vsub.s32 3, %v2849
  %v2851 = vrot.slane %v2834, %v2850
  %v2852 = vlaneseq
  %v2853 = vshrl.u32 %v2852, 7
  %v2854 = vsub.s32 4, %v2853
  %v2855 = vrot.slane %v2834, %v2854
  %v2856 = vlaneseq
  %v2857 = vshrl.u32 %v2856, 7
  %v2858 = vsub.s32 5, %v2857
  %v2859 = vrot.slane %v2834, %v2858
  %v2890 = vunpack.c.l.b16 %v2810
  %v2891 = vunpack.c.h.b16 %v2810
  %v2892 = vunpack.c.l.b16 %v2811
  %v2893 = vunpack.c.h.b16 %v2811
  %v2894 = vunpack.c.l.b16 %v2812
  %v2895 = vunpack.c.h.b16 %v2812
  %v2896 = vunpack.c.l.b16 %v2813
  %v2897 = vunpack.c.h.b16 %v2813
  %v2898 = vunpack.c.l.b16 %v2814
  %v2899 = vunpack.c.h.b16 %v2814
  %v2900 = vunpack.c.l.b16 %v2815
  %v2901 = vunpack.c.h.b16 %v2815
  %v2902 = vunpack.c.l.b16 %v2816
  %v2903 = vunpack.c.h.b16 %v2816
  %v2904 = vunpack.c.l.b16 %v2817
  %v2905 = vunpack.c.h.b16 %v2817
  %v2906 = vunpack.c.l.b16 %v2818
  %v2907 = vunpack.c.h.b16 %v2818
  %v2908 = vunpack.c.l.b16 %v2819
  %v2909 = vunpack.c.h.b16 %v2819
  %v2910 = vunpack.c.l.b16 %v2820
  %v2911 = vunpack.c.h.b16 %v2820
  %v2912 = vunpack.c.l.b16 %v2821
  %v2913 = vunpack.c.h.b16 %v2821
  %v2914 = vunpack.c.l.b16 %v2822
  %v2915 = vunpack.c.h.b16 %v2822
  %v2916 = vunpack.c.l.b16 %v2823
  %v2917 = vunpack.c.h.b16 %v2823
  %v2918 = vunpack.c.l.b16 %v2824
  %v2919 = vunpack.c.h.b16 %v2824
  %v2920 = vunpack.c.l.b16 %v2825
  %v2921 = vunpack.c.h.b16 %v2825
  %v2922 = vunpack.c.l.b16 %v2826
  %v2923 = vunpack.c.h.b16 %v2826
  %v2924 = vunpack.c.l.b16 %v2827
  %v2925 = vunpack.c.h.b16 %v2827
  %v2926 = vunpack.c.l.b16 %v2828
  %v2927 = vunpack.c.h.b16 %v2828
  %v2928 = vunpack.c.l.b16 %v2829
  %v2929 = vunpack.c.h.b16 %v2829
  %v2930 = vunpack.c.l.b16 %v2830
  %v2931 = vunpack.c.h.b16 %v2830
  %v2932 = vunpack.c.l.b16 %v2831
  %v2933 = vunpack.c.h.b16 %v2831
  %v2934 = vunpack.c.l.b16 %v2832
  %v2935 = vunpack.c.h.b16 %v2832
  %v2936 = vunpack.c.l.b16 %v2833
  %v2937 = vunpack.c.h.b16 %v2833
  %v2938 = vpack.c.b16 %v2896, %v2890
  %v2939 = vpack.c.b16 %v2897, %v2891
  %v2940 = vpack.c.b16 %v2898, %v2892
  %v2941 = vpack.c.b16 %v2899, %v2893
  %v2942 = vpack.c.b16 %v2900, %v2894
  %v2943 = vpack.c.b16 %v2901, %v2895
  %v2944 = vpack.c.b16 %v2908, %v2902
  %v2945 = vpack.c.b16 %v2909, %v2903
  %v2946 = vpack.c.b16 %v2910, %v2904
  %v2947 = vpack.c.b16 %v2911, %v2905
  %v2948 = vpack.c.b16 %v2912, %v2906
  %v2949 = vpack.c.b16 %v2913, %v2907
  %v2950 = vpack.c.b16 %v2920, %v2914
  %v2951 = vpack.c.b16 %v2921, %v2915
  %v2952 = vpack.c.b16 %v2922, %v2916
  %v2953 = vpack.c.b16 %v2923, %v2917
  %v2954 = vpack.c.b16 %v2924, %v2918
  %v2955 = vpack.c.b16 %v2925, %v2919
  %v2956 = vpack.c.b16 %v2932, %v2926
  %v2957 = vpack.c.b16 %v2933, %v2927
  %v2958 = vpack.c.b16 %v2934, %v2928
  %v2959 = vpack.c.b16 %v2935, %v2929
  %v2960 = vpack.c.b16 %v2936, %v2930
  %v2961 = vpack.c.b16 %v2937, %v2931
  %v2987 = vsel %vm260, %v2809, 0
  %2989 = vmatprep.subr.bf16.mxu0 %v2939
  %2990 = vmatpush1.bf16.msra.mxu0 %v2938
  %2991 = vmatprep.subr.bf16.mxu0 %v2945
  %2992 = vmatpush1.bf16.msra.mxu0 %v2944
  %2993 = vmatprep.subr.bf16.mxu0 %v2951
  %2994 = vmatpush1.bf16.msra.mxu0 %v2950
  %2995 = vmatprep.subr.bf16.mxu0 %v2957
  %2996 = vmatpush1.bf16.msra.mxu0 %v2956
  %2997 = vmatprep.subr.bf16.mxu0 0
  %2998 = vmatpush1.bf16.msra.mxu0 0
  %2999 = vmatprep.subr.bf16.mxu0 0
  %3000 = vmatpush1.bf16.msra.mxu0 0
  %3001 = vmatprep.subr.bf16.mxu0 0
  %3002 = vmatpush1.bf16.msra.mxu0 0
  %3003 = vmatprep.subr.bf16.mxu0 0
  %3004 = vmatpush1.bf16.msra.mxu0 0
  %3005 = vmatprep.subr.bf16.mxu0 0
  %3006 = vmatpush1.bf16.msra.mxu0 0
  %3007 = vmatprep.subr.bf16.mxu0 0
  %3008 = vmatpush1.bf16.msra.mxu0 0
  %3009 = vmatprep.subr.bf16.mxu0 0
  %3010 = vmatpush1.bf16.msra.mxu0 0
  %3011 = vmatprep.subr.bf16.mxu0 0
  %3012 = vmatpush1.bf16.msra.mxu0 0
  %3013 = vmatprep.subr.bf16.mxu0 0
  %3014 = vmatpush1.bf16.msra.mxu0 0
  %3015 = vmatprep.subr.bf16.mxu0 0
  %3016 = vmatpush1.bf16.msra.mxu0 0
  %3017 = vmatprep.subr.bf16.mxu0 0
  %3018 = vmatpush1.bf16.msra.mxu0 0
  %3019 = vmatprep.subr.bf16.mxu0 0
  %3020 = vmatpush1.bf16.msra.mxu0 0
  %3021 = vmatprep.mubr.bf16.mxu0 0
  %3022 = vmatmul.mubr.bf16.gmra.mrb[0].mxu0 %v2987
  %v3023 = vpop.f32.mrb[0].mxu0
  %v3024 = vadd.f32 %v2839, %v3023
  %v3025 = vpop.f32.mrb[0].mxu0
  %v3026 = vadd.f32 %v2843, %v3025
  %v3027 = vpop.f32.mrb[0].mxu0
  %v3028 = vpop.f32.mrb[0].mxu0
  %3029 = vdwg.mxu0
  %3030 = vmatprep.subr.bf16.mxu0 %v2941
  %3031 = vmatpush1.bf16.msra.mxu0 %v2940
  %3032 = vmatprep.subr.bf16.mxu0 %v2947
  %3033 = vmatpush1.bf16.msra.mxu0 %v2946
  %3034 = vmatprep.subr.bf16.mxu0 %v2953
  %3035 = vmatpush1.bf16.msra.mxu0 %v2952
  %3036 = vmatprep.subr.bf16.mxu0 %v2959
  %3037 = vmatpush1.bf16.msra.mxu0 %v2958
  %3038 = vmatprep.subr.bf16.mxu0 0
  %3039 = vmatpush1.bf16.msra.mxu0 0
  %3040 = vmatprep.subr.bf16.mxu0 0
  %3041 = vmatpush1.bf16.msra.mxu0 0
  %3042 = vmatprep.subr.bf16.mxu0 0
  %3043 = vmatpush1.bf16.msra.mxu0 0
  %3044 = vmatprep.subr.bf16.mxu0 0
  %3045 = vmatpush1.bf16.msra.mxu0 0
  %3046 = vmatprep.subr.bf16.mxu0 0
  %3047 = vmatpush1.bf16.msra.mxu0 0
  %3048 = vmatprep.subr.bf16.mxu0 0
  %3049 = vmatpush1.bf16.msra.mxu0 0
  %3050 = vmatprep.subr.bf16.mxu0 0
  %3051 = vmatpush1.bf16.msra.mxu0 0
  %3052 = vmatprep.subr.bf16.mxu0 0
  %3053 = vmatpush1.bf16.msra.mxu0 0
  %3054 = vmatprep.subr.bf16.mxu0 0
  %3055 = vmatpush1.bf16.msra.mxu0 0
  %3056 = vmatprep.subr.bf16.mxu0 0
  %3057 = vmatpush1.bf16.msra.mxu0 0
  %3058 = vmatprep.subr.bf16.mxu0 0
  %3059 = vmatpush1.bf16.msra.mxu0 0
  %3060 = vmatprep.subr.bf16.mxu0 0
  %3061 = vmatpush1.bf16.msra.mxu0 0
  %3062 = vmatprep.mubr.bf16.mxu0 0
  %3063 = vmatmul.mubr.bf16.gmra.mrb[0].mxu0 %v2987
  %v3064 = vpop.f32.mrb[0].mxu0
  %v3065 = vadd.f32 %v2847, %v3064
  %v3066 = vpop.f32.mrb[0].mxu0
  %v3067 = vadd.f32 %v2851, %v3066
  %v3068 = vpop.f32.mrb[0].mxu0
  %v3069 = vpop.f32.mrb[0].mxu0
  %3070 = vdwg.mxu0
  %3071 = vmatprep.subr.bf16.mxu0 %v2943
  %3072 = vmatpush1.bf16.msra.mxu0 %v2942
  %3073 = vmatprep.subr.bf16.mxu0 %v2949
  %3074 = vmatpush1.bf16.msra.mxu0 %v2948
  %3075 = vmatprep.subr.bf16.mxu0 %v2955
  %3076 = vmatpush1.bf16.msra.mxu0 %v2954
  %3077 = vmatprep.subr.bf16.mxu0 %v2961
  %3078 = vmatpush1.bf16.msra.mxu0 %v2960
  %3079 = vmatprep.subr.bf16.mxu0 0
  %3080 = vmatpush1.bf16.msra.mxu0 0
  %3081 = vmatprep.subr.bf16.mxu0 0
  %3082 = vmatpush1.bf16.msra.mxu0 0
  %3083 = vmatprep.subr.bf16.mxu0 0
  %3084 = vmatpush1.bf16.msra.mxu0 0
  %3085 = vmatprep.subr.bf16.mxu0 0
  %3086 = vmatpush1.bf16.msra.mxu0 0
  %3087 = vmatprep.subr.bf16.mxu0 0
  %3088 = vmatpush1.bf16.msra.mxu0 0
  %3089 = vmatprep.subr.bf16.mxu0 0
  %3090 = vmatpush1.bf16.msra.mxu0 0
  %3091 = vmatprep.subr.bf16.mxu0 0
  %3092 = vmatpush1.bf16.msra.mxu0 0
  %3093 = vmatprep.subr.bf16.mxu0 0
  %3094 = vmatpush1.bf16.msra.mxu0 0
  %3095 = vmatprep.subr.bf16.mxu0 0
  %3096 = vmatpush1.bf16.msra.mxu0 0
  %3097 = vmatprep.subr.bf16.mxu0 0
  %3098 = vmatpush1.bf16.msra.mxu0 0
  %3099 = vmatprep.subr.bf16.mxu0 0
  %3100 = vmatpush1.bf16.msra.mxu0 0
  %3101 = vmatprep.subr.bf16.mxu0 0
  %3102 = vmatpush1.bf16.msra.mxu0 0
  %3103 = vmatprep.mubr.bf16.mxu0 0
  %3104 = vmatmul.mubr.bf16.gmra.mrb[0].mxu0 %v2987
  %v3105 = vpop.f32.mrb[0].mxu0
  %v3106 = vadd.f32 %v2855, %v3105
  %v3107 = vpop.f32.mrb[0].mxu0
  %v3108 = vadd.f32 %v2859, %v3107
  %v3109 = vpop.f32.mrb[0].mxu0
  %v3110 = vpop.f32.mrb[0].mxu0
  %3111 = vdwg.mxu0
  %3112 = vst [vmem:[%s11 + $0x80] sm:$0xff] %v3106
  %3113 = vst [vmem:[%s11 + $0x88] sm:$0xff] %v3108
  %v3114 = vmul.f32 %v3065, 1.442695
  %v3115 = vpow.pop %v3114
  %v3116 = vmul.f32 %v3067, 1.442695
  %v3117 = vpow.pop %v3116
  %v3118 = vmul.f32 %v3115, 1.118034
  %v3119 = vmul.f32 %v3117, 1.118034
  %3120 = vst [vmem:[%s11 + $0x70] sm:$0xff] %v3118
  %3121 = vst [vmem:[%s11 + $0x78] sm:$0xff] %v3119
  %3123 = vrot.lane.b32.xlu0 %v3024, 96
  %v3124 = vpop.permute.xlu0 %3123
  %v3126 = vmax.f32 %v3024, %v3124
  %3127 = vrot.lane.b32.xlu0 %v3024, 64
  %v3128 = vpop.permute.xlu0 %3127
  %v3130 = vmax.f32 %v3126, %v3128
  %3131 = vrot.lane.b32.xlu0 %v3024, 32
  %v3132 = vpop.permute.xlu0 %3131
  %v3134 = vmax.f32 %v3130, %v3132
  %v3135 = vmax.f32 %v3134, %v3026
  %v3136 = vsub.f32 %v3024, %v3135
  %v3137 = vmul.f32 %v3136, 1.442695
  %v3138 = vpow.pop %v3137
  %3140 = vrot.lane.b32.xlu0 %v3135, 32
  %v3141 = vpop.permute.xlu0 %3140
  %v3143 = vsub.f32 %v3024, %v3141
  %v3144 = vmul.f32 %v3143, 1.442695
  %v3145 = vpow.pop %v3144
  %3146 = vrot.lane.b32.xlu0 %v3135, 64
  %v3147 = vpop.permute.xlu0 %3146
  %v3149 = vsub.f32 %v3024, %v3147
  %v3150 = vmul.f32 %v3149, 1.442695
  %v3151 = vpow.pop %v3150
  %3152 = vrot.lane.b32.xlu0 %v3135, 96
  %v3153 = vpop.permute.xlu0 %3152
  %v3155 = vsub.f32 %v3024, %v3153
  %v3156 = vmul.f32 %v3155, 1.442695
  %v3157 = vpow.pop %v3156
  %v3158 = vsub.f32 %v3026, %v3135
  %v3159 = vmul.f32 %v3158, 1.442695
  %v3160 = vpow.pop %v3159
  %3162 = vrot.lane.b32.xlu0 %v3145, 96
  %v3163 = vpop.permute.xlu0 %3162
  %v3165 = vadd.f32 %v3138, %v3163
  %3167 = vrot.lane.b32.xlu0 %v3151, 64
  %v3168 = vpop.permute.xlu0 %3167
  %v3170 = vadd.f32 %v3165, %v3168
  %3172 = vrot.lane.b32.xlu0 %v3157, 32
  %v3173 = vpop.permute.xlu0 %3172
  %v3175 = vadd.f32 %v3170, %v3173
  %v3176 = vadd.f32 %v3175, %v3160
  %v3177 = vmul.f32 %v3176, 1.25
  %v3178 = vrcp.pop %v3177
  %v3179 = vmul.f32 %v3138, %v3178
  %3181 = vrot.lane.b32.xlu0 %v3178, 32
  %v3182 = vpop.permute.xlu0 %3181
  %v3184 = vmul.f32 %v3145, %v3182
  %3185 = vrot.lane.b32.xlu0 %v3178, 64
  %v3186 = vpop.permute.xlu0 %3185
  %v3188 = vmul.f32 %v3151, %v3186
  %3189 = vrot.lane.b32.xlu0 %v3178, 96
  %v3190 = vpop.permute.xlu0 %3189
  %v3192 = vmul.f32 %v3157, %v3190
  %v3193 = vmul.f32 %v3160, %v3178
  %v3194 = vsel %vm2180, %v3179, %v3184
  %v3195 = vsel %vm260, %v3194, %v3188
  %v3196 = vsel %vm2183, %v3195, %v3192
  %v3197 = vsel %vm2180, %v3193, 0.0
  %3198 = vst [vmem:[%s11 + $0x60] sm:$0xff] %v3196
  %3199 = vst [vmem:[%s11 + $0x68] sm:$0xff] %v3197
  %v3200 = vld [vmem:[#allocation3 + $0x30] sm:$0xff]
  %v3201 = vld [vmem:[#allocation3 + $0x38] sm:$0xff]
  %v3202 = vld [vmem:[%s7] sm:$0xff]
  %v3203 = vld [vmem:[%s7 + $0x8] sm:$0xff]
  %v3204 = vld [vmem:[%s7 + $0x10] sm:$0xff]
  %v3205 = vld [vmem:[%s7 + $0x18] sm:$0xff]
  %v3206 = vld [vmem:[%s7 + $0x20] sm:$0xff]
  %v3207 = vld [vmem:[%s7 + $0x28] sm:$0xff]
  %v3208 = vld [vmem:[%s7 + $0x30] sm:$0xff]
  %v3209 = vld [vmem:[%s7 + $0x38] sm:$0xff]
  %v3218 = vunpack.c.l.b16 %v3202
  %v3219 = vunpack.c.h.b16 %v3202
  %v3220 = vunpack.c.l.b16 %v3203
  %v3221 = vunpack.c.h.b16 %v3203
  %v3222 = vunpack.c.l.b16 %v3204
  %v3223 = vunpack.c.h.b16 %v3204
  %v3224 = vunpack.c.l.b16 %v3205
  %v3225 = vunpack.c.h.b16 %v3205
  %v3226 = vunpack.c.l.b16 %v3206
  %v3227 = vunpack.c.h.b16 %v3206
  %v3228 = vunpack.c.l.b16 %v3207
  %v3229 = vunpack.c.h.b16 %v3207
  %v3230 = vunpack.c.l.b16 %v3208
  %v3231 = vunpack.c.h.b16 %v3208
  %v3232 = vunpack.c.l.b16 %v3209
  %v3233 = vunpack.c.h.b16 %v3209
  %v3234 = vpack.c.b16 %v3220, %v3218
  %v3235 = vpack.c.b16 %v3221, %v3219
  %v3236 = vpack.c.b16 %v3224, %v3222
  %v3237 = vpack.c.b16 %v3225, %v3223
  %v3238 = vpack.c.b16 %v3228, %v3226
  %v3239 = vpack.c.b16 %v3229, %v3227
  %v3240 = vpack.c.b16 %v3232, %v3230
  %v3241 = vpack.c.b16 %v3233, %v3231
  %3250 = vmatprep.subr.bf16.mxu0 %v3235
  %3251 = vmatpush1.bf16.msra.mxu0 %v3234
  %3252 = vmatprep.subr.bf16.mxu0 %v3237
  %3253 = vmatpush1.bf16.msra.mxu0 %v3236
  %3254 = vmatprep.subr.bf16.mxu0 %v3239
  %3255 = vmatpush1.bf16.msra.mxu0 %v3238
  %3256 = vmatprep.subr.bf16.mxu0 %v3241
  %3257 = vmatpush1.bf16.msra.mxu0 %v3240
  %3258 = vmatprep.subr.bf16.mxu0 0
  %3259 = vmatpush1.bf16.msra.mxu0 0
  %3260 = vmatprep.subr.bf16.mxu0 0
  %3261 = vmatpush1.bf16.msra.mxu0 0
  %3262 = vmatprep.subr.bf16.mxu0 0
  %3263 = vmatpush1.bf16.msra.mxu0 0
  %3264 = vmatprep.subr.bf16.mxu0 0
  %3265 = vmatpush1.bf16.msra.mxu0 0
  %3266 = vmatprep.subr.bf16.mxu0 0
  %3267 = vmatpush1.bf16.msra.mxu0 0
  %3268 = vmatprep.subr.bf16.mxu0 0
  %3269 = vmatpush1.bf16.msra.mxu0 0
  %3270 = vmatprep.subr.bf16.mxu0 0
  %3271 = vmatpush1.bf16.msra.mxu0 0
  %3272 = vmatprep.subr.bf16.mxu0 0
  %3273 = vmatpush1.bf16.msra.mxu0 0
  %3274 = vmatprep.subr.bf16.mxu0 0
  %3275 = vmatpush1.bf16.msra.mxu0 0
  %3276 = vmatprep.subr.bf16.mxu0 0
  %3277 = vmatpush1.bf16.msra.mxu0 0
  %3278 = vmatprep.subr.bf16.mxu0 0
  %3279 = vmatpush1.bf16.msra.mxu0 0
  %3280 = vmatprep.subr.bf16.mxu0 0
  %3281 = vmatpush1.bf16.msra.mxu0 0
  %3282 = vmatprep.mubr.bf16.mxu0 0
  %3283 = vmatmul.mubr.bf16.gmra.mrb[0].mxu0 %v2987
  %v3284 = vpop.f32.mrb[0].mxu0
  %v3285 = vadd.f32 0.0, %v3284
  %v3286 = vpop.f32.mrb[0].mxu0
  %v3287 = vadd.f32 0.0, %v3286
  %v3288 = vpop.f32.mrb[0].mxu0
  %v3289 = vpop.f32.mrb[0].mxu0
  %3290 = vdwg.mxu0
  %v3291 = vadd.f32 %v3200, %v3285
  %v3292 = vadd.f32 %v3201, %v3287
  %v3293 = vxor.u32 %v3291, 2147483648
  %v3294 = vmul.f32 %v3293, 1.442695
  %v3295 = vpow.pop %v3294
  %v3296 = vadd.f32 %v3295, 1.0
  %v3297 = vrcp.pop %v3296
  %v3298 = vmul.f32 1.0, %v3297
  %v3299 = vxor.u32 %v3292, 2147483648
  %v3300 = vmul.f32 %v3299, 1.442695
  %v3301 = vpow.pop %v3300
  %v3302 = vadd.f32 %v3301, 1.0
  %v3303 = vrcp.pop %v3302
  %v3304 = vmul.f32 1.0, %v3303
  %v3305 = vtanh.pop %v3292
  %v3306 = vmul.f32 %v3298, %v2806
  %v3307 = vmul.f32 %v3298, %v3305
  %3309 = vrot.lane.b32.xlu0 %v3307, 64
  %v3310 = vpop.permute.xlu0 %3309
  %v3312 = vadd.f32 %v3306, %v3310
  %v3313 = vtanh.pop %v3312
  %v3314 = vmul.f32 %v3304, %v3313
  %v3315 = vpack.c.bf16 %v3314, %v3314
  %v3316 = vld [vmem:[%s9] sm:$0xff]
  %v3317 = vld [vmem:[%s9 + $0x8] sm:$0xff]
  %v3318 = vld [vmem:[%s9 + $0x10] sm:$0xff]
  %v3319 = vld [vmem:[%s9 + $0x18] sm:$0xff]
  %v3320 = vld [vmem:[%s9 + $0x20] sm:$0xff]
  %v3321 = vld [vmem:[%s9 + $0x28] sm:$0xff]
  %v3322 = vld [vmem:[%s9 + $0x30] sm:$0xff]
  %v3323 = vld [vmem:[%s9 + $0x38] sm:$0xff]
  %v3324 = vld [vmem:[%s9 + $0x40] sm:$0xff]
  %v3325 = vld [vmem:[%s9 + $0x48] sm:$0xff]
  %v3326 = vld [vmem:[%s9 + $0x50] sm:$0xff]
  %v3327 = vld [vmem:[%s9 + $0x58] sm:$0xff]
  %v3328 = vld [vmem:[%s9 + $0x60] sm:$0xff]
  %v3329 = vld [vmem:[%s9 + $0x68] sm:$0xff]
  %v3330 = vld [vmem:[%s9 + $0x70] sm:$0xff]
  %v3331 = vld [vmem:[%s9 + $0x78] sm:$0xff]
  %v3332 = vld [vmem:[%s9 + $0x80] sm:$0xff]
  %v3333 = vld [vmem:[%s9 + $0x88] sm:$0xff]
  %v3334 = vld [vmem:[%s9 + $0x90] sm:$0xff]
  %v3335 = vld [vmem:[%s9 + $0x98] sm:$0xff]
  %v3336 = vld [vmem:[%s9 + $0xa0] sm:$0xff]
  %v3337 = vld [vmem:[%s9 + $0xa8] sm:$0xff]
  %v3338 = vld [vmem:[%s9 + $0xb0] sm:$0xff]
  %v3339 = vld [vmem:[%s9 + $0xb8] sm:$0xff]
  %v3340 = vld [vmem:[%s10] sm:$0x3f]
  %v3342 = vlaneseq
  %v3343 = vshrl.u32 %v3342, 7
  %v3344 = vsub.s32 0, %v3343
  %v3345 = vrot.slane %v3340, %v3344
  %v3346 = vlaneseq
  %v3347 = vshrl.u32 %v3346, 7
  %v3348 = vsub.s32 1, %v3347
  %v3349 = vrot.slane %v3340, %v3348
  %v3350 = vlaneseq
  %v3351 = vshrl.u32 %v3350, 7
  %v3352 = vsub.s32 2, %v3351
  %v3353 = vrot.slane %v3340, %v3352
  %v3354 = vlaneseq
  %v3355 = vshrl.u32 %v3354, 7
  %v3356 = vsub.s32 3, %v3355
  %v3357 = vrot.slane %v3340, %v3356
  %v3358 = vlaneseq
  %v3359 = vshrl.u32 %v3358, 7
  %v3360 = vsub.s32 4, %v3359
  %v3361 = vrot.slane %v3340, %v3360
  %v3362 = vlaneseq
  %v3363 = vshrl.u32 %v3362, 7
  %v3364 = vsub.s32 5, %v3363
  %v3365 = vrot.slane %v3340, %v3364
  %v3396 = vunpack.c.l.b16 %v3316
  %v3397 = vunpack.c.h.b16 %v3316
  %v3398 = vunpack.c.l.b16 %v3317
  %v3399 = vunpack.c.h.b16 %v3317
  %v3400 = vunpack.c.l.b16 %v3318
  %v3401 = vunpack.c.h.b16 %v3318
  %v3402 = vunpack.c.l.b16 %v3319
  %v3403 = vunpack.c.h.b16 %v3319
  %v3404 = vunpack.c.l.b16 %v3320
  %v3405 = vunpack.c.h.b16 %v3320
  %v3406 = vunpack.c.l.b16 %v3321
  %v3407 = vunpack.c.h.b16 %v3321
  %v3408 = vunpack.c.l.b16 %v3322
  %v3409 = vunpack.c.h.b16 %v3322
  %v3410 = vunpack.c.l.b16 %v3323
  %v3411 = vunpack.c.h.b16 %v3323
  %v3412 = vunpack.c.l.b16 %v3324
  %v3413 = vunpack.c.h.b16 %v3324
  %v3414 = vunpack.c.l.b16 %v3325
  %v3415 = vunpack.c.h.b16 %v3325
  %v3416 = vunpack.c.l.b16 %v3326
  %v3417 = vunpack.c.h.b16 %v3326
  %v3418 = vunpack.c.l.b16 %v3327
  %v3419 = vunpack.c.h.b16 %v3327
  %v3420 = vunpack.c.l.b16 %v3328
  %v3421 = vunpack.c.h.b16 %v3328
  %v3422 = vunpack.c.l.b16 %v3329
  %v3423 = vunpack.c.h.b16 %v3329
  %v3424 = vunpack.c.l.b16 %v3330
  %v3425 = vunpack.c.h.b16 %v3330
  %v3426 = vunpack.c.l.b16 %v3331
  %v3427 = vunpack.c.h.b16 %v3331
  %v3428 = vunpack.c.l.b16 %v3332
  %v3429 = vunpack.c.h.b16 %v3332
  %v3430 = vunpack.c.l.b16 %v3333
  %v3431 = vunpack.c.h.b16 %v3333
  %v3432 = vunpack.c.l.b16 %v3334
  %v3433 = vunpack.c.h.b16 %v3334
  %v3434 = vunpack.c.l.b16 %v3335
  %v3435 = vunpack.c.h.b16 %v3335
  %v3436 = vunpack.c.l.b16 %v3336
  %v3437 = vunpack.c.h.b16 %v3336
  %v3438 = vunpack.c.l.b16 %v3337
  %v3439 = vunpack.c.h.b16 %v3337
  %v3440 = vunpack.c.l.b16 %v3338
  %v3441 = vunpack.c.h.b16 %v3338
  %v3442 = vunpack.c.l.b16 %v3339
  %v3443 = vunpack.c.h.b16 %v3339
  %v3444 = vpack.c.b16 %v3402, %v3396
  %v3445 = vpack.c.b16 %v3403, %v3397
  %v3446 = vpack.c.b16 %v3404, %v3398
  %v3447 = vpack.c.b16 %v3405, %v3399
  %v3448 = vpack.c.b16 %v3406, %v3400
  %v3449 = vpack.c.b16 %v3407, %v3401
  %v3450 = vpack.c.b16 %v3414, %v3408
  %v3451 = vpack.c.b16 %v3415, %v3409
  %v3452 = vpack.c.b16 %v3416, %v3410
  %v3453 = vpack.c.b16 %v3417, %v3411
  %v3454 = vpack.c.b16 %v3418, %v3412
  %v3455 = vpack.c.b16 %v3419, %v3413
  %v3456 = vpack.c.b16 %v3426, %v3420
  %v3457 = vpack.c.b16 %v3427, %v3421
  %v3458 = vpack.c.b16 %v3428, %v3422
  %v3459 = vpack.c.b16 %v3429, %v3423
  %v3460 = vpack.c.b16 %v3430, %v3424
  %v3461 = vpack.c.b16 %v3431, %v3425
  %v3462 = vpack.c.b16 %v3438, %v3432
  %v3463 = vpack.c.b16 %v3439, %v3433
  %v3464 = vpack.c.b16 %v3440, %v3434
  %v3465 = vpack.c.b16 %v3441, %v3435
  %v3466 = vpack.c.b16 %v3442, %v3436
  %v3467 = vpack.c.b16 %v3443, %v3437
  %v3493 = vsel %vm260, %v3315, 0
  %3495 = vmatprep.subr.bf16.mxu0 %v3445
  %3496 = vmatpush1.bf16.msra.mxu0 %v3444
  %3497 = vmatprep.subr.bf16.mxu0 %v3451
  %3498 = vmatpush1.bf16.msra.mxu0 %v3450
  %3499 = vmatprep.subr.bf16.mxu0 %v3457
  %3500 = vmatpush1.bf16.msra.mxu0 %v3456
  %3501 = vmatprep.subr.bf16.mxu0 %v3463
  %3502 = vmatpush1.bf16.msra.mxu0 %v3462
  %3503 = vmatprep.subr.bf16.mxu0 0
  %3504 = vmatpush1.bf16.msra.mxu0 0
  %3505 = vmatprep.subr.bf16.mxu0 0
  %3506 = vmatpush1.bf16.msra.mxu0 0
  %3507 = vmatprep.subr.bf16.mxu0 0
  %3508 = vmatpush1.bf16.msra.mxu0 0
  %3509 = vmatprep.subr.bf16.mxu0 0
  %3510 = vmatpush1.bf16.msra.mxu0 0
  %3511 = vmatprep.subr.bf16.mxu0 0
  %3512 = vmatpush1.bf16.msra.mxu0 0
  %3513 = vmatprep.subr.bf16.mxu0 0
  %3514 = vmatpush1.bf16.msra.mxu0 0
  %3515 = vmatprep.subr.bf16.mxu0 0
  %3516 = vmatpush1.bf16.msra.mxu0 0
  %3517 = vmatprep.subr.bf16.mxu0 0
  %3518 = vmatpush1.bf16.msra.mxu0 0
  %3519 = vmatprep.subr.bf16.mxu0 0
  %3520 = vmatpush1.bf16.msra.mxu0 0
  %3521 = vmatprep.subr.bf16.mxu0 0
  %3522 = vmatpush1.bf16.msra.mxu0 0
  %3523 = vmatprep.subr.bf16.mxu0 0
  %3524 = vmatpush1.bf16.msra.mxu0 0
  %3525 = vmatprep.subr.bf16.mxu0 0
  %3526 = vmatpush1.bf16.msra.mxu0 0
  %3527 = vmatprep.mubr.bf16.mxu0 0
  %3528 = vmatmul.mubr.bf16.gmra.mrb[0].mxu0 %v3493
  %v3529 = vpop.f32.mrb[0].mxu0
  %v3530 = vadd.f32 %v3345, %v3529
  %v3531 = vpop.f32.mrb[0].mxu0
  %v3532 = vadd.f32 %v3349, %v3531
  %v3533 = vpop.f32.mrb[0].mxu0
  %v3534 = vpop.f32.mrb[0].mxu0
  %3535 = vdwg.mxu0
  %3536 = vmatprep.subr.bf16.mxu0 %v3447
  %3537 = vmatpush1.bf16.msra.mxu0 %v3446
  %3538 = vmatprep.subr.bf16.mxu0 %v3453
  %3539 = vmatpush1.bf16.msra.mxu0 %v3452
  %3540 = vmatprep.subr.bf16.mxu0 %v3459
  %3541 = vmatpush1.bf16.msra.mxu0 %v3458
  %3542 = vmatprep.subr.bf16.mxu0 %v3465
  %3543 = vmatpush1.bf16.msra.mxu0 %v3464
  %3544 = vmatprep.subr.bf16.mxu0 0
  %3545 = vmatpush1.bf16.msra.mxu0 0
  %3546 = vmatprep.subr.bf16.mxu0 0
  %3547 = vmatpush1.bf16.msra.mxu0 0
  %3548 = vmatprep.subr.bf16.mxu0 0
  %3549 = vmatpush1.bf16.msra.mxu0 0
  %3550 = vmatprep.subr.bf16.mxu0 0
  %3551 = vmatpush1.bf16.msra.mxu0 0
  %3552 = vmatprep.subr.bf16.mxu0 0
  %3553 = vmatpush1.bf16.msra.mxu0 0
  %3554 = vmatprep.subr.bf16.mxu0 0
  %3555 = vmatpush1.bf16.msra.mxu0 0
  %3556 = vmatprep.subr.bf16.mxu0 0
  %3557 = vmatpush1.bf16.msra.mxu0 0
  %3558 = vmatprep.subr.bf16.mxu0 0
  %3559 = vmatpush1.bf16.msra.mxu0 0
  %3560 = vmatprep.subr.bf16.mxu0 0
  %3561 = vmatpush1.bf16.msra.mxu0 0
  %3562 = vmatprep.subr.bf16.mxu0 0
  %3563 = vmatpush1.bf16.msra.mxu0 0
  %3564 = vmatprep.subr.bf16.mxu0 0
  %3565 = vmatpush1.bf16.msra.mxu0 0
  %3566 = vmatprep.subr.bf16.mxu0 0
  %3567 = vmatpush1.bf16.msra.mxu0 0
  %3568 = vmatprep.mubr.bf16.mxu0 0
  %3569 = vmatmul.mubr.bf16.gmra.mrb[0].mxu0 %v3493
  %v3570 = vpop.f32.mrb[0].mxu0
  %v3571 = vadd.f32 %v3353, %v3570
  %v3572 = vpop.f32.mrb[0].mxu0
  %v3573 = vadd.f32 %v3357, %v3572
  %v3574 = vpop.f32.mrb[0].mxu0
  %v3575 = vpop.f32.mrb[0].mxu0
  %3576 = vdwg.mxu0
  %3577 = vmatprep.subr.bf16.mxu0 %v3449
  %3578 = vmatpush1.bf16.msra.mxu0 %v3448
  %3579 = vmatprep.subr.bf16.mxu0 %v3455
  %3580 = vmatpush1.bf16.msra.mxu0 %v3454
  %3581 = vmatprep.subr.bf16.mxu0 %v3461
  %3582 = vmatpush1.bf16.msra.mxu0 %v3460
  %3583 = vmatprep.subr.bf16.mxu0 %v3467
  %3584 = vmatpush1.bf16.msra.mxu0 %v3466
  %3585 = vmatprep.subr.bf16.mxu0 0
  %3586 = vmatpush1.bf16.msra.mxu0 0
  %3587 = vmatprep.subr.bf16.mxu0 0
  %3588 = vmatpush1.bf16.msra.mxu0 0
  %3589 = vmatprep.subr.bf16.mxu0 0
  %3590 = vmatpush1.bf16.msra.mxu0 0
  %3591 = vmatprep.subr.bf16.mxu0 0
  %3592 = vmatpush1.bf16.msra.mxu0 0
  %3593 = vmatprep.subr.bf16.mxu0 0
  %3594 = vmatpush1.bf16.msra.mxu0 0
  %3595 = vmatprep.subr.bf16.mxu0 0
  %3596 = vmatpush1.bf16.msra.mxu0 0
  %3597 = vmatprep.subr.bf16.mxu0 0
  %3598 = vmatpush1.bf16.msra.mxu0 0
  %3599 = vmatprep.subr.bf16.mxu0 0
  %3600 = vmatpush1.bf16.msra.mxu0 0
  %3601 = vmatprep.subr.bf16.mxu0 0
  %3602 = vmatpush1.bf16.msra.mxu0 0
  %3603 = vmatprep.subr.bf16.mxu0 0
  %3604 = vmatpush1.bf16.msra.mxu0 0
  %3605 = vmatprep.subr.bf16.mxu0 0
  %3606 = vmatpush1.bf16.msra.mxu0 0
  %3607 = vmatprep.subr.bf16.mxu0 0
  %3608 = vmatpush1.bf16.msra.mxu0 0
  %3609 = vmatprep.mubr.bf16.mxu0 0
  %3610 = vmatmul.mubr.bf16.gmra.mrb[0].mxu0 %v3493
  %v3611 = vpop.f32.mrb[0].mxu0
  %v3612 = vadd.f32 %v3361, %v3611
  %v3613 = vpop.f32.mrb[0].mxu0
  %v3614 = vadd.f32 %v3365, %v3613
  %v3615 = vpop.f32.mrb[0].mxu0
  %v3616 = vpop.f32.mrb[0].mxu0
  %3617 = vdwg.mxu0
  %3618 = vst [vmem:[%s11 + $0xb0] sm:$0xff] %v3612
  %3619 = vst [vmem:[%s11 + $0xb8] sm:$0xff] %v3614
  %v3620 = vmul.f32 %v3571, 1.442695
  %v3621 = vpow.pop %v3620
  %v3622 = vmul.f32 %v3573, 1.442695
  %v3623 = vpow.pop %v3622
  %v3624 = vmul.f32 %v3621, 1.118034
  %v3625 = vmul.f32 %v3623, 1.118034
  %3626 = vst [vmem:[%s11 + $0xa0] sm:$0xff] %v3624
  %3627 = vst [vmem:[%s11 + $0xa8] sm:$0xff] %v3625
  %3629 = vrot.lane.b32.xlu0 %v3530, 96
  %v3630 = vpop.permute.xlu0 %3629
  %v3632 = vmax.f32 %v3530, %v3630
  %3633 = vrot.lane.b32.xlu0 %v3530, 64
  %v3634 = vpop.permute.xlu0 %3633
  %v3636 = vmax.f32 %v3632, %v3634
  %3637 = vrot.lane.b32.xlu0 %v3530, 32
  %v3638 = vpop.permute.xlu0 %3637
  %v3640 = vmax.f32 %v3636, %v3638
  %v3641 = vmax.f32 %v3640, %v3532
  %v3642 = vsub.f32 %v3530, %v3641
  %v3643 = vmul.f32 %v3642, 1.442695
  %v3644 = vpow.pop %v3643
  %3646 = vrot.lane.b32.xlu0 %v3641, 32
  %v3647 = vpop.permute.xlu0 %3646
  %v3649 = vsub.f32 %v3530, %v3647
  %v3650 = vmul.f32 %v3649, 1.442695
  %v3651 = vpow.pop %v3650
  %3652 = vrot.lane.b32.xlu0 %v3641, 64
  %v3653 = vpop.permute.xlu0 %3652
  %v3655 = vsub.f32 %v3530, %v3653
  %v3656 = vmul.f32 %v3655, 1.442695
  %v3657 = vpow.pop %v3656
  %3658 = vrot.lane.b32.xlu0 %v3641, 96
  %v3659 = vpop.permute.xlu0 %3658
  %v3661 = vsub.f32 %v3530, %v3659
  %v3662 = vmul.f32 %v3661, 1.442695
  %v3663 = vpow.pop %v3662
  %v3664 = vsub.f32 %v3532, %v3641
  %v3665 = vmul.f32 %v3664, 1.442695
  %v3666 = vpow.pop %v3665
  %3668 = vrot.lane.b32.xlu0 %v3651, 96
  %v3669 = vpop.permute.xlu0 %3668
  %v3671 = vadd.f32 %v3644, %v3669
  %3673 = vrot.lane.b32.xlu0 %v3657, 64
  %v3674 = vpop.permute.xlu0 %3673
  %v3676 = vadd.f32 %v3671, %v3674
  %3678 = vrot.lane.b32.xlu0 %v3663, 32
  %v3679 = vpop.permute.xlu0 %3678
  %v3681 = vadd.f32 %v3676, %v3679
  %v3682 = vadd.f32 %v3681, %v3666
  %v3683 = vmul.f32 %v3682, 1.25
  %v3684 = vrcp.pop %v3683
  %v3685 = vmul.f32 %v3644, %v3684
  %3687 = vrot.lane.b32.xlu0 %v3684, 32
  %v3688 = vpop.permute.xlu0 %3687
  %v3690 = vmul.f32 %v3651, %v3688
  %3691 = vrot.lane.b32.xlu0 %v3684, 64
  %v3692 = vpop.permute.xlu0 %3691
  %v3694 = vmul.f32 %v3657, %v3692
  %3695 = vrot.lane.b32.xlu0 %v3684, 96
  %v3696 = vpop.permute.xlu0 %3695
  %v3698 = vmul.f32 %v3663, %v3696
  %v3699 = vmul.f32 %v3666, %v3684
  %v3700 = vsel %vm2180, %v3685, %v3690
  %v3701 = vsel %vm260, %v3700, %v3694
  %v3702 = vsel %vm2183, %v3701, %v3698
  %v3703 = vsel %vm2180, %v3699, 0.0
  %3704 = vst [vmem:[%s11 + $0x90] sm:$0xff] %v3702
  %3705 = vst [vmem:[%s11 + $0x98] sm:$0xff] %v3703
  %v3706 = vld [vmem:[#allocation3 + $0x40] sm:$0xff]
  %v3707 = vld [vmem:[#allocation3 + $0x48] sm:$0xff]
  %v3708 = vld [vmem:[%s7] sm:$0xff]
  %v3709 = vld [vmem:[%s7 + $0x8] sm:$0xff]
  %v3710 = vld [vmem:[%s7 + $0x10] sm:$0xff]
  %v3711 = vld [vmem:[%s7 + $0x18] sm:$0xff]
  %v3712 = vld [vmem:[%s7 + $0x20] sm:$0xff]
  %v3713 = vld [vmem:[%s7 + $0x28] sm:$0xff]
  %v3714 = vld [vmem:[%s7 + $0x30] sm:$0xff]
  %v3715 = vld [vmem:[%s7 + $0x38] sm:$0xff]
  %v3724 = vunpack.c.l.b16 %v3708
  %v3725 = vunpack.c.h.b16 %v3708
  %v3726 = vunpack.c.l.b16 %v3709
  %v3727 = vunpack.c.h.b16 %v3709
  %v3728 = vunpack.c.l.b16 %v3710
  %v3729 = vunpack.c.h.b16 %v3710
  %v3730 = vunpack.c.l.b16 %v3711
  %v3731 = vunpack.c.h.b16 %v3711
  %v3732 = vunpack.c.l.b16 %v3712
  %v3733 = vunpack.c.h.b16 %v3712
  %v3734 = vunpack.c.l.b16 %v3713
  %v3735 = vunpack.c.h.b16 %v3713
  %v3736 = vunpack.c.l.b16 %v3714
  %v3737 = vunpack.c.h.b16 %v3714
  %v3738 = vunpack.c.l.b16 %v3715
  %v3739 = vunpack.c.h.b16 %v3715
  %v3740 = vpack.c.b16 %v3726, %v3724
  %v3741 = vpack.c.b16 %v3727, %v3725
  %v3742 = vpack.c.b16 %v3730, %v3728
  %v3743 = vpack.c.b16 %v3731, %v3729
  %v3744 = vpack.c.b16 %v3734, %v3732
  %v3745 = vpack.c.b16 %v3735, %v3733
  %v3746 = vpack.c.b16 %v3738, %v3736
  %v3747 = vpack.c.b16 %v3739, %v3737
  %3756 = vmatprep.subr.bf16.mxu0 %v3741
  %3757 = vmatpush1.bf16.msra.mxu0 %v3740
  %3758 = vmatprep.subr.bf16.mxu0 %v3743
  %3759 = vmatpush1.bf16.msra.mxu0 %v3742
  %3760 = vmatprep.subr.bf16.mxu0 %v3745
  %3761 = vmatpush1.bf16.msra.mxu0 %v3744
  %3762 = vmatprep.subr.bf16.mxu0 %v3747
  %3763 = vmatpush1.bf16.msra.mxu0 %v3746
  %3764 = vmatprep.subr.bf16.mxu0 0
  %3765 = vmatpush1.bf16.msra.mxu0 0
  %3766 = vmatprep.subr.bf16.mxu0 0
  %3767 = vmatpush1.bf16.msra.mxu0 0
  %3768 = vmatprep.subr.bf16.mxu0 0
  %3769 = vmatpush1.bf16.msra.mxu0 0
  %3770 = vmatprep.subr.bf16.mxu0 0
  %3771 = vmatpush1.bf16.msra.mxu0 0
  %3772 = vmatprep.subr.bf16.mxu0 0
  %3773 = vmatpush1.bf16.msra.mxu0 0
  %3774 = vmatprep.subr.bf16.mxu0 0
  %3775 = vmatpush1.bf16.msra.mxu0 0
  %3776 = vmatprep.subr.bf16.mxu0 0
  %3777 = vmatpush1.bf16.msra.mxu0 0
  %3778 = vmatprep.subr.bf16.mxu0 0
  %3779 = vmatpush1.bf16.msra.mxu0 0
  %3780 = vmatprep.subr.bf16.mxu0 0
  %3781 = vmatpush1.bf16.msra.mxu0 0
  %3782 = vmatprep.subr.bf16.mxu0 0
  %3783 = vmatpush1.bf16.msra.mxu0 0
  %3784 = vmatprep.subr.bf16.mxu0 0
  %3785 = vmatpush1.bf16.msra.mxu0 0
  %3786 = vmatprep.subr.bf16.mxu0 0
  %3787 = vmatpush1.bf16.msra.mxu0 0
  %3788 = vmatprep.mubr.bf16.mxu0 0
  %3789 = vmatmul.mubr.bf16.gmra.mrb[0].mxu0 %v3493
  %v3790 = vpop.f32.mrb[0].mxu0
  %v3791 = vadd.f32 0.0, %v3790
  %v3792 = vpop.f32.mrb[0].mxu0
  %v3793 = vadd.f32 0.0, %v3792
  %v3794 = vpop.f32.mrb[0].mxu0
  %v3795 = vpop.f32.mrb[0].mxu0
  %3796 = vdwg.mxu0
  %v3797 = vadd.f32 %v3706, %v3791
  %v3798 = vadd.f32 %v3707, %v3793
  %v3799 = vxor.u32 %v3797, 2147483648
  %v3800 = vmul.f32 %v3799, 1.442695
  %v3801 = vpow.pop %v3800
  %v3802 = vadd.f32 %v3801, 1.0
  %v3803 = vrcp.pop %v3802
  %v3804 = vmul.f32 1.0, %v3803
  %v3805 = vxor.u32 %v3798, 2147483648
  %v3806 = vmul.f32 %v3805, 1.442695
  %v3807 = vpow.pop %v3806
  %v3808 = vadd.f32 %v3807, 1.0
  %v3809 = vrcp.pop %v3808
  %v3810 = vmul.f32 1.0, %v3809
  %v3811 = vtanh.pop %v3798
  %v3812 = vmul.f32 %v3804, %v3312
  %v3813 = vmul.f32 %v3804, %v3811
  %3815 = vrot.lane.b32.xlu0 %v3813, 64
  %v3816 = vpop.permute.xlu0 %3815
  %v3818 = vadd.f32 %v3812, %v3816
  %v3819 = vtanh.pop %v3818
  %v3820 = vmul.f32 %v3810, %v3819
  %v3821 = vpack.c.bf16 %v3820, %v3820
  %v3822 = vld [vmem:[%s9] sm:$0xff]
  %v3823 = vld [vmem:[%s9 + $0x8] sm:$0xff]
  %v3824 = vld [vmem:[%s9 + $0x10] sm:$0xff]
  %v3825 = vld [vmem:[%s9 + $0x18] sm:$0xff]
  %v3826 = vld [vmem:[%s9 + $0x20] sm:$0xff]
  %v3827 = vld [vmem:[%s9 + $0x28] sm:$0xff]
  %v3828 = vld [vmem:[%s9 + $0x30] sm:$0xff]
  %v3829 = vld [vmem:[%s9 + $0x38] sm:$0xff]
  %v3830 = vld [vmem:[%s9 + $0x40] sm:$0xff]
  %v3831 = vld [vmem:[%s9 + $0x48] sm:$0xff]
  %v3832 = vld [vmem:[%s9 + $0x50] sm:$0xff]
  %v3833 = vld [vmem:[%s9 + $0x58] sm:$0xff]
  %v3834 = vld [vmem:[%s9 + $0x60] sm:$0xff]
  %v3835 = vld [vmem:[%s9 + $0x68] sm:$0xff]
  %v3836 = vld [vmem:[%s9 + $0x70] sm:$0xff]
  %v3837 = vld [vmem:[%s9 + $0x78] sm:$0xff]
  %v3838 = vld [vmem:[%s9 + $0x80] sm:$0xff]
  %v3839 = vld [vmem:[%s9 + $0x88] sm:$0xff]
  %v3840 = vld [vmem:[%s9 + $0x90] sm:$0xff]
  %v3841 = vld [vmem:[%s9 + $0x98] sm:$0xff]
  %v3842 = vld [vmem:[%s9 + $0xa0] sm:$0xff]
  %v3843 = vld [vmem:[%s9 + $0xa8] sm:$0xff]
  %v3844 = vld [vmem:[%s9 + $0xb0] sm:$0xff]
  %v3845 = vld [vmem:[%s9 + $0xb8] sm:$0xff]
  %v3846 = vld [vmem:[%s10] sm:$0x3f]
  %v3848 = vlaneseq
  %v3849 = vshrl.u32 %v3848, 7
  %v3850 = vsub.s32 0, %v3849
  %v3851 = vrot.slane %v3846, %v3850
  %v3852 = vlaneseq
  %v3853 = vshrl.u32 %v3852, 7
  %v3854 = vsub.s32 1, %v3853
  %v3855 = vrot.slane %v3846, %v3854
  %v3856 = vlaneseq
  %v3857 = vshrl.u32 %v3856, 7
  %v3858 = vsub.s32 2, %v3857
  %v3859 = vrot.slane %v3846, %v3858
  %v3860 = vlaneseq
  %v3861 = vshrl.u32 %v3860, 7
  %v3862 = vsub.s32 3, %v3861
  %v3863 = vrot.slane %v3846, %v3862
  %v3864 = vlaneseq
  %v3865 = vshrl.u32 %v3864, 7
  %v3866 = vsub.s32 4, %v3865
  %v3867 = vrot.slane %v3846, %v3866
  %v3868 = vlaneseq
  %v3869 = vshrl.u32 %v3868, 7
  %v3870 = vsub.s32 5, %v3869
  %v3871 = vrot.slane %v3846, %v3870
  %v3902 = vunpack.c.l.b16 %v3822
  %v3903 = vunpack.c.h.b16 %v3822
  %v3904 = vunpack.c.l.b16 %v3823
  %v3905 = vunpack.c.h.b16 %v3823
  %v3906 = vunpack.c.l.b16 %v3824
  %v3907 = vunpack.c.h.b16 %v3824
  %v3908 = vunpack.c.l.b16 %v3825
  %v3909 = vunpack.c.h.b16 %v3825
  %v3910 = vunpack.c.l.b16 %v3826
  %v3911 = vunpack.c.h.b16 %v3826
  %v3912 = vunpack.c.l.b16 %v3827
  %v3913 = vunpack.c.h.b16 %v3827
  %v3914 = vunpack.c.l.b16 %v3828
  %v3915 = vunpack.c.h.b16 %v3828
  %v3916 = vunpack.c.l.b16 %v3829
  %v3917 = vunpack.c.h.b16 %v3829
  %v3918 = vunpack.c.l.b16 %v3830
  %v3919 = vunpack.c.h.b16 %v3830
  %v3920 = vunpack.c.l.b16 %v3831
  %v3921 = vunpack.c.h.b16 %v3831
  %v3922 = vunpack.c.l.b16 %v3832
  %v3923 = vunpack.c.h.b16 %v3832
  %v3924 = vunpack.c.l.b16 %v3833
  %v3925 = vunpack.c.h.b16 %v3833
  %v3926 = vunpack.c.l.b16 %v3834
  %v3927 = vunpack.c.h.b16 %v3834
  %v3928 = vunpack.c.l.b16 %v3835
  %v3929 = vunpack.c.h.b16 %v3835
  %v3930 = vunpack.c.l.b16 %v3836
  %v3931 = vunpack.c.h.b16 %v3836
  %v3932 = vunpack.c.l.b16 %v3837
  %v3933 = vunpack.c.h.b16 %v3837
  %v3934 = vunpack.c.l.b16 %v3838
  %v3935 = vunpack.c.h.b16 %v3838
  %v3936 = vunpack.c.l.b16 %v3839
  %v3937 = vunpack.c.h.b16 %v3839
  %v3938 = vunpack.c.l.b16 %v3840
  %v3939 = vunpack.c.h.b16 %v3840
  %v3940 = vunpack.c.l.b16 %v3841
  %v3941 = vunpack.c.h.b16 %v3841
  %v3942 = vunpack.c.l.b16 %v3842
  %v3943 = vunpack.c.h.b16 %v3842
  %v3944 = vunpack.c.l.b16 %v3843
  %v3945 = vunpack.c.h.b16 %v3843
  %v3946 = vunpack.c.l.b16 %v3844
  %v3947 = vunpack.c.h.b16 %v3844
  %v3948 = vunpack.c.l.b16 %v3845
  %v3949 = vunpack.c.h.b16 %v3845
  %v3950 = vpack.c.b16 %v3908, %v3902
  %v3951 = vpack.c.b16 %v3909, %v3903
  %v3952 = vpack.c.b16 %v3910, %v3904
  %v3953 = vpack.c.b16 %v3911, %v3905
  %v3954 = vpack.c.b16 %v3912, %v3906
  %v3955 = vpack.c.b16 %v3913, %v3907
  %v3956 = vpack.c.b16 %v3920, %v3914
  %v3957 = vpack.c.b16 %v3921, %v3915
  %v3958 = vpack.c.b16 %v3922, %v3916
  %v3959 = vpack.c.b16 %v3923, %v3917
  %v3960 = vpack.c.b16 %v3924, %v3918
  %v3961 = vpack.c.b16 %v3925, %v3919
  %v3962 = vpack.c.b16 %v3932, %v3926
  %v3963 = vpack.c.b16 %v3933, %v3927
  %v3964 = vpack.c.b16 %v3934, %v3928
  %v3965 = vpack.c.b16 %v3935, %v3929
  %v3966 = vpack.c.b16 %v3936, %v3930
  %v3967 = vpack.c.b16 %v3937, %v3931
  %v3968 = vpack.c.b16 %v3944, %v3938
  %v3969 = vpack.c.b16 %v3945, %v3939
  %v3970 = vpack.c.b16 %v3946, %v3940
  %v3971 = vpack.c.b16 %v3947, %v3941
  %v3972 = vpack.c.b16 %v3948, %v3942
  %v3973 = vpack.c.b16 %v3949, %v3943
  %v3999 = vsel %vm260, %v3821, 0
  %4001 = vmatprep.subr.bf16.mxu0 %v3951
  %4002 = vmatpush1.bf16.msra.mxu0 %v3950
  %4003 = vmatprep.subr.bf16.mxu0 %v3957
  %4004 = vmatpush1.bf16.msra.mxu0 %v3956
  %4005 = vmatprep.subr.bf16.mxu0 %v3963
  %4006 = vmatpush1.bf16.msra.mxu0 %v3962
  %4007 = vmatprep.subr.bf16.mxu0 %v3969
  %4008 = vmatpush1.bf16.msra.mxu0 %v3968
  %4009 = vmatprep.subr.bf16.mxu0 0
  %4010 = vmatpush1.bf16.msra.mxu0 0
  %4011 = vmatprep.subr.bf16.mxu0 0
  %4012 = vmatpush1.bf16.msra.mxu0 0
  %4013 = vmatprep.subr.bf16.mxu0 0
  %4014 = vmatpush1.bf16.msra.mxu0 0
  %4015 = vmatprep.subr.bf16.mxu0 0
  %4016 = vmatpush1.bf16.msra.mxu0 0
  %4017 = vmatprep.subr.bf16.mxu0 0
  %4018 = vmatpush1.bf16.msra.mxu0 0
  %4019 = vmatprep.subr.bf16.mxu0 0
  %4020 = vmatpush1.bf16.msra.mxu0 0
  %4021 = vmatprep.subr.bf16.mxu0 0
  %4022 = vmatpush1.bf16.msra.mxu0 0
  %4023 = vmatprep.subr.bf16.mxu0 0
  %4024 = vmatpush1.bf16.msra.mxu0 0
  %4025 = vmatprep.subr.bf16.mxu0 0
  %4026 = vmatpush1.bf16.msra.mxu0 0
  %4027 = vmatprep.subr.bf16.mxu0 0
  %4028 = vmatpush1.bf16.msra.mxu0 0
  %4029 = vmatprep.subr.bf16.mxu0 0
  %4030 = vmatpush1.bf16.msra.mxu0 0
  %4031 = vmatprep.subr.bf16.mxu0 0
  %4032 = vmatpush1.bf16.msra.mxu0 0
  %4033 = vmatprep.mubr.bf16.mxu0 0
  %4034 = vmatmul.mubr.bf16.gmra.mrb[0].mxu0 %v3999
  %v4035 = vpop.f32.mrb[0].mxu0
  %v4036 = vadd.f32 %v3851, %v4035
  %v4037 = vpop.f32.mrb[0].mxu0
  %v4038 = vadd.f32 %v3855, %v4037
  %v4039 = vpop.f32.mrb[0].mxu0
  %v4040 = vpop.f32.mrb[0].mxu0
  %4041 = vdwg.mxu0
  %4042 = vmatprep.subr.bf16.mxu0 %v3953
  %4043 = vmatpush1.bf16.msra.mxu0 %v3952
  %4044 = vmatprep.subr.bf16.mxu0 %v3959
  %4045 = vmatpush1.bf16.msra.mxu0 %v3958
  %4046 = vmatprep.subr.bf16.mxu0 %v3965
  %4047 = vmatpush1.bf16.msra.mxu0 %v3964
  %4048 = vmatprep.subr.bf16.mxu0 %v3971
  %4049 = vmatpush1.bf16.msra.mxu0 %v3970
  %4050 = vmatprep.subr.bf16.mxu0 0
  %4051 = vmatpush1.bf16.msra.mxu0 0
  %4052 = vmatprep.subr.bf16.mxu0 0
  %4053 = vmatpush1.bf16.msra.mxu0 0
  %4054 = vmatprep.subr.bf16.mxu0 0
  %4055 = vmatpush1.bf16.msra.mxu0 0
  %4056 = vmatprep.subr.bf16.mxu0 0
  %4057 = vmatpush1.bf16.msra.mxu0 0
  %4058 = vmatprep.subr.bf16.mxu0 0
  %4059 = vmatpush1.bf16.msra.mxu0 0
  %4060 = vmatprep.subr.bf16.mxu0 0
  %4061 = vmatpush1.bf16.msra.mxu0 0
  %4062 = vmatprep.subr.bf16.mxu0 0
  %4063 = vmatpush1.bf16.msra.mxu0 0
  %4064 = vmatprep.subr.bf16.mxu0 0
  %4065 = vmatpush1.bf16.msra.mxu0 0
  %4066 = vmatprep.subr.bf16.mxu0 0
  %4067 = vmatpush1.bf16.msra.mxu0 0
  %4068 = vmatprep.subr.bf16.mxu0 0
  %4069 = vmatpush1.bf16.msra.mxu0 0
  %4070 = vmatprep.subr.bf16.mxu0 0
  %4071 = vmatpush1.bf16.msra.mxu0 0
  %4072 = vmatprep.subr.bf16.mxu0 0
  %4073 = vmatpush1.bf16.msra.mxu0 0
  %4074 = vmatprep.mubr.bf16.mxu0 0
  %4075 = vmatmul.mubr.bf16.gmra.mrb[0].mxu0 %v3999
  %v4076 = vpop.f32.mrb[0].mxu0
  %v4077 = vadd.f32 %v3859, %v4076
  %v4078 = vpop.f32.mrb[0].mxu0
  %v4079 = vadd.f32 %v3863, %v4078
  %v4080 = vpop.f32.mrb[0].mxu0
  %v4081 = vpop.f32.mrb[0].mxu0
  %4082 = vdwg.mxu0
  %4083 = vmatprep.subr.bf16.mxu0 %v3955
  %4084 = vmatpush1.bf16.msra.mxu0 %v3954
  %4085 = vmatprep.subr.bf16.mxu0 %v3961
  %4086 = vmatpush1.bf16.msra.mxu0 %v3960
  %4087 = vmatprep.subr.bf16.mxu0 %v3967
  %4088 = vmatpush1.bf16.msra.mxu0 %v3966
  %4089 = vmatprep.subr.bf16.mxu0 %v3973
  %4090 = vmatpush1.bf16.msra.mxu0 %v3972
  %4091 = vmatprep.subr.bf16.mxu0 0
  %4092 = vmatpush1.bf16.msra.mxu0 0
  %4093 = vmatprep.subr.bf16.mxu0 0
  %4094 = vmatpush1.bf16.msra.mxu0 0
  %4095 = vmatprep.subr.bf16.mxu0 0
  %4096 = vmatpush1.bf16.msra.mxu0 0
  %4097 = vmatprep.subr.bf16.mxu0 0
  %4098 = vmatpush1.bf16.msra.mxu0 0
  %4099 = vmatprep.subr.bf16.mxu0 0
  %4100 = vmatpush1.bf16.msra.mxu0 0
  %4101 = vmatprep.subr.bf16.mxu0 0
  %4102 = vmatpush1.bf16.msra.mxu0 0
  %4103 = vmatprep.subr.bf16.mxu0 0
  %4104 = vmatpush1.bf16.msra.mxu0 0
  %4105 = vmatprep.subr.bf16.mxu0 0
  %4106 = vmatpush1.bf16.msra.mxu0 0
  %4107 = vmatprep.subr.bf16.mxu0 0
  %4108 = vmatpush1.bf16.msra.mxu0 0
  %4109 = vmatprep.subr.bf16.mxu0 0
  %4110 = vmatpush1.bf16.msra.mxu0 0
  %4111 = vmatprep.subr.bf16.mxu0 0
  %4112 = vmatpush1.bf16.msra.mxu0 0
  %4113 = vmatprep.subr.bf16.mxu0 0
  %4114 = vmatpush1.bf16.msra.mxu0 0
  %4115 = vmatprep.mubr.bf16.mxu0 0
  %4116 = vmatmul.mubr.bf16.gmra.mrb[0].mxu0 %v3999
  %v4117 = vpop.f32.mrb[0].mxu0
  %v4118 = vadd.f32 %v3867, %v4117
  %v4119 = vpop.f32.mrb[0].mxu0
  %v4120 = vadd.f32 %v3871, %v4119
  %v4121 = vpop.f32.mrb[0].mxu0
  %v4122 = vpop.f32.mrb[0].mxu0
  %4123 = vdwg.mxu0
  %4124 = vst [vmem:[%s11 + $0xe0] sm:$0xff] %v4118
  %4125 = vst [vmem:[%s11 + $0xe8] sm:$0xff] %v4120
  %v4126 = vmul.f32 %v4077, 1.442695
  %v4127 = vpow.pop %v4126
  %v4128 = vmul.f32 %v4079, 1.442695
  %v4129 = vpow.pop %v4128
  %v4130 = vmul.f32 %v4127, 1.118034
  %v4131 = vmul.f32 %v4129, 1.118034
  %4132 = vst [vmem:[%s11 + $0xd0] sm:$0xff] %v4130
  %4133 = vst [vmem:[%s11 + $0xd8] sm:$0xff] %v4131
  %4135 = vrot.lane.b32.xlu0 %v4036, 96
  %v4136 = vpop.permute.xlu0 %4135
  %v4138 = vmax.f32 %v4036, %v4136
  %4139 = vrot.lane.b32.xlu0 %v4036, 64
  %v4140 = vpop.permute.xlu0 %4139
  %v4142 = vmax.f32 %v4138, %v4140
  %4143 = vrot.lane.b32.xlu0 %v4036, 32
  %v4144 = vpop.permute.xlu0 %4143
  %v4146 = vmax.f32 %v4142, %v4144
  %v4147 = vmax.f32 %v4146, %v4038
  %v4148 = vsub.f32 %v4036, %v4147
  %v4149 = vmul.f32 %v4148, 1.442695
  %v4150 = vpow.pop %v4149
  %4152 = vrot.lane.b32.xlu0 %v4147, 32
  %v4153 = vpop.permute.xlu0 %4152
  %v4155 = vsub.f32 %v4036, %v4153
  %v4156 = vmul.f32 %v4155, 1.442695
  %v4157 = vpow.pop %v4156
  %4158 = vrot.lane.b32.xlu0 %v4147, 64
  %v4159 = vpop.permute.xlu0 %4158
  %v4161 = vsub.f32 %v4036, %v4159
  %v4162 = vmul.f32 %v4161, 1.442695
  %v4163 = vpow.pop %v4162
  %4164 = vrot.lane.b32.xlu0 %v4147, 96
  %v4165 = vpop.permute.xlu0 %4164
  %v4167 = vsub.f32 %v4036, %v4165
  %v4168 = vmul.f32 %v4167, 1.442695
  %v4169 = vpow.pop %v4168
  %v4170 = vsub.f32 %v4038, %v4147
  %v4171 = vmul.f32 %v4170, 1.442695
  %v4172 = vpow.pop %v4171
  %4174 = vrot.lane.b32.xlu0 %v4157, 96
  %v4175 = vpop.permute.xlu0 %4174
  %v4177 = vadd.f32 %v4150, %v4175
  %4179 = vrot.lane.b32.xlu0 %v4163, 64
  %v4180 = vpop.permute.xlu0 %4179
  %v4182 = vadd.f32 %v4177, %v4180
  %4184 = vrot.lane.b32.xlu0 %v4169, 32
  %v4185 = vpop.permute.xlu0 %4184
  %v4187 = vadd.f32 %v4182, %v4185
  %v4188 = vadd.f32 %v4187, %v4172
  %v4189 = vmul.f32 %v4188, 1.25
  %v4190 = vrcp.pop %v4189
  %v4191 = vmul.f32 %v4150, %v4190
  %4193 = vrot.lane.b32.xlu0 %v4190, 32
  %v4194 = vpop.permute.xlu0 %4193
  %v4196 = vmul.f32 %v4157, %v4194
  %4197 = vrot.lane.b32.xlu0 %v4190, 64
  %v4198 = vpop.permute.xlu0 %4197
  %v4200 = vmul.f32 %v4163, %v4198
  %4201 = vrot.lane.b32.xlu0 %v4190, 96
  %v4202 = vpop.permute.xlu0 %4201
  %v4204 = vmul.f32 %v4169, %v4202
  %v4205 = vmul.f32 %v4172, %v4190
  %v4206 = vsel %vm2180, %v4191, %v4196
  %v4207 = vsel %vm260, %v4206, %v4200
  %v4208 = vsel %vm2183, %v4207, %v4204
  %v4209 = vsel %vm2180, %v4205, 0.0
  %4210 = vst [vmem:[%s11 + $0xc0] sm:$0xff] %v4208
  %4211 = vst [vmem:[%s11 + $0xc8] sm:$0xff] %v4209
  %v4212 = vld [vmem:[#allocation3 + $0x50] sm:$0xff]
  %v4213 = vld [vmem:[#allocation3 + $0x58] sm:$0xff]
  %v4214 = vld [vmem:[%s7] sm:$0xff]
  %v4215 = vld [vmem:[%s7 + $0x8] sm:$0xff]
  %v4216 = vld [vmem:[%s7 + $0x10] sm:$0xff]
  %v4217 = vld [vmem:[%s7 + $0x18] sm:$0xff]
  %v4218 = vld [vmem:[%s7 + $0x20] sm:$0xff]
  %v4219 = vld [vmem:[%s7 + $0x28] sm:$0xff]
  %v4220 = vld [vmem:[%s7 + $0x30] sm:$0xff]
  %v4221 = vld [vmem:[%s7 + $0x38] sm:$0xff]
  %v4230 = vunpack.c.l.b16 %v4214
  %v4231 = vunpack.c.h.b16 %v4214
  %v4232 = vunpack.c.l.b16 %v4215
  %v4233 = vunpack.c.h.b16 %v4215
  %v4234 = vunpack.c.l.b16 %v4216
  %v4235 = vunpack.c.h.b16 %v4216
  %v4236 = vunpack.c.l.b16 %v4217
  %v4237 = vunpack.c.h.b16 %v4217
  %v4238 = vunpack.c.l.b16 %v4218
  %v4239 = vunpack.c.h.b16 %v4218
  %v4240 = vunpack.c.l.b16 %v4219
  %v4241 = vunpack.c.h.b16 %v4219
  %v4242 = vunpack.c.l.b16 %v4220
  %v4243 = vunpack.c.h.b16 %v4220
  %v4244 = vunpack.c.l.b16 %v4221
  %v4245 = vunpack.c.h.b16 %v4221
  %v4246 = vpack.c.b16 %v4232, %v4230
  %v4247 = vpack.c.b16 %v4233, %v4231
  %v4248 = vpack.c.b16 %v4236, %v4234
  %v4249 = vpack.c.b16 %v4237, %v4235
  %v4250 = vpack.c.b16 %v4240, %v4238
  %v4251 = vpack.c.b16 %v4241, %v4239
  %v4252 = vpack.c.b16 %v4244, %v4242
  %v4253 = vpack.c.b16 %v4245, %v4243
  %4262 = vmatprep.subr.bf16.mxu0 %v4247
  %4263 = vmatpush1.bf16.msra.mxu0 %v4246
  %4264 = vmatprep.subr.bf16.mxu0 %v4249
  %4265 = vmatpush1.bf16.msra.mxu0 %v4248
  %4266 = vmatprep.subr.bf16.mxu0 %v4251
  %4267 = vmatpush1.bf16.msra.mxu0 %v4250
  %4268 = vmatprep.subr.bf16.mxu0 %v4253
  %4269 = vmatpush1.bf16.msra.mxu0 %v4252
  %4270 = vmatprep.subr.bf16.mxu0 0
  %4271 = vmatpush1.bf16.msra.mxu0 0
  %4272 = vmatprep.subr.bf16.mxu0 0
  %4273 = vmatpush1.bf16.msra.mxu0 0
  %4274 = vmatprep.subr.bf16.mxu0 0
  %4275 = vmatpush1.bf16.msra.mxu0 0
  %4276 = vmatprep.subr.bf16.mxu0 0
  %4277 = vmatpush1.bf16.msra.mxu0 0
  %4278 = vmatprep.subr.bf16.mxu0 0
  %4279 = vmatpush1.bf16.msra.mxu0 0
  %4280 = vmatprep.subr.bf16.mxu0 0
  %4281 = vmatpush1.bf16.msra.mxu0 0
  %4282 = vmatprep.subr.bf16.mxu0 0
  %4283 = vmatpush1.bf16.msra.mxu0 0
  %4284 = vmatprep.subr.bf16.mxu0 0
  %4285 = vmatpush1.bf16.msra.mxu0 0
  %4286 = vmatprep.subr.bf16.mxu0 0
  %4287 = vmatpush1.bf16.msra.mxu0 0
  %4288 = vmatprep.subr.bf16.mxu0 0
  %4289 = vmatpush1.bf16.msra.mxu0 0
  %4290 = vmatprep.subr.bf16.mxu0 0
  %4291 = vmatpush1.bf16.msra.mxu0 0
  %4292 = vmatprep.subr.bf16.mxu0 0
  %4293 = vmatpush1.bf16.msra.mxu0 0
  %4294 = vmatprep.mubr.bf16.mxu0 0
  %4295 = vmatmul.mubr.bf16.gmra.mrb[0].mxu0 %v3999
  %v4296 = vpop.f32.mrb[0].mxu0
  %v4297 = vadd.f32 0.0, %v4296
  %v4298 = vpop.f32.mrb[0].mxu0
  %v4299 = vadd.f32 0.0, %v4298
  %v4300 = vpop.f32.mrb[0].mxu0
  %v4301 = vpop.f32.mrb[0].mxu0
  %4302 = vdwg.mxu0
  %v4303 = vadd.f32 %v4212, %v4297
  %v4304 = vadd.f32 %v4213, %v4299
  %v4305 = vxor.u32 %v4303, 2147483648
  %v4306 = vmul.f32 %v4305, 1.442695
  %v4307 = vpow.pop %v4306
  %v4308 = vadd.f32 %v4307, 1.0
  %v4309 = vrcp.pop %v4308
  %v4310 = vmul.f32 1.0, %v4309
  %v4311 = vxor.u32 %v4304, 2147483648
  %v4312 = vmul.f32 %v4311, 1.442695
  %v4313 = vpow.pop %v4312
  %v4314 = vadd.f32 %v4313, 1.0
  %v4315 = vrcp.pop %v4314
  %v4316 = vmul.f32 1.0, %v4315
  %v4317 = vtanh.pop %v4304
  %v4318 = vmul.f32 %v4310, %v3818
  %v4319 = vmul.f32 %v4310, %v4317
  %4321 = vrot.lane.b32.xlu0 %v4319, 64
  %v4322 = vpop.permute.xlu0 %4321
  %v4324 = vadd.f32 %v4318, %v4322
  %v4325 = vtanh.pop %v4324
  %v4326 = vmul.f32 %v4316, %v4325
  %v4327 = vpack.c.bf16 %v4326, %v4326
  %v4328 = vld [vmem:[%s9] sm:$0xff]
  %v4329 = vld [vmem:[%s9 + $0x8] sm:$0xff]
  %v4330 = vld [vmem:[%s9 + $0x10] sm:$0xff]
  %v4331 = vld [vmem:[%s9 + $0x18] sm:$0xff]
  %v4332 = vld [vmem:[%s9 + $0x20] sm:$0xff]
  %v4333 = vld [vmem:[%s9 + $0x28] sm:$0xff]
  %v4334 = vld [vmem:[%s9 + $0x30] sm:$0xff]
  %v4335 = vld [vmem:[%s9 + $0x38] sm:$0xff]
  %v4336 = vld [vmem:[%s9 + $0x40] sm:$0xff]
  %v4337 = vld [vmem:[%s9 + $0x48] sm:$0xff]
  %v4338 = vld [vmem:[%s9 + $0x50] sm:$0xff]
  %v4339 = vld [vmem:[%s9 + $0x58] sm:$0xff]
  %v4340 = vld [vmem:[%s9 + $0x60] sm:$0xff]
  %v4341 = vld [vmem:[%s9 + $0x68] sm:$0xff]
  %v4342 = vld [vmem:[%s9 + $0x70] sm:$0xff]
  %v4343 = vld [vmem:[%s9 + $0x78] sm:$0xff]
  %v4344 = vld [vmem:[%s9 + $0x80] sm:$0xff]
  %v4345 = vld [vmem:[%s9 + $0x88] sm:$0xff]
  %v4346 = vld [vmem:[%s9 + $0x90] sm:$0xff]
  %v4347 = vld [vmem:[%s9 + $0x98] sm:$0xff]
  %v4348 = vld [vmem:[%s9 + $0xa0] sm:$0xff]
  %v4349 = vld [vmem:[%s9 + $0xa8] sm:$0xff]
  %v4350 = vld [vmem:[%s9 + $0xb0] sm:$0xff]
  %v4351 = vld [vmem:[%s9 + $0xb8] sm:$0xff]
  %v4352 = vld [vmem:[%s10] sm:$0x3f]
  %v4354 = vlaneseq
  %v4355 = vshrl.u32 %v4354, 7
  %v4356 = vsub.s32 0, %v4355
  %v4357 = vrot.slane %v4352, %v4356
  %v4358 = vlaneseq
  %v4359 = vshrl.u32 %v4358, 7
  %v4360 = vsub.s32 1, %v4359
  %v4361 = vrot.slane %v4352, %v4360
  %v4362 = vlaneseq
  %v4363 = vshrl.u32 %v4362, 7
  %v4364 = vsub.s32 2, %v4363
  %v4365 = vrot.slane %v4352, %v4364
  %v4366 = vlaneseq
  %v4367 = vshrl.u32 %v4366, 7
  %v4368 = vsub.s32 3, %v4367
  %v4369 = vrot.slane %v4352, %v4368
  %v4370 = vlaneseq
  %v4371 = vshrl.u32 %v4370, 7
  %v4372 = vsub.s32 4, %v4371
  %v4373 = vrot.slane %v4352, %v4372
  %v4374 = vlaneseq
  %v4375 = vshrl.u32 %v4374, 7
  %v4376 = vsub.s32 5, %v4375
  %v4377 = vrot.slane %v4352, %v4376
  %v4408 = vunpack.c.l.b16 %v4328
  %v4409 = vunpack.c.h.b16 %v4328
  %v4410 = vunpack.c.l.b16 %v4329
  %v4411 = vunpack.c.h.b16 %v4329
  %v4412 = vunpack.c.l.b16 %v4330
  %v4413 = vunpack.c.h.b16 %v4330
  %v4414 = vunpack.c.l.b16 %v4331
  %v4415 = vunpack.c.h.b16 %v4331
  %v4416 = vunpack.c.l.b16 %v4332
  %v4417 = vunpack.c.h.b16 %v4332
  %v4418 = vunpack.c.l.b16 %v4333
  %v4419 = vunpack.c.h.b16 %v4333
  %v4420 = vunpack.c.l.b16 %v4334
  %v4421 = vunpack.c.h.b16 %v4334
  %v4422 = vunpack.c.l.b16 %v4335
  %v4423 = vunpack.c.h.b16 %v4335
  %v4424 = vunpack.c.l.b16 %v4336
  %v4425 = vunpack.c.h.b16 %v4336
  %v4426 = vunpack.c.l.b16 %v4337
  %v4427 = vunpack.c.h.b16 %v4337
  %v4428 = vunpack.c.l.b16 %v4338
  %v4429 = vunpack.c.h.b16 %v4338
  %v4430 = vunpack.c.l.b16 %v4339
  %v4431 = vunpack.c.h.b16 %v4339
  %v4432 = vunpack.c.l.b16 %v4340
  %v4433 = vunpack.c.h.b16 %v4340
  %v4434 = vunpack.c.l.b16 %v4341
  %v4435 = vunpack.c.h.b16 %v4341
  %v4436 = vunpack.c.l.b16 %v4342
  %v4437 = vunpack.c.h.b16 %v4342
  %v4438 = vunpack.c.l.b16 %v4343
  %v4439 = vunpack.c.h.b16 %v4343
  %v4440 = vunpack.c.l.b16 %v4344
  %v4441 = vunpack.c.h.b16 %v4344
  %v4442 = vunpack.c.l.b16 %v4345
  %v4443 = vunpack.c.h.b16 %v4345
  %v4444 = vunpack.c.l.b16 %v4346
  %v4445 = vunpack.c.h.b16 %v4346
  %v4446 = vunpack.c.l.b16 %v4347
  %v4447 = vunpack.c.h.b16 %v4347
  %v4448 = vunpack.c.l.b16 %v4348
  %v4449 = vunpack.c.h.b16 %v4348
  %v4450 = vunpack.c.l.b16 %v4349
  %v4451 = vunpack.c.h.b16 %v4349
  %v4452 = vunpack.c.l.b16 %v4350
  %v4453 = vunpack.c.h.b16 %v4350
  %v4454 = vunpack.c.l.b16 %v4351
  %v4455 = vunpack.c.h.b16 %v4351
  %v4456 = vpack.c.b16 %v4414, %v4408
  %v4457 = vpack.c.b16 %v4415, %v4409
  %v4458 = vpack.c.b16 %v4416, %v4410
  %v4459 = vpack.c.b16 %v4417, %v4411
  %v4460 = vpack.c.b16 %v4418, %v4412
  %v4461 = vpack.c.b16 %v4419, %v4413
  %v4462 = vpack.c.b16 %v4426, %v4420
  %v4463 = vpack.c.b16 %v4427, %v4421
  %v4464 = vpack.c.b16 %v4428, %v4422
  %v4465 = vpack.c.b16 %v4429, %v4423
  %v4466 = vpack.c.b16 %v4430, %v4424
  %v4467 = vpack.c.b16 %v4431, %v4425
  %v4468 = vpack.c.b16 %v4438, %v4432
  %v4469 = vpack.c.b16 %v4439, %v4433
  %v4470 = vpack.c.b16 %v4440, %v4434
  %v4471 = vpack.c.b16 %v4441, %v4435
  %v4472 = vpack.c.b16 %v4442, %v4436
  %v4473 = vpack.c.b16 %v4443, %v4437
  %v4474 = vpack.c.b16 %v4450, %v4444
  %v4475 = vpack.c.b16 %v4451, %v4445
  %v4476 = vpack.c.b16 %v4452, %v4446
  %v4477 = vpack.c.b16 %v4453, %v4447
  %v4478 = vpack.c.b16 %v4454, %v4448
  %v4479 = vpack.c.b16 %v4455, %v4449
  %v4505 = vsel %vm260, %v4327, 0
  %4507 = vmatprep.subr.bf16.mxu0 %v4457
  %4508 = vmatpush1.bf16.msra.mxu0 %v4456
  %4509 = vmatprep.subr.bf16.mxu0 %v4463
  %4510 = vmatpush1.bf16.msra.mxu0 %v4462
  %4511 = vmatprep.subr.bf16.mxu0 %v4469
  %4512 = vmatpush1.bf16.msra.mxu0 %v4468
  %4513 = vmatprep.subr.bf16.mxu0 %v4475
  %4514 = vmatpush1.bf16.msra.mxu0 %v4474
  %4515 = vmatprep.subr.bf16.mxu0 0
  %4516 = vmatpush1.bf16.msra.mxu0 0
  %4517 = vmatprep.subr.bf16.mxu0 0
  %4518 = vmatpush1.bf16.msra.mxu0 0
  %4519 = vmatprep.subr.bf16.mxu0 0
  %4520 = vmatpush1.bf16.msra.mxu0 0
  %4521 = vmatprep.subr.bf16.mxu0 0
  %4522 = vmatpush1.bf16.msra.mxu0 0
  %4523 = vmatprep.subr.bf16.mxu0 0
  %4524 = vmatpush1.bf16.msra.mxu0 0
  %4525 = vmatprep.subr.bf16.mxu0 0
  %4526 = vmatpush1.bf16.msra.mxu0 0
  %4527 = vmatprep.subr.bf16.mxu0 0
  %4528 = vmatpush1.bf16.msra.mxu0 0
  %4529 = vmatprep.subr.bf16.mxu0 0
  %4530 = vmatpush1.bf16.msra.mxu0 0
  %4531 = vmatprep.subr.bf16.mxu0 0
  %4532 = vmatpush1.bf16.msra.mxu0 0
  %4533 = vmatprep.subr.bf16.mxu0 0
  %4534 = vmatpush1.bf16.msra.mxu0 0
  %4535 = vmatprep.subr.bf16.mxu0 0
  %4536 = vmatpush1.bf16.msra.mxu0 0
  %4537 = vmatprep.subr.bf16.mxu0 0
  %4538 = vmatpush1.bf16.msra.mxu0 0
  %4539 = vmatprep.mubr.bf16.mxu0 0
  %4540 = vmatmul.mubr.bf16.gmra.mrb[0].mxu0 %v4505
  %v4541 = vpop.f32.mrb[0].mxu0
  %v4542 = vadd.f32 %v4357, %v4541
  %v4543 = vpop.f32.mrb[0].mxu0
  %v4544 = vadd.f32 %v4361, %v4543
  %v4545 = vpop.f32.mrb[0].mxu0
  %v4546 = vpop.f32.mrb[0].mxu0
  %4547 = vdwg.mxu0
  %4548 = vmatprep.subr.bf16.mxu0 %v4459
  %4549 = vmatpush1.bf16.msra.mxu0 %v4458
  %4550 = vmatprep.subr.bf16.mxu0 %v4465
  %4551 = vmatpush1.bf16.msra.mxu0 %v4464
  %4552 = vmatprep.subr.bf16.mxu0 %v4471
  %4553 = vmatpush1.bf16.msra.mxu0 %v4470
  %4554 = vmatprep.subr.bf16.mxu0 %v4477
  %4555 = vmatpush1.bf16.msra.mxu0 %v4476
  %4556 = vmatprep.subr.bf16.mxu0 0
  %4557 = vmatpush1.bf16.msra.mxu0 0
  %4558 = vmatprep.subr.bf16.mxu0 0
  %4559 = vmatpush1.bf16.msra.mxu0 0
  %4560 = vmatprep.subr.bf16.mxu0 0
  %4561 = vmatpush1.bf16.msra.mxu0 0
  %4562 = vmatprep.subr.bf16.mxu0 0
  %4563 = vmatpush1.bf16.msra.mxu0 0
  %4564 = vmatprep.subr.bf16.mxu0 0
  %4565 = vmatpush1.bf16.msra.mxu0 0
  %4566 = vmatprep.subr.bf16.mxu0 0
  %4567 = vmatpush1.bf16.msra.mxu0 0
  %4568 = vmatprep.subr.bf16.mxu0 0
  %4569 = vmatpush1.bf16.msra.mxu0 0
  %4570 = vmatprep.subr.bf16.mxu0 0
  %4571 = vmatpush1.bf16.msra.mxu0 0
  %4572 = vmatprep.subr.bf16.mxu0 0
  %4573 = vmatpush1.bf16.msra.mxu0 0
  %4574 = vmatprep.subr.bf16.mxu0 0
  %4575 = vmatpush1.bf16.msra.mxu0 0
  %4576 = vmatprep.subr.bf16.mxu0 0
  %4577 = vmatpush1.bf16.msra.mxu0 0
  %4578 = vmatprep.subr.bf16.mxu0 0
  %4579 = vmatpush1.bf16.msra.mxu0 0
  %4580 = vmatprep.mubr.bf16.mxu0 0
  %4581 = vmatmul.mubr.bf16.gmra.mrb[0].mxu0 %v4505
  %v4582 = vpop.f32.mrb[0].mxu0
  %v4583 = vadd.f32 %v4365, %v4582
  %v4584 = vpop.f32.mrb[0].mxu0
  %v4585 = vadd.f32 %v4369, %v4584
  %v4586 = vpop.f32.mrb[0].mxu0
  %v4587 = vpop.f32.mrb[0].mxu0
  %4588 = vdwg.mxu0
  %4589 = vmatprep.subr.bf16.mxu0 %v4461
  %4590 = vmatpush1.bf16.msra.mxu0 %v4460
  %4591 = vmatprep.subr.bf16.mxu0 %v4467
  %4592 = vmatpush1.bf16.msra.mxu0 %v4466
  %4593 = vmatprep.subr.bf16.mxu0 %v4473
  %4594 = vmatpush1.bf16.msra.mxu0 %v4472
  %4595 = vmatprep.subr.bf16.mxu0 %v4479
  %4596 = vmatpush1.bf16.msra.mxu0 %v4478
  %4597 = vmatprep.subr.bf16.mxu0 0
  %4598 = vmatpush1.bf16.msra.mxu0 0
  %4599 = vmatprep.subr.bf16.mxu0 0
  %4600 = vmatpush1.bf16.msra.mxu0 0
  %4601 = vmatprep.subr.bf16.mxu0 0
  %4602 = vmatpush1.bf16.msra.mxu0 0
  %4603 = vmatprep.subr.bf16.mxu0 0
  %4604 = vmatpush1.bf16.msra.mxu0 0
  %4605 = vmatprep.subr.bf16.mxu0 0
  %4606 = vmatpush1.bf16.msra.mxu0 0
  %4607 = vmatprep.subr.bf16.mxu0 0
  %4608 = vmatpush1.bf16.msra.mxu0 0
  %4609 = vmatprep.subr.bf16.mxu0 0
  %4610 = vmatpush1.bf16.msra.mxu0 0
  %4611 = vmatprep.subr.bf16.mxu0 0
  %4612 = vmatpush1.bf16.msra.mxu0 0
  %4613 = vmatprep.subr.bf16.mxu0 0
  %4614 = vmatpush1.bf16.msra.mxu0 0
  %4615 = vmatprep.subr.bf16.mxu0 0
  %4616 = vmatpush1.bf16.msra.mxu0 0
  %4617 = vmatprep.subr.bf16.mxu0 0
  %4618 = vmatpush1.bf16.msra.mxu0 0
  %4619 = vmatprep.subr.bf16.mxu0 0
  %4620 = vmatpush1.bf16.msra.mxu0 0
  %4621 = vmatprep.mubr.bf16.mxu0 0
  %4622 = vmatmul.mubr.bf16.gmra.mrb[0].mxu0 %v4505
  %v4623 = vpop.f32.mrb[0].mxu0
  %v4624 = vadd.f32 %v4373, %v4623
  %v4625 = vpop.f32.mrb[0].mxu0
  %v4626 = vadd.f32 %v4377, %v4625
  %v4627 = vpop.f32.mrb[0].mxu0
  %v4628 = vpop.f32.mrb[0].mxu0
  %4629 = vdwg.mxu0
  %4630 = vst [vmem:[%s11 + $0x110] sm:$0xff] %v4624
  %4631 = vst [vmem:[%s11 + $0x118] sm:$0xff] %v4626
  %v4632 = vmul.f32 %v4583, 1.442695
  %v4633 = vpow.pop %v4632
  %v4634 = vmul.f32 %v4585, 1.442695
  %v4635 = vpow.pop %v4634
  %v4636 = vmul.f32 %v4633, 1.118034
  %v4637 = vmul.f32 %v4635, 1.118034
  %4638 = vst [vmem:[%s11 + $0x100] sm:$0xff] %v4636
  %4639 = vst [vmem:[%s11 + $0x108] sm:$0xff] %v4637
  %4641 = vrot.lane.b32.xlu0 %v4542, 96
  %v4642 = vpop.permute.xlu0 %4641
  %v4644 = vmax.f32 %v4542, %v4642
  %4645 = vrot.lane.b32.xlu0 %v4542, 64
  %v4646 = vpop.permute.xlu0 %4645
  %v4648 = vmax.f32 %v4644, %v4646
  %4649 = vrot.lane.b32.xlu0 %v4542, 32
  %v4650 = vpop.permute.xlu0 %4649
  %v4652 = vmax.f32 %v4648, %v4650
  %v4653 = vmax.f32 %v4652, %v4544
  %v4654 = vsub.f32 %v4542, %v4653
  %v4655 = vmul.f32 %v4654, 1.442695
  %v4656 = vpow.pop %v4655
  %4658 = vrot.lane.b32.xlu0 %v4653, 32
  %v4659 = vpop.permute.xlu0 %4658
  %v4661 = vsub.f32 %v4542, %v4659
  %v4662 = vmul.f32 %v4661, 1.442695
  %v4663 = vpow.pop %v4662
  %4664 = vrot.lane.b32.xlu0 %v4653, 64
  %v4665 = vpop.permute.xlu0 %4664
  %v4667 = vsub.f32 %v4542, %v4665
  %v4668 = vmul.f32 %v4667, 1.442695
  %v4669 = vpow.pop %v4668
  %4670 = vrot.lane.b32.xlu0 %v4653, 96
  %v4671 = vpop.permute.xlu0 %4670
  %v4673 = vsub.f32 %v4542, %v4671
  %v4674 = vmul.f32 %v4673, 1.442695
  %v4675 = vpow.pop %v4674
  %v4676 = vsub.f32 %v4544, %v4653
  %v4677 = vmul.f32 %v4676, 1.442695
  %v4678 = vpow.pop %v4677
  %4680 = vrot.lane.b32.xlu0 %v4663, 96
  %v4681 = vpop.permute.xlu0 %4680
  %v4683 = vadd.f32 %v4656, %v4681
  %4685 = vrot.lane.b32.xlu0 %v4669, 64
  %v4686 = vpop.permute.xlu0 %4685
  %v4688 = vadd.f32 %v4683, %v4686
  %4690 = vrot.lane.b32.xlu0 %v4675, 32
  %v4691 = vpop.permute.xlu0 %4690
  %v4693 = vadd.f32 %v4688, %v4691
  %v4694 = vadd.f32 %v4693, %v4678
  %v4695 = vmul.f32 %v4694, 1.25
  %v4696 = vrcp.pop %v4695
  %v4697 = vmul.f32 %v4656, %v4696
  %4699 = vrot.lane.b32.xlu0 %v4696, 32
  %v4700 = vpop.permute.xlu0 %4699
  %v4702 = vmul.f32 %v4663, %v4700
  %4703 = vrot.lane.b32.xlu0 %v4696, 64
  %v4704 = vpop.permute.xlu0 %4703
  %v4706 = vmul.f32 %v4669, %v4704
  %4707 = vrot.lane.b32.xlu0 %v4696, 96
  %v4708 = vpop.permute.xlu0 %4707
  %v4710 = vmul.f32 %v4675, %v4708
  %v4711 = vmul.f32 %v4678, %v4696
  %v4712 = vsel %vm2180, %v4697, %v4702
  %v4713 = vsel %vm260, %v4712, %v4706
  %v4714 = vsel %vm2183, %v4713, %v4710
  %v4715 = vsel %vm2180, %v4711, 0.0
  %4716 = vst [vmem:[%s11 + $0xf0] sm:$0xff] %v4714
  %4717 = vst [vmem:[%s11 + $0xf8] sm:$0xff] %v4715
  // Predicated region
  $region46: #{lstm_mdn_forward.1} parent=0 // pred_check
    _
  $region47: #{lstm_mdn_forward.1} parent=0 // pred_check_branch
    %4719 = sbr.rel (0) target = $region49
  $region48: #{lstm_mdn_forward.1} parent=0 // pred_region
    _
  $region49: #{lstm_mdn_forward.1} parent=0 // pred_fallthru
    _
  // Predicated region
  $region50: #{lstm_mdn_forward.1} parent=0 // pred_check
    _
  $region51: #{lstm_mdn_forward.1} parent=0 // pred_check_branch
    %4721 = sbr.rel (0) target = $region53
  $region52: #{lstm_mdn_forward.1} parent=0 // pred_region
    _
  $region53: #{lstm_mdn_forward.1} parent=0 // pred_fallthru
    _

</llo_original>
